<compile_context>
chip_gen: v6e
topology: v6e:2x2x1
jax: 0.10.0
libtpu: 0.0.40
codegen_flags: <defaults>
</compile_context>

<pallas_src>
import math

import jax
import jax.numpy as jnp
from jax import lax
from jax.experimental import pallas as pl
from jax.experimental.pallas import tpu as pltpu

# ----------------------------- config (small) -------------------------------
B = 2                 # batch
S = 8                 # seq_length
T = B * S             # folded rows
H = 32                # hidden_size
F = 64                # intermediate_size (MLP ffn dim)
MAMBA_EXPAND = 2
I = MAMBA_EXPAND * H              # mamba / fused-head intermediate dim = 64
NUM_HEADS = 4
NUM_KV_HEADS = 2
GROUP = NUM_HEADS // NUM_KV_HEADS  # q heads per kv head = 2
HD = I // NUM_HEADS               # head dim = 16
KV = NUM_KV_HEADS * HD            # = 32
QKV_W = I + 2 * KV                # fused qkv width = 128
K = 4                 # conv_kernel_size
R = 8                 # time_step_rank
N = 8                 # ssm_state_size
WINDOW = 4            # attention_window_size (is_global=False)
ROPE_BASE = 10000.0
EPS = 1e-6

# row offsets inside the packed small-vector slab (rows of width I)
_CONV_W = 0            # K rows
_CONV_B = K
_B_DT = K + 1
_A = K + 2             # N rows
_D = K + 2 + N
_NORM_M = K + 3 + N
_NORM_A = K + 4 + N
VEC_ROWS = K + 5 + N   # = 17


# ------------------------------- kernel -------------------------------------
def _rms(x, w):
    var = jnp.mean(x * x, axis=-1, keepdims=True)
    return x * lax.rsqrt(var + EPS) * w


def hymba_decoder_kernel(hid_ref, ln_ref, w_big_ref, w_x2_ref, vec_ref,
                         trig_ref, mask_ref, w_ow_ref, w_gu_ref,
                         out_ref, ya_ref, hs_ref):
    x = hid_ref[...].astype(jnp.float32)               # (T, H) batch-folded rows
    xn = _rms(x, ln_ref[pl.ds(0, 1), :])                # input_layernorm

    # ---- ONE wide matmul for every consumer of xn ----
    # w_big = [ W_in | W_qkv | W_qkv @ P_rope ]  -> (T, 2I + 2*QKV_W) = (T, 384)
    big = jnp.dot(xn, w_big_ref[...], preferred_element_type=jnp.float32)
    xm = big[:, :I]                                     # mamba input
    z = big[:, I:2 * I]                                 # mamba output gate
    qkv = big[:, 2 * I:2 * I + QKV_W]                   # fused q|k|v
    rot = big[:, 2 * I + QKV_W:]                        # rotate_half(q|k) (v lanes unused)

    # ---------------- mamba / SSM path ----------------
    # causal depthwise conv1d (K taps, left zero pad); batch-aware roll + mask
    pos = lax.broadcasted_iota(jnp.int32, (T, I), 0) % S
    acc = xm * vec_ref[pl.ds(_CONV_W + K - 1, 1), :]    # tap with shift 0
    for k in range(K - 1):                              # taps with shift K-1-k
        shift = K - 1 - k
        rolled = pltpu.roll(xm, shift, 0)               # sublane rotate (XLU)
        acc = acc + jnp.where(pos >= shift, rolled, 0.0) * \
            vec_ref[pl.ds(_CONV_W + k, 1), :]
    xconv = acc + vec_ref[pl.ds(_CONV_B, 1), :]
    xconv = xconv * jax.nn.sigmoid(xconv)               # SiLU

    # fused SSM parameter projection: w_x2 = [W_x[:, :R] @ W_dt | W_x[:, R:]]
    xdb = jnp.dot(xconv, w_x2_ref[...], preferred_element_type=jnp.float32)  # (T, I+2N)
    dt = xdb[:, :I] + vec_ref[pl.ds(_B_DT, 1), :]
    dt = jnp.maximum(dt, 0.0) + jnp.log1p(jnp.exp(-jnp.abs(dt)))  # stable softplus
    Bmat = xdb[:, I:I + N]                              # (T, N)
    Cmat = xdb[:, I + N:I + 2 * N]                      # (T, N)
    A_t = vec_ref[pl.ds(_A, N), :]                      # (N, I), negative values
    D = vec_ref[pl.ds(_D, 1), :]                        # (1, I)

    # everything NOT on the recurrence computed off the serial chain
    dtx = dt * xconv                                    # (T, I)
    dA_all = jnp.exp(dt[:, None, :] * A_t[None, :, :])  # (T, N, I)  one EUP pass
    u_all = Bmat[:, :, None] * dtx[:, None, :]          # (T, N, I)

    # selective scan: per batch, 2 VPU ops per step; h_t stashed in scratch
    for b in range(B):
        h = jnp.zeros((N, I), jnp.float32)
        for t in range(S):
            idx = b * S + t
            h = dA_all[idx] * h + u_all[idx]            # (N, I)
            hs_ref[idx] = h

    hs = hs_ref[...]                                    # (T, N, I)
    y_m = jnp.sum(Cmat[:, :, None] * hs, axis=1) + D * xconv   # C contraction + D skip
    y_m = y_m * (z * jax.nn.sigmoid(z))                 # SiLU output gate

    # ---------------- attention path (sliding-window causal GQA + RoPE) -----
    # rope(xW) = (xW)*cos + (x(WP))*sin; WP folded into w_big host-side.
    qkv_r = qkv * trig_ref[pl.ds(0, T), :] + rot * trig_ref[pl.ds(T, T), :]
    q = qkv_r[:, :I]                                    # (T, I)   RoPE applied
    kk = qkv_r[:, I:I + KV]                             # (T, KV)  RoPE applied
    vv = qkv_r[:, I + KV:]                              # (T, KV)  pass-through
    kkT = kk.T                                          # (KV, T), transposed once
    scale = 1.0 / math.sqrt(HD)
    mask_add = mask_ref[...]                            # (T, T) additive, block-diag/batch

    for hq in range(NUM_HEADS):
        g = hq // GROUP                                 # consecutive q-head grouping
        q_h = q[:, hq * HD:(hq + 1) * HD]               # (T, HD)
        k_gT = kkT[g * HD:(g + 1) * HD, :]              # (HD, T)
        v_g = vv[:, g * HD:(g + 1) * HD]                # (T, HD)
        s = jnp.dot(q_h, k_gT, preferred_element_type=jnp.float32) * scale + mask_add
        s = s - jnp.max(s, axis=-1, keepdims=True)
        p = jnp.exp(s)
        p = p / jnp.sum(p, axis=-1, keepdims=True)      # exact reciprocal (parity)
        o = jnp.dot(p, v_g, preferred_element_type=jnp.float32)  # (T, HD)
        ya_ref[:, hq * HD:(hq + 1) * HD] = o            # lane-slice store, no concat
    y_a = ya_ref[...]                                   # (T, I)

    # ---------------- fuse paths + out_proj + residual ----------------------
    fused = 0.5 * (_rms(y_m, vec_ref[pl.ds(_NORM_M, 1), :]) +
                   _rms(y_a, vec_ref[pl.ds(_NORM_A, 1), :]))
    w_ow = w_ow_ref[...]                                # [ out_proj | down_proj ]
    h1 = x + jnp.dot(fused, w_ow[:, :H], preferred_element_type=jnp.float32)

    # ---------------- pre-MLP RMSNorm + gated MLP + residual ----------------
    h1n = _rms(h1, ln_ref[pl.ds(1, 1), :])              # pre_mlp_layernorm
    gu = jnp.dot(h1n, w_gu_ref[...], preferred_element_type=jnp.float32)  # (T, 2F)
    gate = gu[:, :F]
    up = gu[:, F:]
    mlp = jnp.dot((gate * jax.nn.sigmoid(gate)) * up, w_ow[:, H:],
                  preferred_element_type=jnp.float32)   # (T, H)
    out_ref[...] = (h1 + mlp).astype(out_ref.dtype)


# ------------------------------- wrapper -------------------------------------
def simplified_hymba_decoder(hidden, params):
    hid2d = hidden.reshape(T, H)                        # free reshape (contiguous)
    in_specs = [pl.BlockSpec((T, H), lambda i: (0, 0))]
    in_specs += [pl.BlockSpec(p.shape, (lambda i, nd=p.ndim: (0,) * nd))
                 for p in params]
    out = pl.pallas_call(
        hymba_decoder_kernel,
        out_shape=jax.ShapeDtypeStruct((T, H), hidden.dtype),
        grid_spec=pltpu.PrefetchScalarGridSpec(
            num_scalar_prefetch=0,
            grid=(1,),                                  # batch folded: one step
            in_specs=in_specs,
            out_specs=pl.BlockSpec((T, H), lambda i: (0, 0)),
            scratch_shapes=[pltpu.VMEM((T, I), jnp.float32),      # attention out
                            pltpu.VMEM((T, N, I), jnp.float32)],  # scan states
        ),
    )(hid2d, *params)
    return out.reshape(B, S, H)


# --------------------------- deterministic params ----------------------------
def make_params():
    key = jax.random.PRNGKey(0)
    ks = jax.random.split(key, 16)

    def init(k, shape, fan_in):
        return jax.random.normal(k, shape, jnp.float32) * (1.0 / math.sqrt(fan_in))

    # --- norms (packed) ---
    ln_w = jnp.ones((2, H), jnp.float32)                              # (2, H)

    # --- mamba path ---
    w_in = init(ks[0], (H, 2 * I), H)
    conv_w = init(ks[1], (K, I), K)                 # depthwise Conv1d (I,1,K) -> (K,I)
    conv_b = jnp.zeros((1, I), jnp.float32)
    w_x = init(ks[2], (I, R + 2 * N), I)
    w_dt = init(ks[3], (R, I), R)
    b_dt = jnp.full((1, I), -2.0, jnp.float32)      # small positive dt after softplus
    a_t = -jnp.broadcast_to(jnp.arange(1, N + 1, dtype=jnp.float32)[:, None], (N, I))
    d_skip = jnp.ones((1, I), jnp.float32)
    norm_m = jnp.ones((1, I), jnp.float32)
    norm_a = jnp.ones((1, I), jnp.float32)
    vec = jnp.concatenate([conv_w, conv_b, b_dt, a_t, d_skip, norm_m, norm_a], axis=0)
    assert vec.shape == (VEC_ROWS, I)

    # host-folded low-rank dt projection: [ W_x[:, :R] @ W_dt | W_x[:, R:] ]
    w_x2 = jnp.concatenate([w_x[:, :R] @ w_dt, w_x[:, R:]], axis=1)   # (I, I+2N)

    # --- attention path (fused qkv) ---
    wq = init(ks[4], (H, I), H)
    wk = init(ks[5], (H, KV), H)
    wv = init(ks[6], (H, KV), H)
    w_qkv = jnp.concatenate([wq, wk, wv], axis=1)                     # (H, 128)

    # RoPE tables expanded to the fused qkv lane layout (v lanes: cos=1, sin=0),
    # tiled over the folded batch rows.
    inv_freq = 1.0 / (ROPE_BASE ** (jnp.arange(0, HD, 2, dtype=jnp.float32) / HD))
    ang = jnp.arange(S, dtype=jnp.float32)[:, None] * inv_freq[None, :]
    cos = jnp.concatenate([jnp.cos(ang), jnp.cos(ang)], axis=-1)      # (S, HD)
    sin = jnp.concatenate([jnp.sin(ang), jnp.sin(ang)], axis=-1)
    n_rot = (I + KV) // HD                                            # 6 rotated chunks
    n_pass = (QKV_W - I - KV) // HD                                   # 2 pass-through
    cos_all = jnp.concatenate(
        [jnp.tile(cos, (1, n_rot)), jnp.ones((S, n_pass * HD), jnp.float32)], axis=1)
    sin_all = jnp.concatenate(
        [jnp.tile(sin, (1, n_rot)), jnp.zeros((S, n_pass * HD), jnp.float32)], axis=1)
    trig = jnp.concatenate([jnp.tile(cos_all, (B, 1)),
                            jnp.tile(sin_all, (B, 1))], axis=0)       # (2T, 128)

    # signed block-diagonal rotate_half permutation, folded into the weight
    half = HD // 2
    pblk = jnp.zeros((HD, HD), jnp.float32)
    pblk = pblk.at[jnp.arange(half) + half, jnp.arange(half)].set(-1.0)
    pblk = pblk.at[jnp.arange(half), jnp.arange(half) + half].set(1.0)
    blk_sel = jnp.concatenate([jnp.ones((n_rot,), jnp.float32),
                               jnp.zeros((n_pass,), jnp.float32)])
    perm = jnp.kron(jnp.diag(blk_sel), pblk)                          # (128, 128)
    w_qkv_rot = w_qkv @ perm                                          # (H, 128)

    # ONE wide projection weight for all xn consumers
    w_big = jnp.concatenate([w_in, w_qkv, w_qkv_rot], axis=1)         # (H, 384)

    # additive sliding-window causal mask, block-diagonal over the folded batch
    qpos = jnp.arange(T) % S
    bidx = jnp.arange(T) // S
    same_b = bidx[:, None] == bidx[None, :]
    dp = qpos[:, None] - qpos[None, :]
    allowed = same_b & (dp >= 0) & (dp < WINDOW)
    mask_add = jnp.where(allowed, 0.0, -1e9).astype(jnp.float32)      # (T, T)

    w_out = init(ks[7], (I, H), I)

    # --- MLP (fused gate|up, packed out|down) ---
    wg = init(ks[8], (H, F), H)
    wu = init(ks[9], (H, F), H)
    wd = init(ks[10], (F, H), F)
    w_gu = jnp.concatenate([wg, wu], axis=1)                          # (H, 2F)
    w_ow = jnp.concatenate([w_out, wd], axis=1)                       # (I, 2H)

    return (ln_w, w_big, w_x2, vec, trig, mask_add, w_ow, w_gu)


if __name__ == "__main__":
    params = make_params()
    hidden_states = jax.random.normal(jax.random.PRNGKey(0), (B, S, H), jnp.float32)

    fwd = jax.jit(lambda h: simplified_hymba_decoder(h, params))
    out = jax.block_until_ready(fwd(hidden_states))

    assert out.shape == (B, S, H), out.shape
    assert bool(jnp.all(jnp.isfinite(out))), "non-finite output"
    print("KERNEL_OK")
</pallas_src>

<mosaic_0001>
module attributes {stable_mosaic.version = 11 : i64} {
  func.func @hymba_decoder_kernel(%arg0: i32, %arg1: memref<16x32xf32, #tpu.memory_space<vmem>>, %arg2: memref<2x32xf32, #tpu.memory_space<vmem>>, %arg3: memref<32x384xf32, #tpu.memory_space<vmem>>, %arg4: memref<64x80xf32, #tpu.memory_space<vmem>>, %arg5: memref<17x64xf32, #tpu.memory_space<vmem>>, %arg6: memref<32x128xf32, #tpu.memory_space<vmem>>, %arg7: memref<16x16xf32, #tpu.memory_space<vmem>>, %arg8: memref<64x64xf32, #tpu.memory_space<vmem>>, %arg9: memref<32x128xf32, #tpu.memory_space<vmem>>, %arg10: memref<16x32xf32, #tpu.memory_space<vmem>>, %arg11: memref<16x64xf32, #tpu.memory_space<vmem>>, %arg12: memref<16x8x64xf32, #tpu.memory_space<vmem>>) attributes {dimension_semantics = [#tpu.dimension_semantics<arbitrary>], iteration_bounds = array<i64: 1>, scalar_prefetch = 0 : i64, scratch_operands = 2 : i64, tpu.core_type = #tpu.core_type<tc>, window_params = [{pipeline_mode = #tpu.pipeline_mode<synchronous>, transform_indices = @transform_0, window_bounds = array<i64: 16, 32>}, {pipeline_mode = #tpu.pipeline_mode<synchronous>, transform_indices = @transform_1, window_bounds = array<i64: 2, 32>}, {pipeline_mode = #tpu.pipeline_mode<synchronous>, transform_indices = @transform_2, window_bounds = array<i64: 32, 384>}, {pipeline_mode = #tpu.pipeline_mode<synchronous>, transform_indices = @transform_3, window_bounds = array<i64: 64, 80>}, {pipeline_mode = #tpu.pipeline_mode<synchronous>, transform_indices = @transform_4, window_bounds = array<i64: 17, 64>}, {pipeline_mode = #tpu.pipeline_mode<synchronous>, transform_indices = @transform_5, window_bounds = array<i64: 32, 128>}, {pipeline_mode = #tpu.pipeline_mode<synchronous>, transform_indices = @transform_6, window_bounds = array<i64: 16, 16>}, {pipeline_mode = #tpu.pipeline_mode<synchronous>, transform_indices = @transform_7, window_bounds = array<i64: 64, 64>}, {pipeline_mode = #tpu.pipeline_mode<synchronous>, transform_indices = @transform_8, window_bounds = array<i64: 32, 128>}, {pipeline_mode = #tpu.pipeline_mode<synchronous>, transform_indices = @transform_9, window_bounds = array<i64: 16, 32>}]} {
    %c0 = arith.constant 0 : index
    %c0_0 = arith.constant 0 : index
    %0 = vector.load %arg1[%c0, %c0_0] : memref<16x32xf32, #tpu.memory_space<vmem>>, vector<16x32xf32>
    %c0_1 = arith.constant 0 : index
    %c0_2 = arith.constant 0 : index
    %1 = vector.load %arg2[%c0_1, %c0_2] : memref<2x32xf32, #tpu.memory_space<vmem>>, vector<1x32xf32>
    %2 = arith.mulf %0, %0 : vector<16x32xf32>
    %cst = arith.constant dense<0.000000e+00> : vector<16xf32>
    %3 = vector.multi_reduction <add>, %2, %cst [1] : vector<16x32xf32> to vector<16xf32>
    %4 = vector.shape_cast %3 : vector<16xf32> to vector<16x1xf32>
    %cst_3 = arith.constant 3.200000e+01 : f32
    %5 = vector.broadcast %cst_3 : f32 to vector<16x1xf32>
    %6 = arith.divf %4, %5 : vector<16x1xf32>
    %cst_4 = arith.constant 9.99999997E-7 : f32
    %7 = vector.broadcast %cst_4 : f32 to vector<16x1xf32>
    %8 = arith.addf %6, %7 : vector<16x1xf32>
    %9 = math.rsqrt %8 : vector<16x1xf32>
    %10 = vector.broadcast %9 : vector<16x1xf32> to vector<16x32xf32>
    %11 = arith.mulf %0, %10 : vector<16x32xf32>
    %12 = vector.broadcast %1 : vector<1x32xf32> to vector<16x32xf32>
    %13 = arith.mulf %11, %12 : vector<16x32xf32>
    %c0_5 = arith.constant 0 : index
    %c0_6 = arith.constant 0 : index
    %14 = vector.load %arg3[%c0_5, %c0_6] : memref<32x384xf32, #tpu.memory_space<vmem>>, vector<32x384xf32>
    %cst_7 = arith.constant dense<0.000000e+00> : vector<16x384xf32>
    %15 = tpu.matmul %13, %14, %cst_7 {dimension_numbers = #tpu.dot_dimension_numbers<[1], [0], [0], [1], [0, 0, 1, 1], [], []>} : vector<16x32xf32>, vector<32x384xf32>, vector<16x384xf32> -> vector<16x384xf32>
    %16 = vector.extract_strided_slice %15 {offsets = [0, 0], sizes = [16, 64], strides = [1, 1]} : vector<16x384xf32> to vector<16x64xf32>
    %17 = vector.extract_strided_slice %15 {offsets = [0, 64], sizes = [16, 64], strides = [1, 1]} : vector<16x384xf32> to vector<16x64xf32>
    %18 = vector.extract_strided_slice %15 {offsets = [0, 128], sizes = [16, 128], strides = [1, 1]} : vector<16x384xf32> to vector<16x128xf32>
    %19 = vector.extract_strided_slice %15 {offsets = [0, 256], sizes = [16, 128], strides = [1, 1]} : vector<16x384xf32> to vector<16x128xf32>
    %20 = tpu.iota {dimensions = array<i32: 0>} : vector<16x64xi32>
    %c8_i32 = arith.constant 8 : i32
    %c0_i32 = arith.constant 0 : i32
    %21 = arith.cmpi eq, %c8_i32, %c0_i32 : i32
    %c1_i32 = arith.constant 1 : i32
    %22 = arith.select %21, %c1_i32, %c8_i32 : i32
    %23 = vector.broadcast %22 : i32 to vector<16x64xi32>
    %24 = arith.remsi %20, %23 : vector<16x64xi32>
    %c0_i32_8 = arith.constant 0 : i32
    %25 = vector.broadcast %c0_i32_8 : i32 to vector<16x64xi32>
    %26 = arith.cmpi ne, %24, %25 : vector<16x64xi32>
    %c0_i32_9 = arith.constant 0 : i32
    %27 = vector.broadcast %c0_i32_9 : i32 to vector<16x64xi32>
    %28 = arith.cmpi slt, %24, %27 : vector<16x64xi32>
    %c0_i32_10 = arith.constant 0 : i32
    %29 = arith.cmpi slt, %22, %c0_i32_10 : i32
    %30 = vector.broadcast %29 : i1 to vector<16x64xi1>
    %31 = vector.broadcast %30 : vector<16x64xi1> to vector<16x64xi1>
    %32 = arith.xori %28, %31 : vector<16x64xi1>
    %33 = arith.andi %32, %26 : vector<16x64xi1>
    %34 = vector.broadcast %22 : i32 to vector<16x64xi32>
    %35 = arith.addi %24, %34 : vector<16x64xi32>
    %36 = arith.select %33, %35, %24 : vector<16x64xi1>, vector<16x64xi32>
    %c3 = arith.constant 3 : index
    %c0_11 = arith.constant 0 : index
    %37 = vector.load %arg5[%c3, %c0_11] : memref<17x64xf32, #tpu.memory_space<vmem>>, vector<1x64xf32>
    %38 = vector.broadcast %37 : vector<1x64xf32> to vector<16x64xf32>
    %39 = arith.mulf %16, %38 : vector<16x64xf32>
    %c3_i32 = arith.constant 3 : i32
    %40 = tpu.dynamic_rotate %16 by %c3_i32 dim 0 : vector<16x64xf32>, i32 -> vector<16x64xf32>
    %c3_i32_12 = arith.constant 3 : i32
    %41 = vector.broadcast %c3_i32_12 : i32 to vector<16x64xi32>
    %42 = arith.cmpi sge, %36, %41 : vector<16x64xi32>
    %cst_13 = arith.constant 0.000000e+00 : f32
    %43 = vector.broadcast %cst_13 : f32 to vector<16x64xf32>
    %44 = arith.select %42, %40, %43 : vector<16x64xi1>, vector<16x64xf32>
    %c0_14 = arith.constant 0 : index
    %c0_15 = arith.constant 0 : index
    %45 = vector.load %arg5[%c0_14, %c0_15] : memref<17x64xf32, #tpu.memory_space<vmem>>, vector<1x64xf32>
    %46 = vector.broadcast %45 : vector<1x64xf32> to vector<16x64xf32>
    %47 = arith.mulf %44, %46 : vector<16x64xf32>
    %48 = arith.addf %39, %47 : vector<16x64xf32>
    %c2_i32 = arith.constant 2 : i32
    %49 = tpu.dynamic_rotate %16 by %c2_i32 dim 0 : vector<16x64xf32>, i32 -> vector<16x64xf32>
    %c2_i32_16 = arith.constant 2 : i32
    %50 = vector.broadcast %c2_i32_16 : i32 to vector<16x64xi32>
    %51 = arith.cmpi sge, %36, %50 : vector<16x64xi32>
    %cst_17 = arith.constant 0.000000e+00 : f32
    %52 = vector.broadcast %cst_17 : f32 to vector<16x64xf32>
    %53 = arith.select %51, %49, %52 : vector<16x64xi1>, vector<16x64xf32>
    %c1 = arith.constant 1 : index
    %c0_18 = arith.constant 0 : index
    %54 = vector.load %arg5[%c1, %c0_18] : memref<17x64xf32, #tpu.memory_space<vmem>>, vector<1x64xf32>
    %55 = vector.broadcast %54 : vector<1x64xf32> to vector<16x64xf32>
    %56 = arith.mulf %53, %55 : vector<16x64xf32>
    %57 = arith.addf %48, %56 : vector<16x64xf32>
    %c1_i32_19 = arith.constant 1 : i32
    %58 = tpu.dynamic_rotate %16 by %c1_i32_19 dim 0 : vector<16x64xf32>, i32 -> vector<16x64xf32>
    %c1_i32_20 = arith.constant 1 : i32
    %59 = vector.broadcast %c1_i32_20 : i32 to vector<16x64xi32>
    %60 = arith.cmpi sge, %36, %59 : vector<16x64xi32>
    %cst_21 = arith.constant 0.000000e+00 : f32
    %61 = vector.broadcast %cst_21 : f32 to vector<16x64xf32>
    %62 = arith.select %60, %58, %61 : vector<16x64xi1>, vector<16x64xf32>
    %c2 = arith.constant 2 : index
    %c0_22 = arith.constant 0 : index
    %63 = vector.load %arg5[%c2, %c0_22] : memref<17x64xf32, #tpu.memory_space<vmem>>, vector<1x64xf32>
    %64 = vector.broadcast %63 : vector<1x64xf32> to vector<16x64xf32>
    %65 = arith.mulf %62, %64 : vector<16x64xf32>
    %66 = arith.addf %57, %65 : vector<16x64xf32>
    %c4 = arith.constant 4 : index
    %c0_23 = arith.constant 0 : index
    %67 = vector.load %arg5[%c4, %c0_23] : memref<17x64xf32, #tpu.memory_space<vmem>>, vector<1x64xf32>
    %68 = vector.broadcast %67 : vector<1x64xf32> to vector<16x64xf32>
    %69 = arith.addf %66, %68 : vector<16x64xf32>
    %70 = arith.negf %69 : vector<16x64xf32>
    %71 = math.exp %70 : vector<16x64xf32>
    %cst_24 = arith.constant 1.000000e+00 : f32
    %72 = vector.broadcast %cst_24 : f32 to vector<16x64xf32>
    %73 = arith.addf %72, %71 : vector<16x64xf32>
    %74 = arith.divf %72, %73 : vector<16x64xf32>
    %75 = arith.mulf %69, %74 : vector<16x64xf32>
    %c0_25 = arith.constant 0 : index
    %c0_26 = arith.constant 0 : index
    %76 = vector.load %arg4[%c0_25, %c0_26] : memref<64x80xf32, #tpu.memory_space<vmem>>, vector<64x80xf32>
    %cst_27 = arith.constant dense<0.000000e+00> : vector<16x80xf32>
    %77 = tpu.matmul %75, %76, %cst_27 {dimension_numbers = #tpu.dot_dimension_numbers<[1], [0], [0], [1], [0, 0, 1, 1], [], []>} : vector<16x64xf32>, vector<64x80xf32>, vector<16x80xf32> -> vector<16x80xf32>
    %78 = vector.extract_strided_slice %77 {offsets = [0, 0], sizes = [16, 64], strides = [1, 1]} : vector<16x80xf32> to vector<16x64xf32>
    %c5 = arith.constant 5 : index
    %c0_28 = arith.constant 0 : index
    %79 = vector.load %arg5[%c5, %c0_28] : memref<17x64xf32, #tpu.memory_space<vmem>>, vector<1x64xf32>
    %80 = vector.broadcast %79 : vector<1x64xf32> to vector<16x64xf32>
    %81 = arith.addf %78, %80 : vector<16x64xf32>
    %cst_29 = arith.constant 0.000000e+00 : f32
    %82 = vector.broadcast %cst_29 : f32 to vector<16x64xf32>
    %83 = arith.maximumf %81, %82 : vector<16x64xf32>
    %84 = math.absf %81 : vector<16x64xf32>
    %cst_30 = arith.constant 0.000000e+00 : f32
    %85 = vector.broadcast %cst_30 : f32 to vector<16x64xf32>
    %86 = arith.subf %85, %84 : vector<16x64xf32>
    %87 = math.exp %86 : vector<16x64xf32>
    %88 = math.log1p %87 : vector<16x64xf32>
    %89 = arith.addf %83, %88 : vector<16x64xf32>
    %90 = vector.extract_strided_slice %77 {offsets = [0, 64], sizes = [16, 8], strides = [1, 1]} : vector<16x80xf32> to vector<16x8xf32>
    %91 = vector.extract_strided_slice %77 {offsets = [0, 72], sizes = [16, 8], strides = [1, 1]} : vector<16x80xf32> to vector<16x8xf32>
    %c6 = arith.constant 6 : index
    %c0_31 = arith.constant 0 : index
    %92 = vector.load %arg5[%c6, %c0_31] : memref<17x64xf32, #tpu.memory_space<vmem>>, vector<8x64xf32>
    %c14 = arith.constant 14 : index
    %c0_32 = arith.constant 0 : index
    %93 = vector.load %arg5[%c14, %c0_32] : memref<17x64xf32, #tpu.memory_space<vmem>>, vector<1x64xf32>
    %94 = arith.mulf %89, %75 : vector<16x64xf32>
    %95 = vector.shape_cast %89 : vector<16x64xf32> to vector<16x1x64xf32>
    %96 = vector.shape_cast %92 : vector<8x64xf32> to vector<1x8x64xf32>
    %97 = vector.broadcast %95 : vector<16x1x64xf32> to vector<16x8x64xf32>
    %98 = vector.broadcast %96 : vector<1x8x64xf32> to vector<16x8x64xf32>
    %99 = arith.mulf %97, %98 : vector<16x8x64xf32>
    %100 = math.exp %99 : vector<16x8x64xf32>
    %101 = vector.shape_cast %90 : vector<16x8xf32> to vector<16x8x1xf32>
    %102 = vector.shape_cast %94 : vector<16x64xf32> to vector<16x1x64xf32>
    %103 = vector.broadcast %101 : vector<16x8x1xf32> to vector<16x8x64xf32>
    %104 = vector.broadcast %102 : vector<16x1x64xf32> to vector<16x8x64xf32>
    %105 = arith.mulf %103, %104 : vector<16x8x64xf32>
    %cst_33 = arith.constant 0.000000e+00 : f32
    %106 = vector.broadcast %cst_33 : f32 to vector<8x64xf32>
    %107 = vector.extract_strided_slice %100 {offsets = [0, 0, 0], sizes = [1, 8, 64], strides = [1, 1, 1]} : vector<16x8x64xf32> to vector<1x8x64xf32>
    %108 = vector.shape_cast %107 : vector<1x8x64xf32> to vector<8x64xf32>
    %109 = arith.mulf %108, %106 : vector<8x64xf32>
    %110 = vector.extract_strided_slice %105 {offsets = [0, 0, 0], sizes = [1, 8, 64], strides = [1, 1, 1]} : vector<16x8x64xf32> to vector<1x8x64xf32>
    %111 = vector.shape_cast %110 : vector<1x8x64xf32> to vector<8x64xf32>
    %112 = arith.addf %109, %111 : vector<8x64xf32>
    %c0_34 = arith.constant 0 : index
    %c0_35 = arith.constant 0 : index
    %c0_36 = arith.constant 0 : index
    %113 = vector.load %arg12[%c0_34, %c0_35, %c0_36] : memref<16x8x64xf32, #tpu.memory_space<vmem>>, vector<1x8x64xf32>
    %114 = vector.shape_cast %113 : vector<1x8x64xf32> to vector<8x64xf32>
    %115 = vector.shape_cast %112 : vector<8x64xf32> to vector<1x8x64xf32>
    tpu.vector_store %arg12[%c0_34, %c0_35, %c0_36], %115 {strides = array<i32>} : memref<16x8x64xf32, #tpu.memory_space<vmem>>, vector<1x8x64xf32>,
    %116 = vector.extract_strided_slice %100 {offsets = [1, 0, 0], sizes = [1, 8, 64], strides = [1, 1, 1]} : vector<16x8x64xf32> to vector<1x8x64xf32>
    %117 = vector.shape_cast %116 : vector<1x8x64xf32> to vector<8x64xf32>
    %118 = arith.mulf %117, %112 : vector<8x64xf32>
    %119 = vector.extract_strided_slice %105 {offsets = [1, 0, 0], sizes = [1, 8, 64], strides = [1, 1, 1]} : vector<16x8x64xf32> to vector<1x8x64xf32>
    %120 = vector.shape_cast %119 : vector<1x8x64xf32> to vector<8x64xf32>
    %121 = arith.addf %118, %120 : vector<8x64xf32>
    %c1_37 = arith.constant 1 : index
    %c0_38 = arith.constant 0 : index
    %c0_39 = arith.constant 0 : index
    %122 = vector.load %arg12[%c1_37, %c0_38, %c0_39] : memref<16x8x64xf32, #tpu.memory_space<vmem>>, vector<1x8x64xf32>
    %123 = vector.shape_cast %122 : vector<1x8x64xf32> to vector<8x64xf32>
    %124 = vector.shape_cast %121 : vector<8x64xf32> to vector<1x8x64xf32>
    tpu.vector_store %arg12[%c1_37, %c0_38, %c0_39], %124 {strides = array<i32>} : memref<16x8x64xf32, #tpu.memory_space<vmem>>, vector<1x8x64xf32>,
    %125 = vector.extract_strided_slice %100 {offsets = [2, 0, 0], sizes = [1, 8, 64], strides = [1, 1, 1]} : vector<16x8x64xf32> to vector<1x8x64xf32>
    %126 = vector.shape_cast %125 : vector<1x8x64xf32> to vector<8x64xf32>
    %127 = arith.mulf %126, %121 : vector<8x64xf32>
    %128 = vector.extract_strided_slice %105 {offsets = [2, 0, 0], sizes = [1, 8, 64], strides = [1, 1, 1]} : vector<16x8x64xf32> to vector<1x8x64xf32>
    %129 = vector.shape_cast %128 : vector<1x8x64xf32> to vector<8x64xf32>
    %130 = arith.addf %127, %129 : vector<8x64xf32>
    %c2_40 = arith.constant 2 : index
    %c0_41 = arith.constant 0 : index
    %c0_42 = arith.constant 0 : index
    %131 = vector.load %arg12[%c2_40, %c0_41, %c0_42] : memref<16x8x64xf32, #tpu.memory_space<vmem>>, vector<1x8x64xf32>
    %132 = vector.shape_cast %131 : vector<1x8x64xf32> to vector<8x64xf32>
    %133 = vector.shape_cast %130 : vector<8x64xf32> to vector<1x8x64xf32>
    tpu.vector_store %arg12[%c2_40, %c0_41, %c0_42], %133 {strides = array<i32>} : memref<16x8x64xf32, #tpu.memory_space<vmem>>, vector<1x8x64xf32>,
    %134 = vector.extract_strided_slice %100 {offsets = [3, 0, 0], sizes = [1, 8, 64], strides = [1, 1, 1]} : vector<16x8x64xf32> to vector<1x8x64xf32>
    %135 = vector.shape_cast %134 : vector<1x8x64xf32> to vector<8x64xf32>
    %136 = arith.mulf %135, %130 : vector<8x64xf32>
    %137 = vector.extract_strided_slice %105 {offsets = [3, 0, 0], sizes = [1, 8, 64], strides = [1, 1, 1]} : vector<16x8x64xf32> to vector<1x8x64xf32>
    %138 = vector.shape_cast %137 : vector<1x8x64xf32> to vector<8x64xf32>
    %139 = arith.addf %136, %138 : vector<8x64xf32>
    %c3_43 = arith.constant 3 : index
    %c0_44 = arith.constant 0 : index
    %c0_45 = arith.constant 0 : index
    %140 = vector.load %arg12[%c3_43, %c0_44, %c0_45] : memref<16x8x64xf32, #tpu.memory_space<vmem>>, vector<1x8x64xf32>
    %141 = vector.shape_cast %140 : vector<1x8x64xf32> to vector<8x64xf32>
    %142 = vector.shape_cast %139 : vector<8x64xf32> to vector<1x8x64xf32>
    tpu.vector_store %arg12[%c3_43, %c0_44, %c0_45], %142 {strides = array<i32>} : memref<16x8x64xf32, #tpu.memory_space<vmem>>, vector<1x8x64xf32>,
    %143 = vector.extract_strided_slice %100 {offsets = [4, 0, 0], sizes = [1, 8, 64], strides = [1, 1, 1]} : vector<16x8x64xf32> to vector<1x8x64xf32>
    %144 = vector.shape_cast %143 : vector<1x8x64xf32> to vector<8x64xf32>
    %145 = arith.mulf %144, %139 : vector<8x64xf32>
    %146 = vector.extract_strided_slice %105 {offsets = [4, 0, 0], sizes = [1, 8, 64], strides = [1, 1, 1]} : vector<16x8x64xf32> to vector<1x8x64xf32>
    %147 = vector.shape_cast %146 : vector<1x8x64xf32> to vector<8x64xf32>
    %148 = arith.addf %145, %147 : vector<8x64xf32>
    %c4_46 = arith.constant 4 : index
    %c0_47 = arith.constant 0 : index
    %c0_48 = arith.constant 0 : index
    %149 = vector.load %arg12[%c4_46, %c0_47, %c0_48] : memref<16x8x64xf32, #tpu.memory_space<vmem>>, vector<1x8x64xf32>
    %150 = vector.shape_cast %149 : vector<1x8x64xf32> to vector<8x64xf32>
    %151 = vector.shape_cast %148 : vector<8x64xf32> to vector<1x8x64xf32>
    tpu.vector_store %arg12[%c4_46, %c0_47, %c0_48], %151 {strides = array<i32>} : memref<16x8x64xf32, #tpu.memory_space<vmem>>, vector<1x8x64xf32>,
    %152 = vector.extract_strided_slice %100 {offsets = [5, 0, 0], sizes = [1, 8, 64], strides = [1, 1, 1]} : vector<16x8x64xf32> to vector<1x8x64xf32>
    %153 = vector.shape_cast %152 : vector<1x8x64xf32> to vector<8x64xf32>
    %154 = arith.mulf %153, %148 : vector<8x64xf32>
    %155 = vector.extract_strided_slice %105 {offsets = [5, 0, 0], sizes = [1, 8, 64], strides = [1, 1, 1]} : vector<16x8x64xf32> to vector<1x8x64xf32>
    %156 = vector.shape_cast %155 : vector<1x8x64xf32> to vector<8x64xf32>
    %157 = arith.addf %154, %156 : vector<8x64xf32>
    %c5_49 = arith.constant 5 : index
    %c0_50 = arith.constant 0 : index
    %c0_51 = arith.constant 0 : index
    %158 = vector.load %arg12[%c5_49, %c0_50, %c0_51] : memref<16x8x64xf32, #tpu.memory_space<vmem>>, vector<1x8x64xf32>
    %159 = vector.shape_cast %158 : vector<1x8x64xf32> to vector<8x64xf32>
    %160 = vector.shape_cast %157 : vector<8x64xf32> to vector<1x8x64xf32>
    tpu.vector_store %arg12[%c5_49, %c0_50, %c0_51], %160 {strides = array<i32>} : memref<16x8x64xf32, #tpu.memory_space<vmem>>, vector<1x8x64xf32>,
    %161 = vector.extract_strided_slice %100 {offsets = [6, 0, 0], sizes = [1, 8, 64], strides = [1, 1, 1]} : vector<16x8x64xf32> to vector<1x8x64xf32>
    %162 = vector.shape_cast %161 : vector<1x8x64xf32> to vector<8x64xf32>
    %163 = arith.mulf %162, %157 : vector<8x64xf32>
    %164 = vector.extract_strided_slice %105 {offsets = [6, 0, 0], sizes = [1, 8, 64], strides = [1, 1, 1]} : vector<16x8x64xf32> to vector<1x8x64xf32>
    %165 = vector.shape_cast %164 : vector<1x8x64xf32> to vector<8x64xf32>
    %166 = arith.addf %163, %165 : vector<8x64xf32>
    %c6_52 = arith.constant 6 : index
    %c0_53 = arith.constant 0 : index
    %c0_54 = arith.constant 0 : index
    %167 = vector.load %arg12[%c6_52, %c0_53, %c0_54] : memref<16x8x64xf32, #tpu.memory_space<vmem>>, vector<1x8x64xf32>
    %168 = vector.shape_cast %167 : vector<1x8x64xf32> to vector<8x64xf32>
    %169 = vector.shape_cast %166 : vector<8x64xf32> to vector<1x8x64xf32>
    tpu.vector_store %arg12[%c6_52, %c0_53, %c0_54], %169 {strides = array<i32>} : memref<16x8x64xf32, #tpu.memory_space<vmem>>, vector<1x8x64xf32>,
    %170 = vector.extract_strided_slice %100 {offsets = [7, 0, 0], sizes = [1, 8, 64], strides = [1, 1, 1]} : vector<16x8x64xf32> to vector<1x8x64xf32>
    %171 = vector.shape_cast %170 : vector<1x8x64xf32> to vector<8x64xf32>
    %172 = arith.mulf %171, %166 : vector<8x64xf32>
    %173 = vector.extract_strided_slice %105 {offsets = [7, 0, 0], sizes = [1, 8, 64], strides = [1, 1, 1]} : vector<16x8x64xf32> to vector<1x8x64xf32>
    %174 = vector.shape_cast %173 : vector<1x8x64xf32> to vector<8x64xf32>
    %175 = arith.addf %172, %174 : vector<8x64xf32>
    %c7 = arith.constant 7 : index
    %c0_55 = arith.constant 0 : index
    %c0_56 = arith.constant 0 : index
    %176 = vector.load %arg12[%c7, %c0_55, %c0_56] : memref<16x8x64xf32, #tpu.memory_space<vmem>>, vector<1x8x64xf32>
    %177 = vector.shape_cast %176 : vector<1x8x64xf32> to vector<8x64xf32>
    %178 = vector.shape_cast %175 : vector<8x64xf32> to vector<1x8x64xf32>
    tpu.vector_store %arg12[%c7, %c0_55, %c0_56], %178 {strides = array<i32>} : memref<16x8x64xf32, #tpu.memory_space<vmem>>, vector<1x8x64xf32>,
    %cst_57 = arith.constant 0.000000e+00 : f32
    %179 = vector.broadcast %cst_57 : f32 to vector<8x64xf32>
    %180 = vector.extract_strided_slice %100 {offsets = [8, 0, 0], sizes = [1, 8, 64], strides = [1, 1, 1]} : vector<16x8x64xf32> to vector<1x8x64xf32>
    %181 = vector.shape_cast %180 : vector<1x8x64xf32> to vector<8x64xf32>
    %182 = arith.mulf %181, %179 : vector<8x64xf32>
    %183 = vector.extract_strided_slice %105 {offsets = [8, 0, 0], sizes = [1, 8, 64], strides = [1, 1, 1]} : vector<16x8x64xf32> to vector<1x8x64xf32>
    %184 = vector.shape_cast %183 : vector<1x8x64xf32> to vector<8x64xf32>
    %185 = arith.addf %182, %184 : vector<8x64xf32>
    %c8 = arith.constant 8 : index
    %c0_58 = arith.constant 0 : index
    %c0_59 = arith.constant 0 : index
    %186 = vector.load %arg12[%c8, %c0_58, %c0_59] : memref<16x8x64xf32, #tpu.memory_space<vmem>>, vector<1x8x64xf32>
    %187 = vector.shape_cast %186 : vector<1x8x64xf32> to vector<8x64xf32>
    %188 = vector.shape_cast %185 : vector<8x64xf32> to vector<1x8x64xf32>
    tpu.vector_store %arg12[%c8, %c0_58, %c0_59], %188 {strides = array<i32>} : memref<16x8x64xf32, #tpu.memory_space<vmem>>, vector<1x8x64xf32>,
    %189 = vector.extract_strided_slice %100 {offsets = [9, 0, 0], sizes = [1, 8, 64], strides = [1, 1, 1]} : vector<16x8x64xf32> to vector<1x8x64xf32>
    %190 = vector.shape_cast %189 : vector<1x8x64xf32> to vector<8x64xf32>
    %191 = arith.mulf %190, %185 : vector<8x64xf32>
    %192 = vector.extract_strided_slice %105 {offsets = [9, 0, 0], sizes = [1, 8, 64], strides = [1, 1, 1]} : vector<16x8x64xf32> to vector<1x8x64xf32>
    %193 = vector.shape_cast %192 : vector<1x8x64xf32> to vector<8x64xf32>
    %194 = arith.addf %191, %193 : vector<8x64xf32>
    %c9 = arith.constant 9 : index
    %c0_60 = arith.constant 0 : index
    %c0_61 = arith.constant 0 : index
    %195 = vector.load %arg12[%c9, %c0_60, %c0_61] : memref<16x8x64xf32, #tpu.memory_space<vmem>>, vector<1x8x64xf32>
    %196 = vector.shape_cast %195 : vector<1x8x64xf32> to vector<8x64xf32>
    %197 = vector.shape_cast %194 : vector<8x64xf32> to vector<1x8x64xf32>
    tpu.vector_store %arg12[%c9, %c0_60, %c0_61], %197 {strides = array<i32>} : memref<16x8x64xf32, #tpu.memory_space<vmem>>, vector<1x8x64xf32>,
    %198 = vector.extract_strided_slice %100 {offsets = [10, 0, 0], sizes = [1, 8, 64], strides = [1, 1, 1]} : vector<16x8x64xf32> to vector<1x8x64xf32>
    %199 = vector.shape_cast %198 : vector<1x8x64xf32> to vector<8x64xf32>
    %200 = arith.mulf %199, %194 : vector<8x64xf32>
    %201 = vector.extract_strided_slice %105 {offsets = [10, 0, 0], sizes = [1, 8, 64], strides = [1, 1, 1]} : vector<16x8x64xf32> to vector<1x8x64xf32>
    %202 = vector.shape_cast %201 : vector<1x8x64xf32> to vector<8x64xf32>
    %203 = arith.addf %200, %202 : vector<8x64xf32>
    %c10 = arith.constant 10 : index
    %c0_62 = arith.constant 0 : index
    %c0_63 = arith.constant 0 : index
    %204 = vector.load %arg12[%c10, %c0_62, %c0_63] : memref<16x8x64xf32, #tpu.memory_space<vmem>>, vector<1x8x64xf32>
    %205 = vector.shape_cast %204 : vector<1x8x64xf32> to vector<8x64xf32>
    %206 = vector.shape_cast %203 : vector<8x64xf32> to vector<1x8x64xf32>
    tpu.vector_store %arg12[%c10, %c0_62, %c0_63], %206 {strides = array<i32>} : memref<16x8x64xf32, #tpu.memory_space<vmem>>, vector<1x8x64xf32>,
    %207 = vector.extract_strided_slice %100 {offsets = [11, 0, 0], sizes = [1, 8, 64], strides = [1, 1, 1]} : vector<16x8x64xf32> to vector<1x8x64xf32>
    %208 = vector.shape_cast %207 : vector<1x8x64xf32> to vector<8x64xf32>
    %209 = arith.mulf %208, %203 : vector<8x64xf32>
    %210 = vector.extract_strided_slice %105 {offsets = [11, 0, 0], sizes = [1, 8, 64], strides = [1, 1, 1]} : vector<16x8x64xf32> to vector<1x8x64xf32>
    %211 = vector.shape_cast %210 : vector<1x8x64xf32> to vector<8x64xf32>
    %212 = arith.addf %209, %211 : vector<8x64xf32>
    %c11 = arith.constant 11 : index
    %c0_64 = arith.constant 0 : index
    %c0_65 = arith.constant 0 : index
    %213 = vector.load %arg12[%c11, %c0_64, %c0_65] : memref<16x8x64xf32, #tpu.memory_space<vmem>>, vector<1x8x64xf32>
    %214 = vector.shape_cast %213 : vector<1x8x64xf32> to vector<8x64xf32>
    %215 = vector.shape_cast %212 : vector<8x64xf32> to vector<1x8x64xf32>
    tpu.vector_store %arg12[%c11, %c0_64, %c0_65], %215 {strides = array<i32>} : memref<16x8x64xf32, #tpu.memory_space<vmem>>, vector<1x8x64xf32>,
    %216 = vector.extract_strided_slice %100 {offsets = [12, 0, 0], sizes = [1, 8, 64], strides = [1, 1, 1]} : vector<16x8x64xf32> to vector<1x8x64xf32>
    %217 = vector.shape_cast %216 : vector<1x8x64xf32> to vector<8x64xf32>
    %218 = arith.mulf %217, %212 : vector<8x64xf32>
    %219 = vector.extract_strided_slice %105 {offsets = [12, 0, 0], sizes = [1, 8, 64], strides = [1, 1, 1]} : vector<16x8x64xf32> to vector<1x8x64xf32>
    %220 = vector.shape_cast %219 : vector<1x8x64xf32> to vector<8x64xf32>
    %221 = arith.addf %218, %220 : vector<8x64xf32>
    %c12 = arith.constant 12 : index
    %c0_66 = arith.constant 0 : index
    %c0_67 = arith.constant 0 : index
    %222 = vector.load %arg12[%c12, %c0_66, %c0_67] : memref<16x8x64xf32, #tpu.memory_space<vmem>>, vector<1x8x64xf32>
    %223 = vector.shape_cast %222 : vector<1x8x64xf32> to vector<8x64xf32>
    %224 = vector.shape_cast %221 : vector<8x64xf32> to vector<1x8x64xf32>
    tpu.vector_store %arg12[%c12, %c0_66, %c0_67], %224 {strides = array<i32>} : memref<16x8x64xf32, #tpu.memory_space<vmem>>, vector<1x8x64xf32>,
    %225 = vector.extract_strided_slice %100 {offsets = [13, 0, 0], sizes = [1, 8, 64], strides = [1, 1, 1]} : vector<16x8x64xf32> to vector<1x8x64xf32>
    %226 = vector.shape_cast %225 : vector<1x8x64xf32> to vector<8x64xf32>
    %227 = arith.mulf %226, %221 : vector<8x64xf32>
    %228 = vector.extract_strided_slice %105 {offsets = [13, 0, 0], sizes = [1, 8, 64], strides = [1, 1, 1]} : vector<16x8x64xf32> to vector<1x8x64xf32>
    %229 = vector.shape_cast %228 : vector<1x8x64xf32> to vector<8x64xf32>
    %230 = arith.addf %227, %229 : vector<8x64xf32>
    %c13 = arith.constant 13 : index
    %c0_68 = arith.constant 0 : index
    %c0_69 = arith.constant 0 : index
    %231 = vector.load %arg12[%c13, %c0_68, %c0_69] : memref<16x8x64xf32, #tpu.memory_space<vmem>>, vector<1x8x64xf32>
    %232 = vector.shape_cast %231 : vector<1x8x64xf32> to vector<8x64xf32>
    %233 = vector.shape_cast %230 : vector<8x64xf32> to vector<1x8x64xf32>
    tpu.vector_store %arg12[%c13, %c0_68, %c0_69], %233 {strides = array<i32>} : memref<16x8x64xf32, #tpu.memory_space<vmem>>, vector<1x8x64xf32>,
    %234 = vector.extract_strided_slice %100 {offsets = [14, 0, 0], sizes = [1, 8, 64], strides = [1, 1, 1]} : vector<16x8x64xf32> to vector<1x8x64xf32>
    %235 = vector.shape_cast %234 : vector<1x8x64xf32> to vector<8x64xf32>
    %236 = arith.mulf %235, %230 : vector<8x64xf32>
    %237 = vector.extract_strided_slice %105 {offsets = [14, 0, 0], sizes = [1, 8, 64], strides = [1, 1, 1]} : vector<16x8x64xf32> to vector<1x8x64xf32>
    %238 = vector.shape_cast %237 : vector<1x8x64xf32> to vector<8x64xf32>
    %239 = arith.addf %236, %238 : vector<8x64xf32>
    %c14_70 = arith.constant 14 : index
    %c0_71 = arith.constant 0 : index
    %c0_72 = arith.constant 0 : index
    %240 = vector.load %arg12[%c14_70, %c0_71, %c0_72] : memref<16x8x64xf32, #tpu.memory_space<vmem>>, vector<1x8x64xf32>
    %241 = vector.shape_cast %240 : vector<1x8x64xf32> to vector<8x64xf32>
    %242 = vector.shape_cast %239 : vector<8x64xf32> to vector<1x8x64xf32>
    tpu.vector_store %arg12[%c14_70, %c0_71, %c0_72], %242 {strides = array<i32>} : memref<16x8x64xf32, #tpu.memory_space<vmem>>, vector<1x8x64xf32>,
    %243 = vector.extract_strided_slice %100 {offsets = [15, 0, 0], sizes = [1, 8, 64], strides = [1, 1, 1]} : vector<16x8x64xf32> to vector<1x8x64xf32>
    %244 = vector.shape_cast %243 : vector<1x8x64xf32> to vector<8x64xf32>
    %245 = arith.mulf %244, %239 : vector<8x64xf32>
    %246 = vector.extract_strided_slice %105 {offsets = [15, 0, 0], sizes = [1, 8, 64], strides = [1, 1, 1]} : vector<16x8x64xf32> to vector<1x8x64xf32>
    %247 = vector.shape_cast %246 : vector<1x8x64xf32> to vector<8x64xf32>
    %248 = arith.addf %245, %247 : vector<8x64xf32>
    %c15 = arith.constant 15 : index
    %c0_73 = arith.constant 0 : index
    %c0_74 = arith.constant 0 : index
    %249 = vector.load %arg12[%c15, %c0_73, %c0_74] : memref<16x8x64xf32, #tpu.memory_space<vmem>>, vector<1x8x64xf32>
    %250 = vector.shape_cast %249 : vector<1x8x64xf32> to vector<8x64xf32>
    %251 = vector.shape_cast %248 : vector<8x64xf32> to vector<1x8x64xf32>
    tpu.vector_store %arg12[%c15, %c0_73, %c0_74], %251 {strides = array<i32>} : memref<16x8x64xf32, #tpu.memory_space<vmem>>, vector<1x8x64xf32>,
    %c0_75 = arith.constant 0 : index
    %c0_76 = arith.constant 0 : index
    %c0_77 = arith.constant 0 : index
    %252 = vector.load %arg12[%c0_75, %c0_76, %c0_77] : memref<16x8x64xf32, #tpu.memory_space<vmem>>, vector<16x8x64xf32>
    %253 = vector.shape_cast %91 : vector<16x8xf32> to vector<16x8x1xf32>
    %254 = vector.broadcast %253 : vector<16x8x1xf32> to vector<16x8x64xf32>
    %255 = arith.mulf %254, %252 : vector<16x8x64xf32>
    %cst_78 = arith.constant dense<0.000000e+00> : vector<16x64xf32>
    %256 = vector.multi_reduction <add>, %255, %cst_78 [1] : vector<16x8x64xf32> to vector<16x64xf32>
    %257 = vector.broadcast %93 : vector<1x64xf32> to vector<16x64xf32>
    %258 = arith.mulf %257, %75 : vector<16x64xf32>
    %259 = arith.addf %256, %258 : vector<16x64xf32>
    %260 = arith.negf %17 : vector<16x64xf32>
    %261 = math.exp %260 : vector<16x64xf32>
    %cst_79 = arith.constant 1.000000e+00 : f32
    %262 = vector.broadcast %cst_79 : f32 to vector<16x64xf32>
    %263 = arith.addf %262, %261 : vector<16x64xf32>
    %264 = arith.divf %262, %263 : vector<16x64xf32>
    %265 = arith.mulf %17, %264 : vector<16x64xf32>
    %266 = arith.mulf %259, %265 : vector<16x64xf32>
    %c0_80 = arith.constant 0 : index
    %c0_81 = arith.constant 0 : index
    %267 = vector.load %arg6[%c0_80, %c0_81] : memref<32x128xf32, #tpu.memory_space<vmem>>, vector<16x128xf32>
    %268 = arith.mulf %18, %267 : vector<16x128xf32>
    %c16 = arith.constant 16 : index
    %c0_82 = arith.constant 0 : index
    %269 = vector.load %arg6[%c16, %c0_82] : memref<32x128xf32, #tpu.memory_space<vmem>>, vector<16x128xf32>
    %270 = arith.mulf %19, %269 : vector<16x128xf32>
    %271 = arith.addf %268, %270 : vector<16x128xf32>
    %272 = vector.extract_strided_slice %271 {offsets = [0, 0], sizes = [16, 64], strides = [1, 1]} : vector<16x128xf32> to vector<16x64xf32>
    %273 = vector.extract_strided_slice %271 {offsets = [0, 64], sizes = [16, 32], strides = [1, 1]} : vector<16x128xf32> to vector<16x32xf32>
    %274 = vector.extract_strided_slice %271 {offsets = [0, 96], sizes = [16, 32], strides = [1, 1]} : vector<16x128xf32> to vector<16x32xf32>
    %275 = tpu.transpose %273, [1, 0] : vector<16x32xf32> -> vector<32x16xf32>
    %c0_83 = arith.constant 0 : index
    %c0_84 = arith.constant 0 : index
    %276 = vector.load %arg7[%c0_83, %c0_84] : memref<16x16xf32, #tpu.memory_space<vmem>>, vector<16x16xf32>
    %277 = vector.extract_strided_slice %272 {offsets = [0, 0], sizes = [16, 16], strides = [1, 1]} : vector<16x64xf32> to vector<16x16xf32>
    %278 = vector.extract_strided_slice %275 {offsets = [0, 0], sizes = [16, 16], strides = [1, 1]} : vector<32x16xf32> to vector<16x16xf32>
    %279 = vector.extract_strided_slice %274 {offsets = [0, 0], sizes = [16, 16], strides = [1, 1]} : vector<16x32xf32> to vector<16x16xf32>
    %cst_85 = arith.constant dense<0.000000e+00> : vector<16x16xf32>
    %280 = tpu.matmul %277, %278, %cst_85 {dimension_numbers = #tpu.dot_dimension_numbers<[1], [0], [0], [1], [0, 0, 1, 1], [], []>} : vector<16x16xf32>, vector<16x16xf32>, vector<16x16xf32> -> vector<16x16xf32>
    %cst_86 = arith.constant 2.500000e-01 : f32
    %281 = vector.broadcast %cst_86 : f32 to vector<16x16xf32>
    %282 = arith.mulf %280, %281 : vector<16x16xf32>
    %283 = arith.addf %282, %276 : vector<16x16xf32>
    %cst_87 = arith.constant dense<0xFF800000> : vector<16xf32>
    %284 = vector.multi_reduction <maximumf>, %283, %cst_87 [1] : vector<16x16xf32> to vector<16xf32>
    %285 = vector.shape_cast %284 : vector<16xf32> to vector<16x1xf32>
    %286 = vector.broadcast %285 : vector<16x1xf32> to vector<16x16xf32>
    %287 = arith.subf %283, %286 : vector<16x16xf32>
    %288 = math.exp %287 : vector<16x16xf32>
    %cst_88 = arith.constant dense<0.000000e+00> : vector<16xf32>
    %289 = vector.multi_reduction <add>, %288, %cst_88 [1] : vector<16x16xf32> to vector<16xf32>
    %290 = vector.shape_cast %289 : vector<16xf32> to vector<16x1xf32>
    %291 = vector.broadcast %290 : vector<16x1xf32> to vector<16x16xf32>
    %292 = arith.divf %288, %291 : vector<16x16xf32>
    %cst_89 = arith.constant dense<0.000000e+00> : vector<16x16xf32>
    %293 = tpu.matmul %292, %279, %cst_89 {dimension_numbers = #tpu.dot_dimension_numbers<[1], [0], [0], [1], [0, 0, 1, 1], [], []>} : vector<16x16xf32>, vector<16x16xf32>, vector<16x16xf32> -> vector<16x16xf32>
    %c0_90 = arith.constant 0 : index
    %c0_91 = arith.constant 0 : index
    %294 = vector.load %arg11[%c0_90, %c0_91] : memref<16x64xf32, #tpu.memory_space<vmem>>, vector<16x16xf32>
    tpu.vector_store %arg11[%c0_90, %c0_91], %293 {strides = array<i32>} : memref<16x64xf32, #tpu.memory_space<vmem>>, vector<16x16xf32>,
    %295 = vector.extract_strided_slice %272 {offsets = [0, 16], sizes = [16, 16], strides = [1, 1]} : vector<16x64xf32> to vector<16x16xf32>
    %296 = vector.extract_strided_slice %275 {offsets = [0, 0], sizes = [16, 16], strides = [1, 1]} : vector<32x16xf32> to vector<16x16xf32>
    %297 = vector.extract_strided_slice %274 {offsets = [0, 0], sizes = [16, 16], strides = [1, 1]} : vector<16x32xf32> to vector<16x16xf32>
    %cst_92 = arith.constant dense<0.000000e+00> : vector<16x16xf32>
    %298 = tpu.matmul %295, %296, %cst_92 {dimension_numbers = #tpu.dot_dimension_numbers<[1], [0], [0], [1], [0, 0, 1, 1], [], []>} : vector<16x16xf32>, vector<16x16xf32>, vector<16x16xf32> -> vector<16x16xf32>
    %cst_93 = arith.constant 2.500000e-01 : f32
    %299 = vector.broadcast %cst_93 : f32 to vector<16x16xf32>
    %300 = arith.mulf %298, %299 : vector<16x16xf32>
    %301 = arith.addf %300, %276 : vector<16x16xf32>
    %cst_94 = arith.constant dense<0xFF800000> : vector<16xf32>
    %302 = vector.multi_reduction <maximumf>, %301, %cst_94 [1] : vector<16x16xf32> to vector<16xf32>
    %303 = vector.shape_cast %302 : vector<16xf32> to vector<16x1xf32>
    %304 = vector.broadcast %303 : vector<16x1xf32> to vector<16x16xf32>
    %305 = arith.subf %301, %304 : vector<16x16xf32>
    %306 = math.exp %305 : vector<16x16xf32>
    %cst_95 = arith.constant dense<0.000000e+00> : vector<16xf32>
    %307 = vector.multi_reduction <add>, %306, %cst_95 [1] : vector<16x16xf32> to vector<16xf32>
    %308 = vector.shape_cast %307 : vector<16xf32> to vector<16x1xf32>
    %309 = vector.broadcast %308 : vector<16x1xf32> to vector<16x16xf32>
    %310 = arith.divf %306, %309 : vector<16x16xf32>
    %cst_96 = arith.constant dense<0.000000e+00> : vector<16x16xf32>
    %311 = tpu.matmul %310, %297, %cst_96 {dimension_numbers = #tpu.dot_dimension_numbers<[1], [0], [0], [1], [0, 0, 1, 1], [], []>} : vector<16x16xf32>, vector<16x16xf32>, vector<16x16xf32> -> vector<16x16xf32>
    %c0_97 = arith.constant 0 : index
    %c16_98 = arith.constant 16 : index
    %312 = vector.load %arg11[%c0_97, %c16_98] : memref<16x64xf32, #tpu.memory_space<vmem>>, vector<16x16xf32>
    tpu.vector_store %arg11[%c0_97, %c16_98], %311 {strides = array<i32>} : memref<16x64xf32, #tpu.memory_space<vmem>>, vector<16x16xf32>,
    %313 = vector.extract_strided_slice %272 {offsets = [0, 32], sizes = [16, 16], strides = [1, 1]} : vector<16x64xf32> to vector<16x16xf32>
    %314 = vector.extract_strided_slice %275 {offsets = [16, 0], sizes = [16, 16], strides = [1, 1]} : vector<32x16xf32> to vector<16x16xf32>
    %315 = vector.extract_strided_slice %274 {offsets = [0, 16], sizes = [16, 16], strides = [1, 1]} : vector<16x32xf32> to vector<16x16xf32>
    %cst_99 = arith.constant dense<0.000000e+00> : vector<16x16xf32>
    %316 = tpu.matmul %313, %314, %cst_99 {dimension_numbers = #tpu.dot_dimension_numbers<[1], [0], [0], [1], [0, 0, 1, 1], [], []>} : vector<16x16xf32>, vector<16x16xf32>, vector<16x16xf32> -> vector<16x16xf32>
    %cst_100 = arith.constant 2.500000e-01 : f32
    %317 = vector.broadcast %cst_100 : f32 to vector<16x16xf32>
    %318 = arith.mulf %316, %317 : vector<16x16xf32>
    %319 = arith.addf %318, %276 : vector<16x16xf32>
    %cst_101 = arith.constant dense<0xFF800000> : vector<16xf32>
    %320 = vector.multi_reduction <maximumf>, %319, %cst_101 [1] : vector<16x16xf32> to vector<16xf32>
    %321 = vector.shape_cast %320 : vector<16xf32> to vector<16x1xf32>
    %322 = vector.broadcast %321 : vector<16x1xf32> to vector<16x16xf32>
    %323 = arith.subf %319, %322 : vector<16x16xf32>
    %324 = math.exp %323 : vector<16x16xf32>
    %cst_102 = arith.constant dense<0.000000e+00> : vector<16xf32>
    %325 = vector.multi_reduction <add>, %324, %cst_102 [1] : vector<16x16xf32> to vector<16xf32>
    %326 = vector.shape_cast %325 : vector<16xf32> to vector<16x1xf32>
    %327 = vector.broadcast %326 : vector<16x1xf32> to vector<16x16xf32>
    %328 = arith.divf %324, %327 : vector<16x16xf32>
    %cst_103 = arith.constant dense<0.000000e+00> : vector<16x16xf32>
    %329 = tpu.matmul %328, %315, %cst_103 {dimension_numbers = #tpu.dot_dimension_numbers<[1], [0], [0], [1], [0, 0, 1, 1], [], []>} : vector<16x16xf32>, vector<16x16xf32>, vector<16x16xf32> -> vector<16x16xf32>
    %c0_104 = arith.constant 0 : index
    %c32 = arith.constant 32 : index
    %330 = vector.load %arg11[%c0_104, %c32] : memref<16x64xf32, #tpu.memory_space<vmem>>, vector<16x16xf32>
    tpu.vector_store %arg11[%c0_104, %c32], %329 {strides = array<i32>} : memref<16x64xf32, #tpu.memory_space<vmem>>, vector<16x16xf32>,
    %331 = vector.extract_strided_slice %272 {offsets = [0, 48], sizes = [16, 16], strides = [1, 1]} : vector<16x64xf32> to vector<16x16xf32>
    %332 = vector.extract_strided_slice %275 {offsets = [16, 0], sizes = [16, 16], strides = [1, 1]} : vector<32x16xf32> to vector<16x16xf32>
    %333 = vector.extract_strided_slice %274 {offsets = [0, 16], sizes = [16, 16], strides = [1, 1]} : vector<16x32xf32> to vector<16x16xf32>
    %cst_105 = arith.constant dense<0.000000e+00> : vector<16x16xf32>
    %334 = tpu.matmul %331, %332, %cst_105 {dimension_numbers = #tpu.dot_dimension_numbers<[1], [0], [0], [1], [0, 0, 1, 1], [], []>} : vector<16x16xf32>, vector<16x16xf32>, vector<16x16xf32> -> vector<16x16xf32>
    %cst_106 = arith.constant 2.500000e-01 : f32
    %335 = vector.broadcast %cst_106 : f32 to vector<16x16xf32>
    %336 = arith.mulf %334, %335 : vector<16x16xf32>
    %337 = arith.addf %336, %276 : vector<16x16xf32>
    %cst_107 = arith.constant dense<0xFF800000> : vector<16xf32>
    %338 = vector.multi_reduction <maximumf>, %337, %cst_107 [1] : vector<16x16xf32> to vector<16xf32>
    %339 = vector.shape_cast %338 : vector<16xf32> to vector<16x1xf32>
    %340 = vector.broadcast %339 : vector<16x1xf32> to vector<16x16xf32>
    %341 = arith.subf %337, %340 : vector<16x16xf32>
    %342 = math.exp %341 : vector<16x16xf32>
    %cst_108 = arith.constant dense<0.000000e+00> : vector<16xf32>
    %343 = vector.multi_reduction <add>, %342, %cst_108 [1] : vector<16x16xf32> to vector<16xf32>
    %344 = vector.shape_cast %343 : vector<16xf32> to vector<16x1xf32>
    %345 = vector.broadcast %344 : vector<16x1xf32> to vector<16x16xf32>
    %346 = arith.divf %342, %345 : vector<16x16xf32>
    %cst_109 = arith.constant dense<0.000000e+00> : vector<16x16xf32>
    %347 = tpu.matmul %346, %333, %cst_109 {dimension_numbers = #tpu.dot_dimension_numbers<[1], [0], [0], [1], [0, 0, 1, 1], [], []>} : vector<16x16xf32>, vector<16x16xf32>, vector<16x16xf32> -> vector<16x16xf32>
    %c0_110 = arith.constant 0 : index
    %c48 = arith.constant 48 : index
    %348 = vector.load %arg11[%c0_110, %c48] : memref<16x64xf32, #tpu.memory_space<vmem>>, vector<16x16xf32>
    tpu.vector_store %arg11[%c0_110, %c48], %347 {strides = array<i32>} : memref<16x64xf32, #tpu.memory_space<vmem>>, vector<16x16xf32>,
    %c0_111 = arith.constant 0 : index
    %c0_112 = arith.constant 0 : index
    %349 = vector.load %arg11[%c0_111, %c0_112] : memref<16x64xf32, #tpu.memory_space<vmem>>, vector<16x64xf32>
    %c15_113 = arith.constant 15 : index
    %c0_114 = arith.constant 0 : index
    %350 = vector.load %arg5[%c15_113, %c0_114] : memref<17x64xf32, #tpu.memory_space<vmem>>, vector<1x64xf32>
    %351 = arith.mulf %266, %266 : vector<16x64xf32>
    %cst_115 = arith.constant dense<0.000000e+00> : vector<16xf32>
    %352 = vector.multi_reduction <add>, %351, %cst_115 [1] : vector<16x64xf32> to vector<16xf32>
    %353 = vector.shape_cast %352 : vector<16xf32> to vector<16x1xf32>
    %cst_116 = arith.constant 6.400000e+01 : f32
    %354 = vector.broadcast %cst_116 : f32 to vector<16x1xf32>
    %355 = arith.divf %353, %354 : vector<16x1xf32>
    %cst_117 = arith.constant 9.99999997E-7 : f32
    %356 = vector.broadcast %cst_117 : f32 to vector<16x1xf32>
    %357 = arith.addf %355, %356 : vector<16x1xf32>
    %358 = math.rsqrt %357 : vector<16x1xf32>
    %359 = vector.broadcast %358 : vector<16x1xf32> to vector<16x64xf32>
    %360 = arith.mulf %266, %359 : vector<16x64xf32>
    %361 = vector.broadcast %350 : vector<1x64xf32> to vector<16x64xf32>
    %362 = arith.mulf %360, %361 : vector<16x64xf32>
    %c16_118 = arith.constant 16 : index
    %c0_119 = arith.constant 0 : index
    %363 = vector.load %arg5[%c16_118, %c0_119] : memref<17x64xf32, #tpu.memory_space<vmem>>, vector<1x64xf32>
    %364 = arith.mulf %349, %349 : vector<16x64xf32>
    %cst_120 = arith.constant dense<0.000000e+00> : vector<16xf32>
    %365 = vector.multi_reduction <add>, %364, %cst_120 [1] : vector<16x64xf32> to vector<16xf32>
    %366 = vector.shape_cast %365 : vector<16xf32> to vector<16x1xf32>
    %cst_121 = arith.constant 6.400000e+01 : f32
    %367 = vector.broadcast %cst_121 : f32 to vector<16x1xf32>
    %368 = arith.divf %366, %367 : vector<16x1xf32>
    %cst_122 = arith.constant 9.99999997E-7 : f32
    %369 = vector.broadcast %cst_122 : f32 to vector<16x1xf32>
    %370 = arith.addf %368, %369 : vector<16x1xf32>
    %371 = math.rsqrt %370 : vector<16x1xf32>
    %372 = vector.broadcast %371 : vector<16x1xf32> to vector<16x64xf32>
    %373 = arith.mulf %349, %372 : vector<16x64xf32>
    %374 = vector.broadcast %363 : vector<1x64xf32> to vector<16x64xf32>
    %375 = arith.mulf %373, %374 : vector<16x64xf32>
    %376 = arith.addf %362, %375 : vector<16x64xf32>
    %cst_123 = arith.constant 5.000000e-01 : f32
    %377 = vector.broadcast %cst_123 : f32 to vector<16x64xf32>
    %378 = arith.mulf %377, %376 : vector<16x64xf32>
    %c0_124 = arith.constant 0 : index
    %c0_125 = arith.constant 0 : index
    %379 = vector.load %arg8[%c0_124, %c0_125] : memref<64x64xf32, #tpu.memory_space<vmem>>, vector<64x64xf32>
    %380 = vector.extract_strided_slice %379 {offsets = [0, 0], sizes = [64, 32], strides = [1, 1]} : vector<64x64xf32> to vector<64x32xf32>
    %cst_126 = arith.constant dense<0.000000e+00> : vector<16x32xf32>
    %381 = tpu.matmul %378, %380, %cst_126 {dimension_numbers = #tpu.dot_dimension_numbers<[1], [0], [0], [1], [0, 0, 1, 1], [], []>} : vector<16x64xf32>, vector<64x32xf32>, vector<16x32xf32> -> vector<16x32xf32>
    %382 = arith.addf %0, %381 : vector<16x32xf32>
    %c1_127 = arith.constant 1 : index
    %c0_128 = arith.constant 0 : index
    %383 = vector.load %arg2[%c1_127, %c0_128] : memref<2x32xf32, #tpu.memory_space<vmem>>, vector<1x32xf32>
    %384 = arith.mulf %382, %382 : vector<16x32xf32>
    %cst_129 = arith.constant dense<0.000000e+00> : vector<16xf32>
    %385 = vector.multi_reduction <add>, %384, %cst_129 [1] : vector<16x32xf32> to vector<16xf32>
    %386 = vector.shape_cast %385 : vector<16xf32> to vector<16x1xf32>
    %cst_130 = arith.constant 3.200000e+01 : f32
    %387 = vector.broadcast %cst_130 : f32 to vector<16x1xf32>
    %388 = arith.divf %386, %387 : vector<16x1xf32>
    %cst_131 = arith.constant 9.99999997E-7 : f32
    %389 = vector.broadcast %cst_131 : f32 to vector<16x1xf32>
    %390 = arith.addf %388, %389 : vector<16x1xf32>
    %391 = math.rsqrt %390 : vector<16x1xf32>
    %392 = vector.broadcast %391 : vector<16x1xf32> to vector<16x32xf32>
    %393 = arith.mulf %382, %392 : vector<16x32xf32>
    %394 = vector.broadcast %383 : vector<1x32xf32> to vector<16x32xf32>
    %395 = arith.mulf %393, %394 : vector<16x32xf32>
    %c0_132 = arith.constant 0 : index
    %c0_133 = arith.constant 0 : index
    %396 = vector.load %arg9[%c0_132, %c0_133] : memref<32x128xf32, #tpu.memory_space<vmem>>, vector<32x128xf32>
    %cst_134 = arith.constant dense<0.000000e+00> : vector<16x128xf32>
    %397 = tpu.matmul %395, %396, %cst_134 {dimension_numbers = #tpu.dot_dimension_numbers<[1], [0], [0], [1], [0, 0, 1, 1], [], []>} : vector<16x32xf32>, vector<32x128xf32>, vector<16x128xf32> -> vector<16x128xf32>
    %398 = vector.extract_strided_slice %397 {offsets = [0, 0], sizes = [16, 64], strides = [1, 1]} : vector<16x128xf32> to vector<16x64xf32>
    %399 = vector.extract_strided_slice %397 {offsets = [0, 64], sizes = [16, 64], strides = [1, 1]} : vector<16x128xf32> to vector<16x64xf32>
    %400 = arith.negf %398 : vector<16x64xf32>
    %401 = math.exp %400 : vector<16x64xf32>
    %cst_135 = arith.constant 1.000000e+00 : f32
    %402 = vector.broadcast %cst_135 : f32 to vector<16x64xf32>
    %403 = arith.addf %402, %401 : vector<16x64xf32>
    %404 = arith.divf %402, %403 : vector<16x64xf32>
    %405 = arith.mulf %398, %404 : vector<16x64xf32>
    %406 = arith.mulf %405, %399 : vector<16x64xf32>
    %407 = vector.extract_strided_slice %379 {offsets = [0, 32], sizes = [64, 32], strides = [1, 1]} : vector<64x64xf32> to vector<64x32xf32>
    %cst_136 = arith.constant dense<0.000000e+00> : vector<16x32xf32>
    %408 = tpu.matmul %406, %407, %cst_136 {dimension_numbers = #tpu.dot_dimension_numbers<[1], [0], [0], [1], [0, 0, 1, 1], [], []>} : vector<16x64xf32>, vector<64x32xf32>, vector<16x32xf32> -> vector<16x32xf32>
    %409 = arith.addf %382, %408 : vector<16x32xf32>
    %c0_137 = arith.constant 0 : index
    %c0_138 = arith.constant 0 : index
    %410 = vector.load %arg10[%c0_137, %c0_138] : memref<16x32xf32, #tpu.memory_space<vmem>>, vector<16x32xf32>
    tpu.vector_store %arg10[%c0_137, %c0_138], %409 {strides = array<i32>} : memref<16x32xf32, #tpu.memory_space<vmem>>, vector<16x32xf32>,
    return
  }
  func.func @transform_0(%arg0: i32) -> (i32, i32) {
    %c0_i32 = arith.constant 0 : i32
    %c0_i32_0 = arith.constant 0 : i32
    %c0_i32_1 = arith.constant 0 : i32
    return %c0_i32, %c0_i32_0 : i32, i32
  }
  func.func @transform_1(%arg0: i32) -> (i32, i32) {
    %c0_i32 = arith.constant 0 : i32
    %c0_i32_0 = arith.constant 0 : i32
    %c0_i32_1 = arith.constant 0 : i32
    return %c0_i32, %c0_i32_0 : i32, i32
  }
  func.func @transform_2(%arg0: i32) -> (i32, i32) {
    %c0_i32 = arith.constant 0 : i32
    %c0_i32_0 = arith.constant 0 : i32
    %c0_i32_1 = arith.constant 0 : i32
    return %c0_i32, %c0_i32_0 : i32, i32
  }
  func.func @transform_3(%arg0: i32) -> (i32, i32) {
    %c0_i32 = arith.constant 0 : i32
    %c0_i32_0 = arith.constant 0 : i32
    %c0_i32_1 = arith.constant 0 : i32
    return %c0_i32, %c0_i32_0 : i32, i32
  }
  func.func @transform_4(%arg0: i32) -> (i32, i32) {
    %c0_i32 = arith.constant 0 : i32
    %c0_i32_0 = arith.constant 0 : i32
    %c0_i32_1 = arith.constant 0 : i32
    return %c0_i32, %c0_i32_0 : i32, i32
  }
  func.func @transform_5(%arg0: i32) -> (i32, i32) {
    %c0_i32 = arith.constant 0 : i32
    %c0_i32_0 = arith.constant 0 : i32
    %c0_i32_1 = arith.constant 0 : i32
    return %c0_i32, %c0_i32_0 : i32, i32
  }
  func.func @transform_6(%arg0: i32) -> (i32, i32) {
    %c0_i32 = arith.constant 0 : i32
    %c0_i32_0 = arith.constant 0 : i32
    %c0_i32_1 = arith.constant 0 : i32
    return %c0_i32, %c0_i32_0 : i32, i32
  }
  func.func @transform_7(%arg0: i32) -> (i32, i32) {
    %c0_i32 = arith.constant 0 : i32
    %c0_i32_0 = arith.constant 0 : i32
    %c0_i32_1 = arith.constant 0 : i32
    return %c0_i32, %c0_i32_0 : i32, i32
  }
  func.func @transform_8(%arg0: i32) -> (i32, i32) {
    %c0_i32 = arith.constant 0 : i32
    %c0_i32_0 = arith.constant 0 : i32
    %c0_i32_1 = arith.constant 0 : i32
    return %c0_i32, %c0_i32_0 : i32, i32
  }
  func.func @transform_9(%arg0: i32) -> (i32, i32) {
    %c0_i32 = arith.constant 0 : i32
    %c0_i32_0 = arith.constant 0 : i32
    %c0_i32_1 = arith.constant 0 : i32
    return %c0_i32, %c0_i32_0 : i32, i32
  }
}

</mosaic_0001>

<llo_original>
// kernel: _lambda_.1
$region0: #{_lambda_.1}
  #allocation0 [shape = 'u32[]', space=smem, size = 0x4, offset = 0x4, fixed_abs, tag = 'smem constant byte address 0x4 - core index']
  #allocation1 [shape = 'u32[144,128]{1,0:T(1,128)}', space=vmem, size = 0x12000, scoped, tag = 'internal scratch']
  #allocation2 [shape = 'f32[16,64]{1,0:T(8,128)}', space=vmem, size = 0x2000, scoped, tag = 'scratch operand']
  #allocation3 [shape = 'f32[16,8,64]{2,1,0:T(8,128)}', space=vmem, size = 0x10000, scoped, tag = 'scratch operand']
  %s0 = inlined_call_operand.hbm [shape: f32[16,32], index: 0, kind: input, shape index: {}]
  %s1 = inlined_call_operand.vmem [shape: f32[2,32], index: 1, kind: input, shape index: {}]
  %s2 = inlined_call_operand.hbm [shape: f32[32,384], index: 2, kind: input, shape index: {}]
  %s3 = inlined_call_operand.hbm [shape: f32[64,80], index: 3, kind: input, shape index: {}]
  %s4 = inlined_call_operand.hbm [shape: f32[17,64], index: 4, kind: input, shape index: {}]
  %s5 = inlined_call_operand.hbm [shape: f32[32,128], index: 5, kind: input, shape index: {}]
  %s6 = inlined_call_operand.hbm [shape: f32[16,16], index: 6, kind: input, shape index: {}]
  %s7 = inlined_call_operand.hbm [shape: f32[64,64], index: 7, kind: input, shape index: {}]
  %s8 = inlined_call_operand.hbm [shape: f32[32,128], index: 8, kind: input, shape index: {}]
  %s9 = inlined_call_operand.hbm [shape: f32[16,32], index: 9, kind: output, shape index: {}]
  %s10 = sld [smem:[#allocation0]]
  $region78: #{_lambda_.1} parent=0
    _
  %s12 = ssub.s32 1, %s10
  %s13 = scalar_select 0, %s12, %s10
  $region1: #{_lambda_.1} parent=0
    #allocation4 [shape = 'u8[8192]{0}', space=vmem, size = 0x2000, scoped, tag = 'input window, operand 0, single buffered']
    #allocation5 [shape = 's32[1]{0}', space=sflag, size = 0x4, scoped, tag = 'scoped memory for _lambda_.1']
    #allocation6 [shape = 's32[1]{0}', space=sflag, size = 0x4, scoped, tag = 'scoped memory for _lambda_.1']
    #allocation7 [shape = 'u8[49152]{0}', space=vmem, size = 0xc000, scoped, tag = 'input window, operand 2, single buffered']
    #allocation8 [shape = 's32[1]{0}', space=sflag, size = 0x4, scoped, tag = 'scoped memory for _lambda_.1']
    #allocation9 [shape = 'u8[32768]{0}', space=vmem, size = 0x8000, scoped, tag = 'input window, operand 3, single buffered']
    #allocation10 [shape = 'u8[12288]{0}', space=vmem, size = 0x3000, scoped, tag = 'input window, operand 4, single buffered']
    #allocation11 [shape = 's32[1]{0}', space=sflag, size = 0x4, scoped, tag = 'scoped memory for _lambda_.1']
    #allocation12 [shape = 'u8[16384]{0}', space=vmem, size = 0x4000, scoped, tag = 'input window, operand 5, single buffered']
    #allocation13 [shape = 'u8[8192]{0}', space=vmem, size = 0x2000, scoped, tag = 'input window, operand 6, single buffered']
    #allocation14 [shape = 's32[1]{0}', space=sflag, size = 0x4, scoped, tag = 'scoped memory for _lambda_.1']
    #allocation15 [shape = 'u8[32768]{0}', space=vmem, size = 0x8000, scoped, tag = 'input window, operand 7, single buffered']
    #allocation16 [shape = 'u8[16384]{0}', space=vmem, size = 0x4000, scoped, tag = 'input window, operand 8, single buffered']
    #allocation17 [shape = 's32[1]{0}', space=sflag, size = 0x4, scoped, tag = 'scoped memory for _lambda_.1']
    #allocation18 [shape = 'u8[8192]{0}', space=vmem, size = 0x2000, scoped, tag = 'output window, operand 0, single buffered']
    %14 = vsyncpa [#allocation5], 0
    %15 = vsyncpa [#allocation8], 0
    %16 = vsyncpa [#allocation11], 0
    %17 = vsyncpa [#allocation14], 0
    %18 = vsyncpa [#allocation17], 0
    %19 = vsyncpa [#allocation6], 0
    // Predicated region
    $region2: #{_lambda_.1} parent=1 // pred_check
      _
    $region3: #{_lambda_.1} parent=1 // pred_check_branch
      %21 = sbr.rel (0) target = $region5
    $region4: #{_lambda_.1} parent=1 // pred_region
      %s23 = ssub.s32 256, 256
      %24 = vsyncadd [#allocation5], %s23
      %s25 = sshll.u32 [#allocation4], 4
      %s26 = int_to_ptr.vmem [resolvable:$true] %s25
      %31 = dma.hbm_to_vmem [thread:$0]  %s0, 256, %s26, [#allocation5], 128, 128, 8
    $region5: #{_lambda_.1} parent=1 // pred_fallthru
      _
    // Predicated region
    $region6: #{_lambda_.1} parent=1 // pred_check
      _
    $region7: #{_lambda_.1} parent=1 // pred_check_branch
      %33 = sbr.rel (0) target = $region9
    $region8: #{_lambda_.1} parent=1 // pred_region
      _
    $region9: #{_lambda_.1} parent=1 // pred_fallthru
      _
    // Predicated region
    $region10: #{_lambda_.1} parent=1 // pred_check
      _
    $region11: #{_lambda_.1} parent=1 // pred_check_branch
      %35 = sbr.rel (0) target = $region13
    $region12: #{_lambda_.1} parent=1 // pred_region
      %s37 = ssub.s32 1536, 1536
      %38 = vsyncadd [#allocation8], %s37
      %s39 = sshll.u32 [#allocation7], 4
      %s40 = int_to_ptr.vmem [resolvable:$true] %s39
      %45 = dma.hbm_to_vmem [thread:$0]  %s2, 1536, %s40, [#allocation8], 384, 384, 24
    $region13: #{_lambda_.1} parent=1 // pred_fallthru
      _
    // Predicated region
    $region14: #{_lambda_.1} parent=1 // pred_check
      _
    $region15: #{_lambda_.1} parent=1 // pred_check_branch
      %47 = sbr.rel (0) target = $region17
    $region16: #{_lambda_.1} parent=1 // pred_region
      %s49 = ssub.s32 1024, 1024
      %50 = vsyncadd [#allocation8], %s49
      %s51 = sshll.u32 [#allocation9], 4
      %s52 = int_to_ptr.vmem [resolvable:$true] %s51
      %57 = dma.hbm_to_vmem [thread:$0]  %s3, 1024, %s52, [#allocation8], 128, 128, 8
    $region17: #{_lambda_.1} parent=1 // pred_fallthru
      _
    // Predicated region
    $region18: #{_lambda_.1} parent=1 // pred_check
      _
    $region19: #{_lambda_.1} parent=1 // pred_check_branch
      %59 = sbr.rel (0) target = $region21
    $region20: #{_lambda_.1} parent=1 // pred_region
      %s61 = ssub.s32 384, 384
      %62 = vsyncadd [#allocation11], %s61
      %s63 = sshll.u32 [#allocation10], 4
      %s64 = int_to_ptr.vmem [resolvable:$true] %s63
      %69 = dma.hbm_to_vmem [thread:$0]  %s4, 384, %s64, [#allocation11], 128, 128, 8
    $region21: #{_lambda_.1} parent=1 // pred_fallthru
      _
    // Predicated region
    $region22: #{_lambda_.1} parent=1 // pred_check
      _
    $region23: #{_lambda_.1} parent=1 // pred_check_branch
      %71 = sbr.rel (0) target = $region25
    $region24: #{_lambda_.1} parent=1 // pred_region
      %s73 = ssub.s32 512, 512
      %74 = vsyncadd [#allocation11], %s73
      %s75 = sshll.u32 [#allocation12], 4
      %s76 = int_to_ptr.vmem [resolvable:$true] %s75
      %81 = dma.hbm_to_vmem [thread:$0]  %s5, 512, %s76, [#allocation11], 128, 128, 8
    $region25: #{_lambda_.1} parent=1 // pred_fallthru
      _
    // Predicated region
    $region26: #{_lambda_.1} parent=1 // pred_check
      _
    $region27: #{_lambda_.1} parent=1 // pred_check_branch
      %83 = sbr.rel (0) target = $region29
    $region28: #{_lambda_.1} parent=1 // pred_region
      %s85 = ssub.s32 256, 256
      %86 = vsyncadd [#allocation14], %s85
      %s87 = sshll.u32 [#allocation13], 4
      %s88 = int_to_ptr.vmem [resolvable:$true] %s87
      %93 = dma.hbm_to_vmem [thread:$0]  %s6, 256, %s88, [#allocation14], 128, 128, 8
    $region29: #{_lambda_.1} parent=1 // pred_fallthru
      _
    // Predicated region
    $region30: #{_lambda_.1} parent=1 // pred_check
      _
    $region31: #{_lambda_.1} parent=1 // pred_check_branch
      %95 = sbr.rel (0) target = $region33
    $region32: #{_lambda_.1} parent=1 // pred_region
      %s97 = ssub.s32 1024, 1024
      %98 = vsyncadd [#allocation14], %s97
      %s99 = sshll.u32 [#allocation15], 4
      %s100 = int_to_ptr.vmem [resolvable:$true] %s99
      %105 = dma.hbm_to_vmem [thread:$0]  %s7, 1024, %s100, [#allocation14], 128, 128, 8
    $region33: #{_lambda_.1} parent=1 // pred_fallthru
      _
    // Predicated region
    $region34: #{_lambda_.1} parent=1 // pred_check
      _
    $region35: #{_lambda_.1} parent=1 // pred_check_branch
      %107 = sbr.rel (0) target = $region37
    $region36: #{_lambda_.1} parent=1 // pred_region
      %s109 = ssub.s32 512, 512
      %110 = vsyncadd [#allocation17], %s109
      %s111 = sshll.u32 [#allocation16], 4
      %s112 = int_to_ptr.vmem [resolvable:$true] %s111
      %117 = dma.hbm_to_vmem [thread:$0]  %s8, 512, %s112, [#allocation17], 128, 128, 8
    $region37: #{_lambda_.1} parent=1 // pred_fallthru
      _
    // Predicated region
    $region38: #{_lambda_.1} parent=1 // pred_check
      _
    $region39: #{_lambda_.1} parent=1 // pred_check_branch
      %119 = sbr.rel (0) target = $region41
    $region40: #{_lambda_.1} parent=1 // pred_region
      %120 = dma.done [#allocation5], 256
    $region41: #{_lambda_.1} parent=1 // pred_fallthru
      _
    // Predicated region
    $region42: #{_lambda_.1} parent=1 // pred_check
      _
    $region43: #{_lambda_.1} parent=1 // pred_check_branch
      %122 = sbr.rel (0) target = $region45
    $region44: #{_lambda_.1} parent=1 // pred_region
      %123 = dma.done [#allocation8], 1536
    $region45: #{_lambda_.1} parent=1 // pred_fallthru
      _
    // Predicated region
    $region46: #{_lambda_.1} parent=1 // pred_check
      _
    $region47: #{_lambda_.1} parent=1 // pred_check_branch
      %125 = sbr.rel (0) target = $region49
    $region48: #{_lambda_.1} parent=1 // pred_region
      %126 = dma.done [#allocation8], 1024
    $region49: #{_lambda_.1} parent=1 // pred_fallthru
      _
    // Predicated region
    $region50: #{_lambda_.1} parent=1 // pred_check
      _
    $region51: #{_lambda_.1} parent=1 // pred_check_branch
      %128 = sbr.rel (0) target = $region53
    $region52: #{_lambda_.1} parent=1 // pred_region
      %129 = dma.done [#allocation11], 384
    $region53: #{_lambda_.1} parent=1 // pred_fallthru
      _
    // Predicated region
    $region54: #{_lambda_.1} parent=1 // pred_check
      _
    $region55: #{_lambda_.1} parent=1 // pred_check_branch
      %131 = sbr.rel (0) target = $region57
    $region56: #{_lambda_.1} parent=1 // pred_region
      %132 = dma.done [#allocation11], 512
    $region57: #{_lambda_.1} parent=1 // pred_fallthru
      _
    // Predicated region
    $region58: #{_lambda_.1} parent=1 // pred_check
      _
    $region59: #{_lambda_.1} parent=1 // pred_check_branch
      %134 = sbr.rel (0) target = $region61
    $region60: #{_lambda_.1} parent=1 // pred_region
      %135 = dma.done [#allocation14], 256
    $region61: #{_lambda_.1} parent=1 // pred_fallthru
      _
    // Predicated region
    $region62: #{_lambda_.1} parent=1 // pred_check
      _
    $region63: #{_lambda_.1} parent=1 // pred_check_branch
      %137 = sbr.rel (0) target = $region65
    $region64: #{_lambda_.1} parent=1 // pred_region
      %138 = dma.done [#allocation14], 1024
    $region65: #{_lambda_.1} parent=1 // pred_fallthru
      _
    // Predicated region
    $region66: #{_lambda_.1} parent=1 // pred_check
      _
    $region67: #{_lambda_.1} parent=1 // pred_check_branch
      %140 = sbr.rel (0) target = $region69
    $region68: #{_lambda_.1} parent=1 // pred_region
      %141 = dma.done [#allocation17], 512
    $region69: #{_lambda_.1} parent=1 // pred_fallthru
      _
    %v142 = vld [vmem:[#allocation4] sm:$0xff]
    %v143 = vld [vmem:[#allocation4 + $0x8] sm:$0xff]
    %v144 = vld [vmem:[%s1] sm:$0x1]
    %v145 = vmul.f32 %v142, %v142
    %v146 = vmul.f32 %v143, %v143
    %vm147 = vcmask 261120
    %v148 = vsel %vm147, %v145, 0.0
    %149 = vadd.xlane.f32.xlu0 %v148
    %v150 = vpop.xlane.xlu0 %149
    %v151 = vsel %vm147, %v146, 0.0
    %152 = vadd.xlane.f32.xlu0 %v151
    %v153 = vpop.xlane.xlu0 %152
    %v154 = vrcp.pop 32.0
    %v155 = vmul.f32 %v150, %v154
    %v156 = vmul.f32 %v153, %v154
    %v157 = vadd.f32 %v155, 1e-06
    %v158 = vadd.f32 %v156, 1e-06
    %v159 = vrsqrt.pop %v157
    %v160 = vrsqrt.pop %v158
    %v161 = vmul.f32 %v142, %v159
    %v162 = vmul.f32 %v143, %v160
    %v163 = vlaneseq
    %v164 = vshrl.u32 %v163, 7
    %v165 = vsub.s32 0, %v164
    %v166 = vrot.slane %v144, %v165
    %v167 = vmul.f32 %v161, %v166
    %v168 = vmul.f32 %v162, %v166
    %v169 = vld [vmem:[#allocation7] sm:$0xff]
    %v170 = vld [vmem:[#allocation7 + $0x8] sm:$0xff]
    %v171 = vld [vmem:[#allocation7 + $0x10] sm:$0xff]
    %v172 = vld [vmem:[#allocation7 + $0x18] sm:$0xff]
    %v173 = vld [vmem:[#allocation7 + $0x20] sm:$0xff]
    %v174 = vld [vmem:[#allocation7 + $0x28] sm:$0xff]
    %v175 = vld [vmem:[#allocation7 + $0x30] sm:$0xff]
    %v176 = vld [vmem:[#allocation7 + $0x38] sm:$0xff]
    %v177 = vld [vmem:[#allocation7 + $0x40] sm:$0xff]
    %v178 = vld [vmem:[#allocation7 + $0x48] sm:$0xff]
    %v179 = vld [vmem:[#allocation7 + $0x50] sm:$0xff]
    %v180 = vld [vmem:[#allocation7 + $0x58] sm:$0xff]
    %v182 = vsel %vm147, %v167, 0
    %v185 = vsel %vm147, %v168, 0
    %187 = vmatprep.subr.mxu0 0.0
    %188 = vmatpush1.msra.mxu0 0.0
    %189 = vmatprep.subr.mxu0 0.0
    %190 = vmatpush1.msra.mxu0 0.0
    %191 = vmatprep.subr.mxu0 0.0
    %192 = vmatpush1.msra.mxu0 0.0
    %193 = vmatprep.subr.mxu0 0.0
    %194 = vmatpush1.msra.mxu0 0.0
    %195 = vmatprep.subr.mxu0 0.0
    %196 = vmatpush1.msra.mxu0 0.0
    %197 = vmatprep.subr.mxu0 0.0
    %198 = vmatpush1.msra.mxu0 0.0
    %199 = vmatprep.subr.mxu0 0.0
    %200 = vmatpush1.msra.mxu0 0.0
    %201 = vmatprep.subr.mxu0 0.0
    %202 = vmatpush1.msra.mxu0 0.0
    %203 = vmatprep.subr.mxu0 0.0
    %204 = vmatpush1.msra.mxu0 0.0
    %205 = vmatprep.subr.mxu0 0.0
    %206 = vmatpush1.msra.mxu0 0.0
    %207 = vmatprep.subr.mxu0 0.0
    %208 = vmatpush1.msra.mxu0 0.0
    %209 = vmatprep.subr.mxu0 0.0
    %210 = vmatpush1.msra.mxu0 0.0
    %211 = vmatprep.subr.mxu0 %v179
    %212 = vmatpush1.msra.mxu0 %v178
    %213 = vmatprep.subr.mxu0 %v176
    %214 = vmatpush1.msra.mxu0 %v175
    %215 = vmatprep.subr.mxu0 %v173
    %216 = vmatpush1.msra.mxu0 %v172
    %217 = vmatprep.subr.mxu0 %v170
    %218 = vmatpush1.msra.mxu0 %v169
    %219 = vmatprep.subr.mxu0 0.0
    %220 = vmatpush2.msra.mxu0 0.0
    %221 = vmatprep.subr.mxu0 0.0
    %222 = vmatpush2.msra.mxu0 0.0
    %223 = vmatprep.subr.mxu0 0.0
    %224 = vmatpush2.msra.mxu0 0.0
    %225 = vmatprep.subr.mxu0 0.0
    %226 = vmatpush2.msra.mxu0 0.0
    %227 = vmatprep.subr.mxu0 0.0
    %228 = vmatpush2.msra.mxu0 0.0
    %229 = vmatprep.subr.mxu0 0.0
    %230 = vmatpush2.msra.mxu0 0.0
    %231 = vmatprep.subr.mxu0 0.0
    %232 = vmatpush2.msra.mxu0 0.0
    %233 = vmatprep.subr.mxu0 0.0
    %234 = vmatpush2.msra.mxu0 0.0
    %235 = vmatprep.subr.mxu0 0.0
    %236 = vmatpush2.msra.mxu0 0.0
    %237 = vmatprep.subr.mxu0 0.0
    %238 = vmatpush2.msra.mxu0 0.0
    %239 = vmatprep.subr.mxu0 0.0
    %240 = vmatpush2.msra.mxu0 0.0
    %241 = vmatprep.subr.mxu0 0.0
    %242 = vmatpush2.msra.mxu0 0.0
    %243 = vmatprep.subr.mxu0 0.0
    %244 = vmatpush2.msra.mxu0 0.0
    %245 = vmatprep.subr.mxu0 0.0
    %246 = vmatpush2.msra.mxu0 0.0
    %247 = vmatprep.subr.mxu0 0.0
    %248 = vmatpush2.msra.mxu0 0.0
    %249 = vmatprep.subr.mxu0 0.0
    %250 = vmatpush2.msra.mxu0 0.0
    %251 = vmatprep.mubr.f32.mxu0 0.0
    %252 = vmatmul.mubr.f32.gmra.mxu0 %v182
    %v253 = vpop.f32.mrf.mxu0
    %v254 = vadd.f32 0.0, %v253
    %v255 = vpop.f32.mrf.mxu0
    %v256 = vadd.f32 0.0, %v255
    %257 = vmatprep.mubr.f32.mxu0 0.0
    %258 = vmatmul.mubr.f32.gmra.mxu0 %v185
    %v259 = vpop.f32.mrf.mxu0
    %v260 = vadd.f32 0.0, %v259
    %v261 = vpop.f32.mrf.mxu0
    %v262 = vadd.f32 0.0, %v261
    %263 = vdwg.mxu0
    %264 = vmatprep.subr.mxu0 0.0
    %265 = vmatpush1.msra.mxu0 0.0
    %266 = vmatprep.subr.mxu0 0.0
    %267 = vmatpush1.msra.mxu0 0.0
    %268 = vmatprep.subr.mxu0 0.0
    %269 = vmatpush1.msra.mxu0 0.0
    %270 = vmatprep.subr.mxu0 0.0
    %271 = vmatpush1.msra.mxu0 0.0
    %272 = vmatprep.subr.mxu0 0.0
    %273 = vmatpush1.msra.mxu0 0.0
    %274 = vmatprep.subr.mxu0 0.0
    %275 = vmatpush1.msra.mxu0 0.0
    %276 = vmatprep.subr.mxu0 0.0
    %277 = vmatpush1.msra.mxu0 0.0
    %278 = vmatprep.subr.mxu0 0.0
    %279 = vmatpush1.msra.mxu0 0.0
    %280 = vmatprep.subr.mxu0 0.0
    %281 = vmatpush1.msra.mxu0 0.0
    %282 = vmatprep.subr.mxu0 0.0
    %283 = vmatpush1.msra.mxu0 0.0
    %284 = vmatprep.subr.mxu0 0.0
    %285 = vmatpush1.msra.mxu0 0.0
    %286 = vmatprep.subr.mxu0 0.0
    %287 = vmatpush1.msra.mxu0 0.0
    %288 = vmatprep.subr.mxu0 0.0
    %289 = vmatpush1.msra.mxu0 %v180
    %290 = vmatprep.subr.mxu0 0.0
    %291 = vmatpush1.msra.mxu0 %v177
    %292 = vmatprep.subr.mxu0 0.0
    %293 = vmatpush1.msra.mxu0 %v174
    %294 = vmatprep.subr.mxu0 0.0
    %295 = vmatpush1.msra.mxu0 %v171
    %296 = vmatprep.subr.mxu0 0.0
    %297 = vmatpush2.msra.mxu0 0.0
    %298 = vmatprep.subr.mxu0 0.0
    %299 = vmatpush2.msra.mxu0 0.0
    %300 = vmatprep.subr.mxu0 0.0
    %301 = vmatpush2.msra.mxu0 0.0
    %302 = vmatprep.subr.mxu0 0.0
    %303 = vmatpush2.msra.mxu0 0.0
    %304 = vmatprep.subr.mxu0 0.0
    %305 = vmatpush2.msra.mxu0 0.0
    %306 = vmatprep.subr.mxu0 0.0
    %307 = vmatpush2.msra.mxu0 0.0
    %308 = vmatprep.subr.mxu0 0.0
    %309 = vmatpush2.msra.mxu0 0.0
    %310 = vmatprep.subr.mxu0 0.0
    %311 = vmatpush2.msra.mxu0 0.0
    %312 = vmatprep.subr.mxu0 0.0
    %313 = vmatpush2.msra.mxu0 0.0
    %314 = vmatprep.subr.mxu0 0.0
    %315 = vmatpush2.msra.mxu0 0.0
    %316 = vmatprep.subr.mxu0 0.0
    %317 = vmatpush2.msra.mxu0 0.0
    %318 = vmatprep.subr.mxu0 0.0
    %319 = vmatpush2.msra.mxu0 0.0
    %320 = vmatprep.subr.mxu0 0.0
    %321 = vmatpush2.msra.mxu0 0.0
    %322 = vmatprep.subr.mxu0 0.0
    %323 = vmatpush2.msra.mxu0 0.0
    %324 = vmatprep.subr.mxu0 0.0
    %325 = vmatpush2.msra.mxu0 0.0
    %326 = vmatprep.subr.mxu0 0.0
    %327 = vmatpush2.msra.mxu0 0.0
    %328 = vmatprep.mubr.f32.mxu0 0.0
    %329 = vmatmul.mubr.f32.gmra.mxu0 %v182
    %v330 = vpop.f32.mrf.mxu0
    %v331 = vadd.f32 0.0, %v330
    %v332 = vpop.f32.mrf.mxu0
    %333 = vmatprep.mubr.f32.mxu0 0.0
    %334 = vmatmul.mubr.f32.gmra.mxu0 %v185
    %v335 = vpop.f32.mrf.mxu0
    %v336 = vadd.f32 0.0, %v335
    %v337 = vpop.f32.mrf.mxu0
    %338 = vdwg.mxu0
    %v339 = vlaneseq
    %v340 = vshrl.u32 %v339, 7
    %v341 = vadd.s32 %v340, 8
    %vm342 = vcmp.lt.s32.totalorder %v340, 0
    %v343 = vsub.s32 0, %v340
    %v344 = vsel %vm342, %v343, %v340
    %v345 = vshrl.u32 %v344, 3
    %v346 = vand.u32 %v344, 7
    %v347 = vsub.s32 0, %v346
    %v348 = vsel %vm342, %v347, %v346
    %vm349 = vcmp.lt.s32.totalorder %v341, 0
    %v350 = vsub.s32 0, %v341
    %v351 = vsel %vm349, %v350, %v341
    %v352 = vshrl.u32 %v351, 3
    %v353 = vand.u32 %v351, 7
    %v354 = vsub.s32 0, %v353
    %v355 = vsel %vm349, %v354, %v353
    %vm356 = vcmp.ne.s32.totalorder %v348, 0
    %vm357 = vcmp.ne.s32.totalorder %v355, 0
    %vm358 = vcmp.lt.s32.totalorder %v348, 0
    %vm359 = vcmp.lt.s32.totalorder %v355, 0
    %vm360 = vmand %vm358, %vm356
    %vm361 = vmand %vm359, %vm357
    %v362 = vadd.s32 %v348, 8
    %v363 = vadd.s32 %v355, 8
    %v364 = vsel %vm360, %v362, %v348
    %v365 = vsel %vm361, %v363, %v355
    %v366 = vld [vmem:[#allocation10 + $0x3] sm:$0x1]
    %v367 = vlaneseq
    %v368 = vshrl.u32 %v367, 7
    %v369 = vsub.s32 0, %v368
    %v370 = vrot.slane %v366, %v369
    %v371 = vmul.f32 %v254, %v370
    %v372 = vmul.f32 %v260, %v370
    %v373 = vrot.slane %v254, 5
    %v374 = vrot.slane %v260, 5
    %vm375 = vcmp.lt.s32.totalorder %v340, 3
    %v376 = vsel %vm375, %v373, %v374
    %v377 = vsel %vm375, %v374, %v373
    %vm378 = vcmp.ge.s32.totalorder %v364, 3
    %vm379 = vcmp.ge.s32.totalorder %v365, 3
    %v380 = vsel %vm378, %v377, 0.0
    %v381 = vsel %vm379, %v376, 0.0
    %v382 = vld [vmem:[#allocation10] sm:$0x1]
    %v383 = vlaneseq
    %v384 = vshrl.u32 %v383, 7
    %v385 = vsub.s32 0, %v384
    %v386 = vrot.slane %v382, %v385
    %v387 = vmul.f32 %v380, %v386
    %v388 = vmul.f32 %v381, %v386
    %v389 = vadd.f32 %v371, %v387
    %v390 = vadd.f32 %v372, %v388
    %v391 = vrot.slane %v254, 6
    %v392 = vrot.slane %v260, 6
    %vm393 = vcmp.lt.s32.totalorder %v340, 2
    %v394 = vsel %vm393, %v391, %v392
    %v395 = vsel %vm393, %v392, %v391
    %vm396 = vcmp.ge.s32.totalorder %v364, 2
    %vm397 = vcmp.ge.s32.totalorder %v365, 2
    %v398 = vsel %vm396, %v395, 0.0
    %v399 = vsel %vm397, %v394, 0.0
    %v400 = vld [vmem:[#allocation10 + $0x1] sm:$0x1]
    %v401 = vlaneseq
    %v402 = vshrl.u32 %v401, 7
    %v403 = vsub.s32 0, %v402
    %v404 = vrot.slane %v400, %v403
    %v405 = vmul.f32 %v398, %v404
    %v406 = vmul.f32 %v399, %v404
    %v407 = vadd.f32 %v389, %v405
    %v408 = vadd.f32 %v390, %v406
    %v409 = vrot.slane %v254, 7
    %v410 = vrot.slane %v260, 7
    %vm411 = vcmp.lt.s32.totalorder %v340, 1
    %v412 = vsel %vm411, %v409, %v410
    %v413 = vsel %vm411, %v410, %v409
    %vm414 = vcmp.ge.s32.totalorder %v364, 1
    %vm415 = vcmp.ge.s32.totalorder %v365, 1
    %v416 = vsel %vm414, %v413, 0.0
    %v417 = vsel %vm415, %v412, 0.0
    %v418 = vld [vmem:[#allocation10 + $0x2] sm:$0x1]
    %v419 = vlaneseq
    %v420 = vshrl.u32 %v419, 7
    %v421 = vsub.s32 0, %v420
    %v422 = vrot.slane %v418, %v421
    %v423 = vmul.f32 %v416, %v422
    %v424 = vmul.f32 %v417, %v422
    %v425 = vadd.f32 %v407, %v423
    %v426 = vadd.f32 %v408, %v424
    %v427 = vld [vmem:[#allocation10 + $0x4] sm:$0x1]
    %v428 = vlaneseq
    %v429 = vshrl.u32 %v428, 7
    %v430 = vsub.s32 0, %v429
    %v431 = vrot.slane %v427, %v430
    %v432 = vadd.f32 %v425, %v431
    %v433 = vadd.f32 %v426, %v431
    %v434 = vxor.u32 %v432, 2147483648
    %v435 = vxor.u32 %v433, 2147483648
    %v436 = vmul.f32 %v434, 1.442695
    %v437 = vpow.pop %v436
    %v438 = vmul.f32 %v435, 1.442695
    %v439 = vpow.pop %v438
    %v440 = vadd.f32 %v437, 1.0
    %v441 = vadd.f32 %v439, 1.0
    %v442 = vrcp.pop %v440
    %v443 = vmul.f32 1.0, %v442
    %v444 = vrcp.pop %v441
    %v445 = vmul.f32 1.0, %v444
    %v446 = vmul.f32 %v432, %v443
    %v447 = vmul.f32 %v433, %v445
    %v448 = vld [vmem:[#allocation9] sm:$0xff]
    %v449 = vld [vmem:[#allocation9 + $0x8] sm:$0xff]
    %v450 = vld [vmem:[#allocation9 + $0x10] sm:$0xff]
    %v451 = vld [vmem:[#allocation9 + $0x18] sm:$0xff]
    %v452 = vld [vmem:[#allocation9 + $0x20] sm:$0xff]
    %v453 = vld [vmem:[#allocation9 + $0x28] sm:$0xff]
    %v454 = vld [vmem:[#allocation9 + $0x30] sm:$0xff]
    %v455 = vld [vmem:[#allocation9 + $0x38] sm:$0xff]
    %vm456 = vcmask 523264
    %v458 = vsel %vm456, %v446, 0
    %v461 = vsel %vm456, %v447, 0
    %463 = vmatprep.subr.mxu0 0.0
    %464 = vmatpush1.msra.mxu0 0.0
    %465 = vmatprep.subr.mxu0 0.0
    %466 = vmatpush1.msra.mxu0 0.0
    %467 = vmatprep.subr.mxu0 0.0
    %468 = vmatpush1.msra.mxu0 0.0
    %469 = vmatprep.subr.mxu0 0.0
    %470 = vmatpush1.msra.mxu0 0.0
    %471 = vmatprep.subr.mxu0 0.0
    %472 = vmatpush1.msra.mxu0 0.0
    %473 = vmatprep.subr.mxu0 0.0
    %474 = vmatpush1.msra.mxu0 0.0
    %475 = vmatprep.subr.mxu0 0.0
    %476 = vmatpush1.msra.mxu0 0.0
    %477 = vmatprep.subr.mxu0 0.0
    %478 = vmatpush1.msra.mxu0 0.0
    %479 = vmatprep.subr.mxu0 0.0
    %480 = vmatpush1.msra.mxu0 %v455
    %481 = vmatprep.subr.mxu0 0.0
    %482 = vmatpush1.msra.mxu0 %v454
    %483 = vmatprep.subr.mxu0 0.0
    %484 = vmatpush1.msra.mxu0 %v453
    %485 = vmatprep.subr.mxu0 0.0
    %486 = vmatpush1.msra.mxu0 %v452
    %487 = vmatprep.subr.mxu0 0.0
    %488 = vmatpush1.msra.mxu0 %v451
    %489 = vmatprep.subr.mxu0 0.0
    %490 = vmatpush1.msra.mxu0 %v450
    %491 = vmatprep.subr.mxu0 0.0
    %492 = vmatpush1.msra.mxu0 %v449
    %493 = vmatprep.subr.mxu0 0.0
    %494 = vmatpush1.msra.mxu0 %v448
    %495 = vmatprep.subr.mxu0 0.0
    %496 = vmatpush2.msra.mxu0 0.0
    %497 = vmatprep.subr.mxu0 0.0
    %498 = vmatpush2.msra.mxu0 0.0
    %499 = vmatprep.subr.mxu0 0.0
    %500 = vmatpush2.msra.mxu0 0.0
    %501 = vmatprep.subr.mxu0 0.0
    %502 = vmatpush2.msra.mxu0 0.0
    %503 = vmatprep.subr.mxu0 0.0
    %504 = vmatpush2.msra.mxu0 0.0
    %505 = vmatprep.subr.mxu0 0.0
    %506 = vmatpush2.msra.mxu0 0.0
    %507 = vmatprep.subr.mxu0 0.0
    %508 = vmatpush2.msra.mxu0 0.0
    %509 = vmatprep.subr.mxu0 0.0
    %510 = vmatpush2.msra.mxu0 0.0
    %511 = vmatprep.subr.mxu0 0.0
    %512 = vmatpush2.msra.mxu0 0.0
    %513 = vmatprep.subr.mxu0 0.0
    %514 = vmatpush2.msra.mxu0 0.0
    %515 = vmatprep.subr.mxu0 0.0
    %516 = vmatpush2.msra.mxu0 0.0
    %517 = vmatprep.subr.mxu0 0.0
    %518 = vmatpush2.msra.mxu0 0.0
    %519 = vmatprep.subr.mxu0 0.0
    %520 = vmatpush2.msra.mxu0 0.0
    %521 = vmatprep.subr.mxu0 0.0
    %522 = vmatpush2.msra.mxu0 0.0
    %523 = vmatprep.subr.mxu0 0.0
    %524 = vmatpush2.msra.mxu0 0.0
    %525 = vmatprep.subr.mxu0 0.0
    %526 = vmatpush2.msra.mxu0 0.0
    %527 = vmatprep.mubr.f32.mxu0 0.0
    %528 = vmatmul.mubr.f32.gmra.mxu0 %v458
    %v529 = vpop.f32.mrf.mxu0
    %v530 = vadd.f32 0.0, %v529
    %v531 = vpop.f32.mrf.mxu0
    %532 = vmatprep.mubr.f32.mxu0 0.0
    %533 = vmatmul.mubr.f32.gmra.mxu0 %v461
    %v534 = vpop.f32.mrf.mxu0
    %v535 = vadd.f32 0.0, %v534
    %v536 = vpop.f32.mrf.mxu0
    %537 = vdwg.mxu0
    %v538 = vld [vmem:[#allocation10 + $0x5] sm:$0x1]
    %v539 = vlaneseq
    %v540 = vshrl.u32 %v539, 7
    %v541 = vsub.s32 0, %v540
    %v542 = vrot.slane %v538, %v541
    %v543 = vadd.f32 %v530, %v542
    %v544 = vadd.f32 %v535, %v542
    %v545 = vmax.f32 %v543, 0.0
    %v546 = vmax.f32 %v544, 0.0
    %v547 = vand.u32 2147483647, %v543
    %v548 = vand.u32 2147483647, %v544
    %v549 = vsub.f32 0.0, %v547
    %v550 = vsub.f32 0.0, %v548
    %v551 = vmul.f32 %v549, 1.442695
    %v552 = vpow.pop %v551
    %v553 = vmul.f32 %v550, 1.442695
    %v554 = vpow.pop %v553
    %v555 = vadd.f32 %v552, 1.0
    %v556 = vlog2.pop %v555
    %v557 = vmul.f32 %v556, 0.6931472
    %v558 = vmul.f32 -0.5, %v552
    %v559 = vadd.f32 %v558, 1.0
    %v560 = vmul.f32 %v559, %v552
    %v561 = vand.u32 2147483647, %v552
    %vm562 = vcmp.lt.f32.partialorder %v561, 0.0004427343
    %v563 = vsel %vm562, %v560, %v557
    %v564 = vadd.f32 %v554, 1.0
    %v565 = vlog2.pop %v564
    %v566 = vmul.f32 %v565, 0.6931472
    %v567 = vmul.f32 -0.5, %v554
    %v568 = vadd.f32 %v567, 1.0
    %v569 = vmul.f32 %v568, %v554
    %v570 = vand.u32 2147483647, %v554
    %vm571 = vcmp.lt.f32.partialorder %v570, 0.0004427343
    %v572 = vsel %vm571, %v569, %v566
    %v573 = vadd.f32 %v545, %v563
    %v574 = vadd.f32 %v546, %v572
    %v575 = vld [vmem:[#allocation10 + $0x6] sm:$0xff]
    %v576 = vld [vmem:[#allocation10 + $0xe] sm:$0x1]
    %v577 = vmul.f32 %v573, %v446
    %v578 = vmul.f32 %v574, %v447
    %v581 = vcombine.high %v573, %v573
    %v583 = vunpack.c.l.s4 1966171168
    %v584 = vunpack.c.0.s8 %v583
    %v585 = vlaneseq
    %v586 = vshrl.u32 %v585, 7
    %v587 = vsub.s32 %v584, %v586
    %v588 = vrot.slane %v573, %v587
    %v590 = vunpack.c.l.s4 1966171168
    %v591 = vunpack.c.0.s8 %v590
    %v592 = vlaneseq
    %v593 = vshrl.u32 %v592, 7
    %v594 = vsub.s32 %v591, %v593
    %v595 = vrot.slane %v581, %v594
    %v596 = vcombine.high %v588, %v588
    %v597 = vcombine.high %v595, %v595
    %v599 = vunpack.c.l.s4 1966171168
    %v600 = vunpack.c.0.s8 %v599
    %v601 = vlaneseq
    %v602 = vshrl.u32 %v601, 7
    %v603 = vsub.s32 %v600, %v602
    %v604 = vrot.slane %v588, %v603
    %v606 = vunpack.c.l.s4 1966171168
    %v607 = vunpack.c.0.s8 %v606
    %v608 = vlaneseq
    %v609 = vshrl.u32 %v608, 7
    %v610 = vsub.s32 %v607, %v609
    %v611 = vrot.slane %v595, %v610
    %v613 = vunpack.c.l.s4 1966171168
    %v614 = vunpack.c.0.s8 %v613
    %v615 = vlaneseq
    %v616 = vshrl.u32 %v615, 7
    %v617 = vsub.s32 %v614, %v616
    %v618 = vrot.slane %v596, %v617
    %v620 = vunpack.c.l.s4 1966171168
    %v621 = vunpack.c.0.s8 %v620
    %v622 = vlaneseq
    %v623 = vshrl.u32 %v622, 7
    %v624 = vsub.s32 %v621, %v623
    %v625 = vrot.slane %v597, %v624
    %v626 = vcombine.high %v604, %v604
    %v627 = vcombine.high %v611, %v611
    %v628 = vcombine.high %v618, %v618
    %v629 = vcombine.high %v625, %v625
    %v630 = vcombine.high %v574, %v574
    %v632 = vunpack.c.l.s4 1966171168
    %v633 = vunpack.c.0.s8 %v632
    %v634 = vlaneseq
    %v635 = vshrl.u32 %v634, 7
    %v636 = vsub.s32 %v633, %v635
    %v637 = vrot.slane %v574, %v636
    %v639 = vunpack.c.l.s4 1966171168
    %v640 = vunpack.c.0.s8 %v639
    %v641 = vlaneseq
    %v642 = vshrl.u32 %v641, 7
    %v643 = vsub.s32 %v640, %v642
    %v644 = vrot.slane %v630, %v643
    %v645 = vcombine.high %v637, %v637
    %v646 = vcombine.high %v644, %v644
    %v648 = vunpack.c.l.s4 1966171168
    %v649 = vunpack.c.0.s8 %v648
    %v650 = vlaneseq
    %v651 = vshrl.u32 %v650, 7
    %v652 = vsub.s32 %v649, %v651
    %v653 = vrot.slane %v637, %v652
    %v655 = vunpack.c.l.s4 1966171168
    %v656 = vunpack.c.0.s8 %v655
    %v657 = vlaneseq
    %v658 = vshrl.u32 %v657, 7
    %v659 = vsub.s32 %v656, %v658
    %v660 = vrot.slane %v644, %v659
    %v662 = vunpack.c.l.s4 1966171168
    %v663 = vunpack.c.0.s8 %v662
    %v664 = vlaneseq
    %v665 = vshrl.u32 %v664, 7
    %v666 = vsub.s32 %v663, %v665
    %v667 = vrot.slane %v645, %v666
    %v669 = vunpack.c.l.s4 1966171168
    %v670 = vunpack.c.0.s8 %v669
    %v671 = vlaneseq
    %v672 = vshrl.u32 %v671, 7
    %v673 = vsub.s32 %v670, %v672
    %v674 = vrot.slane %v646, %v673
    %v675 = vcombine.high %v653, %v653
    %v676 = vcombine.high %v660, %v660
    %v677 = vcombine.high %v667, %v667
    %v678 = vcombine.high %v674, %v674
    %v679 = vlaneseq
    %v680 = vshrl.u32 %v679, 7
    %v681 = vsub.s32 0, %v680
    %v682 = vrot.slane %v604, %v681
    %v683 = vlaneseq
    %v684 = vshrl.u32 %v683, 7
    %v685 = vsub.s32 0, %v684
    %v686 = vrot.slane %v618, %v685
    %v687 = vlaneseq
    %v688 = vshrl.u32 %v687, 7
    %v689 = vsub.s32 0, %v688
    %v690 = vrot.slane %v626, %v689
    %v691 = vlaneseq
    %v692 = vshrl.u32 %v691, 7
    %v693 = vsub.s32 0, %v692
    %v694 = vrot.slane %v628, %v693
    %v695 = vlaneseq
    %v696 = vshrl.u32 %v695, 7
    %v697 = vsub.s32 0, %v696
    %v698 = vrot.slane %v611, %v697
    %v699 = vlaneseq
    %v700 = vshrl.u32 %v699, 7
    %v701 = vsub.s32 0, %v700
    %v702 = vrot.slane %v625, %v701
    %v703 = vlaneseq
    %v704 = vshrl.u32 %v703, 7
    %v705 = vsub.s32 0, %v704
    %v706 = vrot.slane %v627, %v705
    %v707 = vlaneseq
    %v708 = vshrl.u32 %v707, 7
    %v709 = vsub.s32 0, %v708
    %v710 = vrot.slane %v629, %v709
    %v711 = vlaneseq
    %v712 = vshrl.u32 %v711, 7
    %v713 = vsub.s32 0, %v712
    %v714 = vrot.slane %v653, %v713
    %v715 = vlaneseq
    %v716 = vshrl.u32 %v715, 7
    %v717 = vsub.s32 0, %v716
    %v718 = vrot.slane %v667, %v717
    %v719 = vlaneseq
    %v720 = vshrl.u32 %v719, 7
    %v721 = vsub.s32 0, %v720
    %v722 = vrot.slane %v675, %v721
    %v723 = vlaneseq
    %v724 = vshrl.u32 %v723, 7
    %v725 = vsub.s32 0, %v724
    %v726 = vrot.slane %v677, %v725
    %v727 = vlaneseq
    %v728 = vshrl.u32 %v727, 7
    %v729 = vsub.s32 0, %v728
    %v730 = vrot.slane %v660, %v729
    %v731 = vlaneseq
    %v732 = vshrl.u32 %v731, 7
    %v733 = vsub.s32 0, %v732
    %v734 = vrot.slane %v674, %v733
    %v735 = vlaneseq
    %v736 = vshrl.u32 %v735, 7
    %v737 = vsub.s32 0, %v736
    %v738 = vrot.slane %v676, %v737
    %v739 = vlaneseq
    %v740 = vshrl.u32 %v739, 7
    %v741 = vsub.s32 0, %v740
    %v742 = vrot.slane %v678, %v741
    %v759 = vmul.f32 %v682, %v575
    %v760 = vmul.f32 %v686, %v575
    %v761 = vmul.f32 %v690, %v575
    %v762 = vmul.f32 %v694, %v575
    %v763 = vmul.f32 %v698, %v575
    %v764 = vmul.f32 %v702, %v575
    %v765 = vmul.f32 %v706, %v575
    %v766 = vmul.f32 %v710, %v575
    %v767 = vmul.f32 %v714, %v575
    %v768 = vmul.f32 %v718, %v575
    %v769 = vmul.f32 %v722, %v575
    %v770 = vmul.f32 %v726, %v575
    %v771 = vmul.f32 %v730, %v575
    %v772 = vmul.f32 %v734, %v575
    %v773 = vmul.f32 %v738, %v575
    %v774 = vmul.f32 %v742, %v575
    %v775 = vmul.f32 %v759, 1.442695
    %v776 = vpow.pop %v775
    %v777 = vmul.f32 %v760, 1.442695
    %v778 = vpow.pop %v777
    %v779 = vmul.f32 %v761, 1.442695
    %v780 = vpow.pop %v779
    %v781 = vmul.f32 %v762, 1.442695
    %v782 = vpow.pop %v781
    %v783 = vmul.f32 %v763, 1.442695
    %v784 = vpow.pop %v783
    %v785 = vmul.f32 %v764, 1.442695
    %v786 = vpow.pop %v785
    %v787 = vmul.f32 %v765, 1.442695
    %v788 = vpow.pop %v787
    %v789 = vmul.f32 %v766, 1.442695
    %v790 = vpow.pop %v789
    %v791 = vmul.f32 %v767, 1.442695
    %v792 = vpow.pop %v791
    %v793 = vmul.f32 %v768, 1.442695
    %v794 = vpow.pop %v793
    %v795 = vmul.f32 %v769, 1.442695
    %v796 = vpow.pop %v795
    %v797 = vmul.f32 %v770, 1.442695
    %v798 = vpow.pop %v797
    %v799 = vmul.f32 %v771, 1.442695
    %v800 = vpow.pop %v799
    %v801 = vmul.f32 %v772, 1.442695
    %v802 = vpow.pop %v801
    %v803 = vmul.f32 %v773, 1.442695
    %v804 = vpow.pop %v803
    %v805 = vmul.f32 %v774, 1.442695
    %v806 = vpow.pop %v805
    %v807 = vlaneseq
    %v808 = vshrl.u32 %v807, 7
    %v809 = vsub.s32 0, %v808
    %v810 = vrot.slane %v530, %v809
    %s812 = sor.u32 256, 64
    %813 = vbcast.lane.b32.xlu0 %v810, %s812
    %v814 = vpop.permute.xlu0 %813
    %v815 = vlaneseq
    %v816 = vshrl.u32 %v815, 7
    %v817 = vsub.s32 1, %v816
    %v818 = vrot.slane %v530, %v817
    %s820 = sor.u32 256, 64
    %821 = vbcast.lane.b32.xlu0 %v818, %s820
    %v822 = vpop.permute.xlu0 %821
    %v823 = vlaneseq
    %v824 = vshrl.u32 %v823, 7
    %v825 = vsub.s32 2, %v824
    %v826 = vrot.slane %v530, %v825
    %s828 = sor.u32 256, 64
    %829 = vbcast.lane.b32.xlu0 %v826, %s828
    %v830 = vpop.permute.xlu0 %829
    %v831 = vlaneseq
    %v832 = vshrl.u32 %v831, 7
    %v833 = vsub.s32 3, %v832
    %v834 = vrot.slane %v530, %v833
    %s836 = sor.u32 256, 64
    %837 = vbcast.lane.b32.xlu0 %v834, %s836
    %v838 = vpop.permute.xlu0 %837
    %v839 = vlaneseq
    %v840 = vshrl.u32 %v839, 7
    %v841 = vsub.s32 4, %v840
    %v842 = vrot.slane %v530, %v841
    %s844 = sor.u32 256, 64
    %845 = vbcast.lane.b32.xlu0 %v842, %s844
    %v846 = vpop.permute.xlu0 %845
    %v847 = vlaneseq
    %v848 = vshrl.u32 %v847, 7
    %v849 = vsub.s32 5, %v848
    %v850 = vrot.slane %v530, %v849
    %s852 = sor.u32 256, 64
    %853 = vbcast.lane.b32.xlu0 %v850, %s852
    %v854 = vpop.permute.xlu0 %853
    %v855 = vlaneseq
    %v856 = vshrl.u32 %v855, 7
    %v857 = vsub.s32 6, %v856
    %v858 = vrot.slane %v530, %v857
    %s860 = sor.u32 256, 64
    %861 = vbcast.lane.b32.xlu0 %v858, %s860
    %v862 = vpop.permute.xlu0 %861
    %v863 = vlaneseq
    %v864 = vshrl.u32 %v863, 7
    %v865 = vsub.s32 7, %v864
    %v866 = vrot.slane %v530, %v865
    %s868 = sor.u32 256, 64
    %869 = vbcast.lane.b32.xlu0 %v866, %s868
    %v870 = vpop.permute.xlu0 %869
    %v871 = vlaneseq
    %v872 = vshrl.u32 %v871, 7
    %v873 = vsub.s32 0, %v872
    %v874 = vrot.slane %v535, %v873
    %s876 = sor.u32 256, 64
    %877 = vbcast.lane.b32.xlu0 %v874, %s876
    %v878 = vpop.permute.xlu0 %877
    %v879 = vlaneseq
    %v880 = vshrl.u32 %v879, 7
    %v881 = vsub.s32 1, %v880
    %v882 = vrot.slane %v535, %v881
    %s884 = sor.u32 256, 64
    %885 = vbcast.lane.b32.xlu0 %v882, %s884
    %v886 = vpop.permute.xlu0 %885
    %v887 = vlaneseq
    %v888 = vshrl.u32 %v887, 7
    %v889 = vsub.s32 2, %v888
    %v890 = vrot.slane %v535, %v889
    %s892 = sor.u32 256, 64
    %893 = vbcast.lane.b32.xlu0 %v890, %s892
    %v894 = vpop.permute.xlu0 %893
    %v895 = vlaneseq
    %v896 = vshrl.u32 %v895, 7
    %v897 = vsub.s32 3, %v896
    %v898 = vrot.slane %v535, %v897
    %s900 = sor.u32 256, 64
    %901 = vbcast.lane.b32.xlu0 %v898, %s900
    %v902 = vpop.permute.xlu0 %901
    %v903 = vlaneseq
    %v904 = vshrl.u32 %v903, 7
    %v905 = vsub.s32 4, %v904
    %v906 = vrot.slane %v535, %v905
    %s908 = sor.u32 256, 64
    %909 = vbcast.lane.b32.xlu0 %v906, %s908
    %v910 = vpop.permute.xlu0 %909
    %v911 = vlaneseq
    %v912 = vshrl.u32 %v911, 7
    %v913 = vsub.s32 5, %v912
    %v914 = vrot.slane %v535, %v913
    %s916 = sor.u32 256, 64
    %917 = vbcast.lane.b32.xlu0 %v914, %s916
    %v918 = vpop.permute.xlu0 %917
    %v919 = vlaneseq
    %v920 = vshrl.u32 %v919, 7
    %v921 = vsub.s32 6, %v920
    %v922 = vrot.slane %v535, %v921
    %s924 = sor.u32 256, 64
    %925 = vbcast.lane.b32.xlu0 %v922, %s924
    %v926 = vpop.permute.xlu0 %925
    %v927 = vlaneseq
    %v928 = vshrl.u32 %v927, 7
    %v929 = vsub.s32 7, %v928
    %v930 = vrot.slane %v535, %v929
    %s932 = sor.u32 256, 64
    %933 = vbcast.lane.b32.xlu0 %v930, %s932
    %v934 = vpop.permute.xlu0 %933
    %v937 = vcombine.high %v577, %v577
    %v939 = vunpack.c.l.s4 1966171168
    %v940 = vunpack.c.0.s8 %v939
    %v941 = vlaneseq
    %v942 = vshrl.u32 %v941, 7
    %v943 = vsub.s32 %v940, %v942
    %v944 = vrot.slane %v577, %v943
    %v946 = vunpack.c.l.s4 1966171168
    %v947 = vunpack.c.0.s8 %v946
    %v948 = vlaneseq
    %v949 = vshrl.u32 %v948, 7
    %v950 = vsub.s32 %v947, %v949
    %v951 = vrot.slane %v937, %v950
    %v952 = vcombine.high %v944, %v944
    %v953 = vcombine.high %v951, %v951
    %v955 = vunpack.c.l.s4 1966171168
    %v956 = vunpack.c.0.s8 %v955
    %v957 = vlaneseq
    %v958 = vshrl.u32 %v957, 7
    %v959 = vsub.s32 %v956, %v958
    %v960 = vrot.slane %v944, %v959
    %v962 = vunpack.c.l.s4 1966171168
    %v963 = vunpack.c.0.s8 %v962
    %v964 = vlaneseq
    %v965 = vshrl.u32 %v964, 7
    %v966 = vsub.s32 %v963, %v965
    %v967 = vrot.slane %v951, %v966
    %v969 = vunpack.c.l.s4 1966171168
    %v970 = vunpack.c.0.s8 %v969
    %v971 = vlaneseq
    %v972 = vshrl.u32 %v971, 7
    %v973 = vsub.s32 %v970, %v972
    %v974 = vrot.slane %v952, %v973
    %v976 = vunpack.c.l.s4 1966171168
    %v977 = vunpack.c.0.s8 %v976
    %v978 = vlaneseq
    %v979 = vshrl.u32 %v978, 7
    %v980 = vsub.s32 %v977, %v979
    %v981 = vrot.slane %v953, %v980
    %v982 = vcombine.high %v960, %v960
    %v983 = vcombine.high %v967, %v967
    %v984 = vcombine.high %v974, %v974
    %v985 = vcombine.high %v981, %v981
    %v986 = vcombine.high %v578, %v578
    %v988 = vunpack.c.l.s4 1966171168
    %v989 = vunpack.c.0.s8 %v988
    %v990 = vlaneseq
    %v991 = vshrl.u32 %v990, 7
    %v992 = vsub.s32 %v989, %v991
    %v993 = vrot.slane %v578, %v992
    %v995 = vunpack.c.l.s4 1966171168
    %v996 = vunpack.c.0.s8 %v995
    %v997 = vlaneseq
    %v998 = vshrl.u32 %v997, 7
    %v999 = vsub.s32 %v996, %v998
    %v1000 = vrot.slane %v986, %v999
    %v1001 = vcombine.high %v993, %v993
    %v1002 = vcombine.high %v1000, %v1000
    %v1004 = vunpack.c.l.s4 1966171168
    %v1005 = vunpack.c.0.s8 %v1004
    %v1006 = vlaneseq
    %v1007 = vshrl.u32 %v1006, 7
    %v1008 = vsub.s32 %v1005, %v1007
    %v1009 = vrot.slane %v993, %v1008
    %v1011 = vunpack.c.l.s4 1966171168
    %v1012 = vunpack.c.0.s8 %v1011
    %v1013 = vlaneseq
    %v1014 = vshrl.u32 %v1013, 7
    %v1015 = vsub.s32 %v1012, %v1014
    %v1016 = vrot.slane %v1000, %v1015
    %v1018 = vunpack.c.l.s4 1966171168
    %v1019 = vunpack.c.0.s8 %v1018
    %v1020 = vlaneseq
    %v1021 = vshrl.u32 %v1020, 7
    %v1022 = vsub.s32 %v1019, %v1021
    %v1023 = vrot.slane %v1001, %v1022
    %v1025 = vunpack.c.l.s4 1966171168
    %v1026 = vunpack.c.0.s8 %v1025
    %v1027 = vlaneseq
    %v1028 = vshrl.u32 %v1027, 7
    %v1029 = vsub.s32 %v1026, %v1028
    %v1030 = vrot.slane %v1002, %v1029
    %v1031 = vcombine.high %v1009, %v1009
    %v1032 = vcombine.high %v1016, %v1016
    %v1033 = vcombine.high %v1023, %v1023
    %v1034 = vcombine.high %v1030, %v1030
    %v1035 = vlaneseq
    %v1036 = vshrl.u32 %v1035, 7
    %v1037 = vsub.s32 0, %v1036
    %v1038 = vrot.slane %v960, %v1037
    %v1039 = vlaneseq
    %v1040 = vshrl.u32 %v1039, 7
    %v1041 = vsub.s32 0, %v1040
    %v1042 = vrot.slane %v974, %v1041
    %v1043 = vlaneseq
    %v1044 = vshrl.u32 %v1043, 7
    %v1045 = vsub.s32 0, %v1044
    %v1046 = vrot.slane %v982, %v1045
    %v1047 = vlaneseq
    %v1048 = vshrl.u32 %v1047, 7
    %v1049 = vsub.s32 0, %v1048
    %v1050 = vrot.slane %v984, %v1049
    %v1051 = vlaneseq
    %v1052 = vshrl.u32 %v1051, 7
    %v1053 = vsub.s32 0, %v1052
    %v1054 = vrot.slane %v967, %v1053
    %v1055 = vlaneseq
    %v1056 = vshrl.u32 %v1055, 7
    %v1057 = vsub.s32 0, %v1056
    %v1058 = vrot.slane %v981, %v1057
    %v1059 = vlaneseq
    %v1060 = vshrl.u32 %v1059, 7
    %v1061 = vsub.s32 0, %v1060
    %v1062 = vrot.slane %v983, %v1061
    %v1063 = vlaneseq
    %v1064 = vshrl.u32 %v1063, 7
    %v1065 = vsub.s32 0, %v1064
    %v1066 = vrot.slane %v985, %v1065
    %v1067 = vlaneseq
    %v1068 = vshrl.u32 %v1067, 7
    %v1069 = vsub.s32 0, %v1068
    %v1070 = vrot.slane %v1009, %v1069
    %v1071 = vlaneseq
    %v1072 = vshrl.u32 %v1071, 7
    %v1073 = vsub.s32 0, %v1072
    %v1074 = vrot.slane %v1023, %v1073
    %v1075 = vlaneseq
    %v1076 = vshrl.u32 %v1075, 7
    %v1077 = vsub.s32 0, %v1076
    %v1078 = vrot.slane %v1031, %v1077
    %v1079 = vlaneseq
    %v1080 = vshrl.u32 %v1079, 7
    %v1081 = vsub.s32 0, %v1080
    %v1082 = vrot.slane %v1033, %v1081
    %v1083 = vlaneseq
    %v1084 = vshrl.u32 %v1083, 7
    %v1085 = vsub.s32 0, %v1084
    %v1086 = vrot.slane %v1016, %v1085
    %v1087 = vlaneseq
    %v1088 = vshrl.u32 %v1087, 7
    %v1089 = vsub.s32 0, %v1088
    %v1090 = vrot.slane %v1030, %v1089
    %v1091 = vlaneseq
    %v1092 = vshrl.u32 %v1091, 7
    %v1093 = vsub.s32 0, %v1092
    %v1094 = vrot.slane %v1032, %v1093
    %v1095 = vlaneseq
    %v1096 = vshrl.u32 %v1095, 7
    %v1097 = vsub.s32 0, %v1096
    %v1098 = vrot.slane %v1034, %v1097
    %v1115 = vmul.f32 %v814, %v1038
    %v1116 = vmul.f32 %v822, %v1042
    %v1117 = vmul.f32 %v830, %v1046
    %v1118 = vmul.f32 %v838, %v1050
    %v1119 = vmul.f32 %v846, %v1054
    %v1120 = vmul.f32 %v854, %v1058
    %v1121 = vmul.f32 %v862, %v1062
    %v1122 = vmul.f32 %v870, %v1066
    %v1123 = vmul.f32 %v878, %v1070
    %v1124 = vmul.f32 %v886, %v1074
    %v1125 = vmul.f32 %v894, %v1078
    %v1126 = vmul.f32 %v902, %v1082
    %v1127 = vmul.f32 %v910, %v1086
    %v1128 = vmul.f32 %v918, %v1090
    %v1129 = vmul.f32 %v926, %v1094
    %v1130 = vmul.f32 %v934, %v1098
    %v1131 = vmul.f32 %v776, 0.0
    %v1132 = vadd.f32 %v1131, %v1115
    %1133 = vst.msk [vmem:[#allocation3] sm:$0xff] %vm456, %v1132
    %v1134 = vmul.f32 %v778, %v1132
    %v1135 = vadd.f32 %v1134, %v1116
    %s1136 = scalar_lea.vmem [#allocation3], 8
    %1137 = vst.msk [vmem:[%s1136] sm:$0xff] %vm456, %v1135
    %v1138 = vmul.f32 %v780, %v1135
    %v1139 = vadd.f32 %v1138, %v1117
    %s1140 = scalar_lea.vmem [#allocation3], 16
    %1141 = vst.msk [vmem:[%s1140] sm:$0xff] %vm456, %v1139
    %v1142 = vmul.f32 %v782, %v1139
    %v1143 = vadd.f32 %v1142, %v1118
    %s1144 = scalar_lea.vmem [#allocation3], 24
    %1145 = vst.msk [vmem:[%s1144] sm:$0xff] %vm456, %v1143
    %v1146 = vmul.f32 %v784, %v1143
    %v1147 = vadd.f32 %v1146, %v1119
    %s1148 = scalar_lea.vmem [#allocation3], 32
    %1149 = vst.msk [vmem:[%s1148] sm:$0xff] %vm456, %v1147
    %v1150 = vmul.f32 %v786, %v1147
    %v1151 = vadd.f32 %v1150, %v1120
    %s1152 = scalar_lea.vmem [#allocation3], 40
    %1153 = vst.msk [vmem:[%s1152] sm:$0xff] %vm456, %v1151
    %v1154 = vmul.f32 %v788, %v1151
    %v1155 = vadd.f32 %v1154, %v1121
    %s1156 = scalar_lea.vmem [#allocation3], 48
    %1157 = vst.msk [vmem:[%s1156] sm:$0xff] %vm456, %v1155
    %v1158 = vmul.f32 %v790, %v1155
    %v1159 = vadd.f32 %v1158, %v1122
    %s1160 = scalar_lea.vmem [#allocation3], 56
    %1161 = vst.msk [vmem:[%s1160] sm:$0xff] %vm456, %v1159
    %v1162 = vmul.f32 %v792, 0.0
    %v1163 = vadd.f32 %v1162, %v1123
    %s1164 = scalar_lea.vmem [#allocation3], 64
    %1165 = vst.msk [vmem:[%s1164] sm:$0xff] %vm456, %v1163
    %v1166 = vmul.f32 %v794, %v1163
    %v1167 = vadd.f32 %v1166, %v1124
    %s1168 = scalar_lea.vmem [#allocation3], 72
    %1169 = vst.msk [vmem:[%s1168] sm:$0xff] %vm456, %v1167
    %v1170 = vmul.f32 %v796, %v1167
    %v1171 = vadd.f32 %v1170, %v1125
    %s1172 = scalar_lea.vmem [#allocation3], 80
    %1173 = vst.msk [vmem:[%s1172] sm:$0xff] %vm456, %v1171
    %v1174 = vmul.f32 %v798, %v1171
    %v1175 = vadd.f32 %v1174, %v1126
    %s1176 = scalar_lea.vmem [#allocation3], 88
    %1177 = vst.msk [vmem:[%s1176] sm:$0xff] %vm456, %v1175
    %v1178 = vmul.f32 %v800, %v1175
    %v1179 = vadd.f32 %v1178, %v1127
    %s1180 = scalar_lea.vmem [#allocation3], 96
    %1181 = vst.msk [vmem:[%s1180] sm:$0xff] %vm456, %v1179
    %v1182 = vmul.f32 %v802, %v1179
    %v1183 = vadd.f32 %v1182, %v1128
    %s1184 = scalar_lea.vmem [#allocation3], 104
    %1185 = vst.msk [vmem:[%s1184] sm:$0xff] %vm456, %v1183
    %v1186 = vmul.f32 %v804, %v1183
    %v1187 = vadd.f32 %v1186, %v1129
    %s1188 = scalar_lea.vmem [#allocation3], 112
    %1189 = vst.msk [vmem:[%s1188] sm:$0xff] %vm456, %v1187
    %v1190 = vmul.f32 %v806, %v1187
    %v1191 = vadd.f32 %v1190, %v1130
    %s1192 = scalar_lea.vmem [#allocation3], 120
    %1193 = vst.msk [vmem:[%s1192] sm:$0xff] %vm456, %v1191
    %v1194 = vld [vmem:[#allocation3] sm:$0xff]
    %v1195 = vld [vmem:[#allocation3 + $0x8] sm:$0xff]
    %v1196 = vld [vmem:[#allocation3 + $0x10] sm:$0xff]
    %v1197 = vld [vmem:[#allocation3 + $0x18] sm:$0xff]
    %v1198 = vld [vmem:[#allocation3 + $0x20] sm:$0xff]
    %v1199 = vld [vmem:[#allocation3 + $0x28] sm:$0xff]
    %v1200 = vld [vmem:[#allocation3 + $0x30] sm:$0xff]
    %v1201 = vld [vmem:[#allocation3 + $0x38] sm:$0xff]
    %v1202 = vld [vmem:[#allocation3 + $0x40] sm:$0xff]
    %v1203 = vld [vmem:[#allocation3 + $0x48] sm:$0xff]
    %v1204 = vld [vmem:[#allocation3 + $0x50] sm:$0xff]
    %v1205 = vld [vmem:[#allocation3 + $0x58] sm:$0xff]
    %v1206 = vld [vmem:[#allocation3 + $0x60] sm:$0xff]
    %v1207 = vld [vmem:[#allocation3 + $0x68] sm:$0xff]
    %v1208 = vld [vmem:[#allocation3 + $0x70] sm:$0xff]
    %v1209 = vld [vmem:[#allocation3 + $0x78] sm:$0xff]
    %s1211 = sor.u32 256, 72
    %1212 = vbcast.lane.b32.xlu0 %v810, %s1211
    %v1213 = vpop.permute.xlu0 %1212
    %s1215 = sor.u32 256, 72
    %1216 = vbcast.lane.b32.xlu0 %v818, %s1215
    %v1217 = vpop.permute.xlu0 %1216
    %s1219 = sor.u32 256, 72
    %1220 = vbcast.lane.b32.xlu0 %v826, %s1219
    %v1221 = vpop.permute.xlu0 %1220
    %s1223 = sor.u32 256, 72
    %1224 = vbcast.lane.b32.xlu0 %v834, %s1223
    %v1225 = vpop.permute.xlu0 %1224
    %s1227 = sor.u32 256, 72
    %1228 = vbcast.lane.b32.xlu0 %v842, %s1227
    %v1229 = vpop.permute.xlu0 %1228
    %s1231 = sor.u32 256, 72
    %1232 = vbcast.lane.b32.xlu0 %v850, %s1231
    %v1233 = vpop.permute.xlu0 %1232
    %s1235 = sor.u32 256, 72
    %1236 = vbcast.lane.b32.xlu0 %v858, %s1235
    %v1237 = vpop.permute.xlu0 %1236
    %s1239 = sor.u32 256, 72
    %1240 = vbcast.lane.b32.xlu0 %v866, %s1239
    %v1241 = vpop.permute.xlu0 %1240
    %s1243 = sor.u32 256, 72
    %1244 = vbcast.lane.b32.xlu0 %v874, %s1243
    %v1245 = vpop.permute.xlu0 %1244
    %s1247 = sor.u32 256, 72
    %1248 = vbcast.lane.b32.xlu0 %v882, %s1247
    %v1249 = vpop.permute.xlu0 %1248
    %s1251 = sor.u32 256, 72
    %1252 = vbcast.lane.b32.xlu0 %v890, %s1251
    %v1253 = vpop.permute.xlu0 %1252
    %s1255 = sor.u32 256, 72
    %1256 = vbcast.lane.b32.xlu0 %v898, %s1255
    %v1257 = vpop.permute.xlu0 %1256
    %s1259 = sor.u32 256, 72
    %1260 = vbcast.lane.b32.xlu0 %v906, %s1259
    %v1261 = vpop.permute.xlu0 %1260
    %s1263 = sor.u32 256, 72
    %1264 = vbcast.lane.b32.xlu0 %v914, %s1263
    %v1265 = vpop.permute.xlu0 %1264
    %s1267 = sor.u32 256, 72
    %1268 = vbcast.lane.b32.xlu0 %v922, %s1267
    %v1269 = vpop.permute.xlu0 %1268
    %s1271 = sor.u32 256, 72
    %1272 = vbcast.lane.b32.xlu0 %v930, %s1271
    %v1273 = vpop.permute.xlu0 %1272
    %v1274 = vmul.f32 %v1213, %v1194
    %v1275 = vmul.f32 %v1217, %v1195
    %v1276 = vmul.f32 %v1221, %v1196
    %v1277 = vmul.f32 %v1225, %v1197
    %v1278 = vmul.f32 %v1229, %v1198
    %v1279 = vmul.f32 %v1233, %v1199
    %v1280 = vmul.f32 %v1237, %v1200
    %v1281 = vmul.f32 %v1241, %v1201
    %v1282 = vmul.f32 %v1245, %v1202
    %v1283 = vmul.f32 %v1249, %v1203
    %v1284 = vmul.f32 %v1253, %v1204
    %v1285 = vmul.f32 %v1257, %v1205
    %v1286 = vmul.f32 %v1261, %v1206
    %v1287 = vmul.f32 %v1265, %v1207
    %v1288 = vmul.f32 %v1269, %v1208
    %v1289 = vmul.f32 %v1273, %v1209
    %v1290 = vsel %vm456, %v1274, 0.0
    %v1291 = vrot.slane %v1290, 4
    %v1292 = vadd.f32 %v1290, %v1291
    %v1293 = vrot.slane %v1292, 2
    %v1294 = vadd.f32 %v1292, %v1293
    %v1295 = vrot.slane %v1294, 1
    %v1296 = vadd.f32 %v1294, %v1295
    %v1297 = vsel %vm456, %v1275, 0.0
    %v1298 = vrot.slane %v1297, 4
    %v1299 = vadd.f32 %v1297, %v1298
    %v1300 = vrot.slane %v1299, 2
    %v1301 = vadd.f32 %v1299, %v1300
    %v1302 = vrot.slane %v1301, 1
    %v1303 = vadd.f32 %v1301, %v1302
    %v1304 = vsel %vm456, %v1276, 0.0
    %v1305 = vrot.slane %v1304, 4
    %v1306 = vadd.f32 %v1304, %v1305
    %v1307 = vrot.slane %v1306, 2
    %v1308 = vadd.f32 %v1306, %v1307
    %v1309 = vrot.slane %v1308, 1
    %v1310 = vadd.f32 %v1308, %v1309
    %v1311 = vsel %vm456, %v1277, 0.0
    %v1312 = vrot.slane %v1311, 4
    %v1313 = vadd.f32 %v1311, %v1312
    %v1314 = vrot.slane %v1313, 2
    %v1315 = vadd.f32 %v1313, %v1314
    %v1316 = vrot.slane %v1315, 1
    %v1317 = vadd.f32 %v1315, %v1316
    %v1318 = vsel %vm456, %v1278, 0.0
    %v1319 = vrot.slane %v1318, 4
    %v1320 = vadd.f32 %v1318, %v1319
    %v1321 = vrot.slane %v1320, 2
    %v1322 = vadd.f32 %v1320, %v1321
    %v1323 = vrot.slane %v1322, 1
    %v1324 = vadd.f32 %v1322, %v1323
    %v1325 = vsel %vm456, %v1279, 0.0
    %v1326 = vrot.slane %v1325, 4
    %v1327 = vadd.f32 %v1325, %v1326
    %v1328 = vrot.slane %v1327, 2
    %v1329 = vadd.f32 %v1327, %v1328
    %v1330 = vrot.slane %v1329, 1
    %v1331 = vadd.f32 %v1329, %v1330
    %v1332 = vsel %vm456, %v1280, 0.0
    %v1333 = vrot.slane %v1332, 4
    %v1334 = vadd.f32 %v1332, %v1333
    %v1335 = vrot.slane %v1334, 2
    %v1336 = vadd.f32 %v1334, %v1335
    %v1337 = vrot.slane %v1336, 1
    %v1338 = vadd.f32 %v1336, %v1337
    %v1339 = vsel %vm456, %v1281, 0.0
    %v1340 = vrot.slane %v1339, 4
    %v1341 = vadd.f32 %v1339, %v1340
    %v1342 = vrot.slane %v1341, 2
    %v1343 = vadd.f32 %v1341, %v1342
    %v1344 = vrot.slane %v1343, 1
    %v1345 = vadd.f32 %v1343, %v1344
    %v1346 = vsel %vm456, %v1282, 0.0
    %v1347 = vrot.slane %v1346, 4
    %v1348 = vadd.f32 %v1346, %v1347
    %v1349 = vrot.slane %v1348, 2
    %v1350 = vadd.f32 %v1348, %v1349
    %v1351 = vrot.slane %v1350, 1
    %v1352 = vadd.f32 %v1350, %v1351
    %v1353 = vsel %vm456, %v1283, 0.0
    %v1354 = vrot.slane %v1353, 4
    %v1355 = vadd.f32 %v1353, %v1354
    %v1356 = vrot.slane %v1355, 2
    %v1357 = vadd.f32 %v1355, %v1356
    %v1358 = vrot.slane %v1357, 1
    %v1359 = vadd.f32 %v1357, %v1358
    %v1360 = vsel %vm456, %v1284, 0.0
    %v1361 = vrot.slane %v1360, 4
    %v1362 = vadd.f32 %v1360, %v1361
    %v1363 = vrot.slane %v1362, 2
    %v1364 = vadd.f32 %v1362, %v1363
    %v1365 = vrot.slane %v1364, 1
    %v1366 = vadd.f32 %v1364, %v1365
    %v1367 = vsel %vm456, %v1285, 0.0
    %v1368 = vrot.slane %v1367, 4
    %v1369 = vadd.f32 %v1367, %v1368
    %v1370 = vrot.slane %v1369, 2
    %v1371 = vadd.f32 %v1369, %v1370
    %v1372 = vrot.slane %v1371, 1
    %v1373 = vadd.f32 %v1371, %v1372
    %v1374 = vsel %vm456, %v1286, 0.0
    %v1375 = vrot.slane %v1374, 4
    %v1376 = vadd.f32 %v1374, %v1375
    %v1377 = vrot.slane %v1376, 2
    %v1378 = vadd.f32 %v1376, %v1377
    %v1379 = vrot.slane %v1378, 1
    %v1380 = vadd.f32 %v1378, %v1379
    %v1381 = vsel %vm456, %v1287, 0.0
    %v1382 = vrot.slane %v1381, 4
    %v1383 = vadd.f32 %v1381, %v1382
    %v1384 = vrot.slane %v1383, 2
    %v1385 = vadd.f32 %v1383, %v1384
    %v1386 = vrot.slane %v1385, 1
    %v1387 = vadd.f32 %v1385, %v1386
    %v1388 = vsel %vm456, %v1288, 0.0
    %v1389 = vrot.slane %v1388, 4
    %v1390 = vadd.f32 %v1388, %v1389
    %v1391 = vrot.slane %v1390, 2
    %v1392 = vadd.f32 %v1390, %v1391
    %v1393 = vrot.slane %v1392, 1
    %v1394 = vadd.f32 %v1392, %v1393
    %v1395 = vsel %vm456, %v1289, 0.0
    %v1396 = vrot.slane %v1395, 4
    %v1397 = vadd.f32 %v1395, %v1396
    %v1398 = vrot.slane %v1397, 2
    %v1399 = vadd.f32 %v1397, %v1398
    %v1400 = vrot.slane %v1399, 1
    %v1401 = vadd.f32 %v1399, %v1400
    %v1402 = vlaneseq
    %v1403 = vshrl.u32 %v1402, 7
    %v1404 = vsub.s32 0, %v1403
    %v1405 = vrot.slane %v576, %v1404
    %v1406 = vmul.f32 %v1405, %v446
    %v1407 = vmul.f32 %v1405, %v447
    %v1410 = vrot.slane %v1406, 1
    %v1411 = vrot.slane %v1406, 2
    %v1412 = vrot.slane %v1406, 3
    %v1413 = vrot.slane %v1406, 4
    %v1414 = vrot.slane %v1406, 5
    %v1415 = vrot.slane %v1406, 6
    %v1416 = vrot.slane %v1406, 7
    %v1417 = vrot.slane %v1407, 1
    %v1418 = vrot.slane %v1407, 2
    %v1419 = vrot.slane %v1407, 3
    %v1420 = vrot.slane %v1407, 4
    %v1421 = vrot.slane %v1407, 5
    %v1422 = vrot.slane %v1407, 6
    %v1423 = vrot.slane %v1407, 7
    %v1440 = vadd.f32 %v1296, %v1406
    %v1441 = vadd.f32 %v1303, %v1410
    %v1442 = vadd.f32 %v1310, %v1411
    %v1443 = vadd.f32 %v1317, %v1412
    %v1444 = vadd.f32 %v1324, %v1413
    %v1445 = vadd.f32 %v1331, %v1414
    %v1446 = vadd.f32 %v1338, %v1415
    %v1447 = vadd.f32 %v1345, %v1416
    %v1448 = vadd.f32 %v1352, %v1407
    %v1449 = vadd.f32 %v1359, %v1417
    %v1450 = vadd.f32 %v1366, %v1418
    %v1451 = vadd.f32 %v1373, %v1419
    %v1452 = vadd.f32 %v1380, %v1420
    %v1453 = vadd.f32 %v1387, %v1421
    %v1454 = vadd.f32 %v1394, %v1422
    %v1455 = vadd.f32 %v1401, %v1423
    %v1456 = vxor.u32 %v254, 2147483648
    %v1457 = vxor.u32 %v260, 2147483648
    %v1458 = vmul.f32 %v1456, 1.442695
    %v1459 = vpow.pop %v1458
    %v1460 = vmul.f32 %v1457, 1.442695
    %v1461 = vpow.pop %v1460
    %v1462 = vadd.f32 %v1459, 1.0
    %v1463 = vadd.f32 %v1461, 1.0
    %v1464 = vrcp.pop %v1462
    %v1465 = vmul.f32 1.0, %v1464
    %v1466 = vrcp.pop %v1463
    %v1467 = vmul.f32 1.0, %v1466
    %v1468 = vmul.f32 %v254, %v1465
    %v1469 = vmul.f32 %v260, %v1467
    %v1472 = vrot.slane %v1468, 1
    %v1473 = vrot.slane %v1468, 2
    %v1474 = vrot.slane %v1468, 3
    %v1475 = vrot.slane %v1468, 4
    %v1476 = vrot.slane %v1468, 5
    %v1477 = vrot.slane %v1468, 6
    %v1478 = vrot.slane %v1468, 7
    %v1479 = vrot.slane %v1469, 1
    %v1480 = vrot.slane %v1469, 2
    %v1481 = vrot.slane %v1469, 3
    %v1482 = vrot.slane %v1469, 4
    %v1483 = vrot.slane %v1469, 5
    %v1484 = vrot.slane %v1469, 6
    %v1485 = vrot.slane %v1469, 7
    %1486 = vrot.lane.b32.xlu0 %v1468, 64
    %v1487 = vpop.permute.xlu0 %1486
    %1488 = vrot.lane.b32.xlu0 %v1472, 64
    %v1489 = vpop.permute.xlu0 %1488
    %1490 = vrot.lane.b32.xlu0 %v1473, 64
    %v1491 = vpop.permute.xlu0 %1490
    %1492 = vrot.lane.b32.xlu0 %v1474, 64
    %v1493 = vpop.permute.xlu0 %1492
    %1494 = vrot.lane.b32.xlu0 %v1475, 64
    %v1495 = vpop.permute.xlu0 %1494
    %1496 = vrot.lane.b32.xlu0 %v1476, 64
    %v1497 = vpop.permute.xlu0 %1496
    %1498 = vrot.lane.b32.xlu0 %v1477, 64
    %v1499 = vpop.permute.xlu0 %1498
    %1500 = vrot.lane.b32.xlu0 %v1478, 64
    %v1501 = vpop.permute.xlu0 %1500
    %1502 = vrot.lane.b32.xlu0 %v1469, 64
    %v1503 = vpop.permute.xlu0 %1502
    %1504 = vrot.lane.b32.xlu0 %v1479, 64
    %v1505 = vpop.permute.xlu0 %1504
    %1506 = vrot.lane.b32.xlu0 %v1480, 64
    %v1507 = vpop.permute.xlu0 %1506
    %1508 = vrot.lane.b32.xlu0 %v1481, 64
    %v1509 = vpop.permute.xlu0 %1508
    %1510 = vrot.lane.b32.xlu0 %v1482, 64
    %v1511 = vpop.permute.xlu0 %1510
    %1512 = vrot.lane.b32.xlu0 %v1483, 64
    %v1513 = vpop.permute.xlu0 %1512
    %1514 = vrot.lane.b32.xlu0 %v1484, 64
    %v1515 = vpop.permute.xlu0 %1514
    %1516 = vrot.lane.b32.xlu0 %v1485, 64
    %v1517 = vpop.permute.xlu0 %1516
    %v1534 = vmul.f32 %v1440, %v1487
    %v1535 = vmul.f32 %v1441, %v1489
    %v1536 = vmul.f32 %v1442, %v1491
    %v1537 = vmul.f32 %v1443, %v1493
    %v1538 = vmul.f32 %v1444, %v1495
    %v1539 = vmul.f32 %v1445, %v1497
    %v1540 = vmul.f32 %v1446, %v1499
    %v1541 = vmul.f32 %v1447, %v1501
    %v1542 = vmul.f32 %v1448, %v1503
    %v1543 = vmul.f32 %v1449, %v1505
    %v1544 = vmul.f32 %v1450, %v1507
    %v1545 = vmul.f32 %v1451, %v1509
    %v1546 = vmul.f32 %v1452, %v1511
    %v1547 = vmul.f32 %v1453, %v1513
    %v1548 = vmul.f32 %v1454, %v1515
    %v1549 = vmul.f32 %v1455, %v1517
    %v1550 = vld [vmem:[#allocation12] sm:$0xff]
    %v1551 = vld [vmem:[#allocation12 + $0x8] sm:$0xff]
    %v1552 = vmul.f32 %v256, %v1550
    %v1553 = vmul.f32 %v262, %v1551
    %v1554 = vld [vmem:[#allocation12 + $0x10] sm:$0xff]
    %v1555 = vld [vmem:[#allocation12 + $0x18] sm:$0xff]
    %v1556 = vmul.f32 %v331, %v1554
    %v1557 = vmul.f32 %v336, %v1555
    %v1558 = vadd.f32 %v1552, %v1556
    %v1559 = vadd.f32 %v1553, %v1557
    %1562 = vrot.lane.b32.xlu0 %v1558, 64
    %v1563 = vpop.permute.xlu0 %1562
    %1564 = vrot.lane.b32.xlu0 %v1559, 64
    %v1565 = vpop.permute.xlu0 %1564
    %1568 = vxpose.xlu0.b32.start [1/16] %v1563, 128
    %1569 = vxpose.xlu0.b32.cont [2/16] %v1565, 128
    %1570 = vxpose.xlu0.b32.cont [3/16] 0.0, 128
    %1571 = vxpose.xlu0.b32.cont [4/16] 0.0, 128
    %1572 = vxpose.xlu0.b32.cont [5/16] 0.0, 128
    %1573 = vxpose.xlu0.b32.cont [6/16] 0.0, 128
    %1574 = vxpose.xlu0.b32.cont [7/16] 0.0, 128
    %1575 = vxpose.xlu0.b32.cont [8/16] 0.0, 128
    %1576 = vxpose.xlu0.b32.cont [9/16] 0.0, 128
    %1577 = vxpose.xlu0.b32.cont [10/16] 0.0, 128
    %1578 = vxpose.xlu0.b32.cont [11/16] 0.0, 128
    %1579 = vxpose.xlu0.b32.cont [12/16] 0.0, 128
    %1580 = vxpose.xlu0.b32.cont [13/16] 0.0, 128
    %1581 = vxpose.xlu0.b32.cont [14/16] 0.0, 128
    %1582 = vxpose.xlu0.b32.cont [15/16] 0.0, 128
    %1583 = vxpose.xlu0.b32.end [16/16] 0.0, 128
    %v1584 = vpop.trf.xlu0
    %v1585 = vpop.trf.xlu0
    %v1586 = vpop.trf.xlu0
    %v1587 = vpop.trf.xlu0
    %v1588 = vpop.trf.xlu0
    %v1589 = vpop.trf.xlu0
    %v1590 = vpop.trf.xlu0
    %v1591 = vpop.trf.xlu0
    %v1592 = vpop.trf.xlu0
    %v1593 = vpop.trf.xlu0
    %v1594 = vpop.trf.xlu0
    %v1595 = vpop.trf.xlu0
    %v1596 = vpop.trf.xlu0
    %v1597 = vpop.trf.xlu0
    %v1598 = vpop.trf.xlu0
    %v1599 = vpop.trf.xlu0
    %v1600 = vld [vmem:[#allocation13] sm:$0xff]
    %v1601 = vld [vmem:[#allocation13 + $0x8] sm:$0xff]
    %vm1602 = vcmask 130048
    %v1603 = vsel %vm1602, %v1558, 0
    %v1605 = vsel %vm1602, %v1559, 0
    %1607 = vmatprep.subr.mxu0 0.0
    %1608 = vmatpush1.msra.mxu0 0.0
    %1609 = vmatprep.subr.mxu0 0.0
    %1610 = vmatpush1.msra.mxu0 0.0
    %1611 = vmatprep.subr.mxu0 0.0
    %1612 = vmatpush1.msra.mxu0 0.0
    %1613 = vmatprep.subr.mxu0 0.0
    %1614 = vmatpush1.msra.mxu0 0.0
    %1615 = vmatprep.subr.mxu0 0.0
    %1616 = vmatpush1.msra.mxu0 0.0
    %1617 = vmatprep.subr.mxu0 0.0
    %1618 = vmatpush1.msra.mxu0 0.0
    %1619 = vmatprep.subr.mxu0 0.0
    %1620 = vmatpush1.msra.mxu0 0.0
    %1621 = vmatprep.subr.mxu0 0.0
    %1622 = vmatpush1.msra.mxu0 0.0
    %1623 = vmatprep.subr.mxu0 0.0
    %1624 = vmatpush1.msra.mxu0 0.0
    %1625 = vmatprep.subr.mxu0 0.0
    %1626 = vmatpush1.msra.mxu0 0.0
    %1627 = vmatprep.subr.mxu0 0.0
    %1628 = vmatpush1.msra.mxu0 0.0
    %1629 = vmatprep.subr.mxu0 0.0
    %1630 = vmatpush1.msra.mxu0 0.0
    %1631 = vmatprep.subr.mxu0 0.0
    %1632 = vmatpush1.msra.mxu0 0.0
    %1633 = vmatprep.subr.mxu0 0.0
    %1634 = vmatpush1.msra.mxu0 0.0
    %1635 = vmatprep.subr.mxu0 0.0
    %1636 = vmatpush1.msra.mxu0 %v1585
    %1637 = vmatprep.subr.mxu0 0.0
    %1638 = vmatpush1.msra.mxu0 %v1584
    %1639 = vmatprep.subr.mxu0 0.0
    %1640 = vmatpush2.msra.mxu0 0.0
    %1641 = vmatprep.subr.mxu0 0.0
    %1642 = vmatpush2.msra.mxu0 0.0
    %1643 = vmatprep.subr.mxu0 0.0
    %1644 = vmatpush2.msra.mxu0 0.0
    %1645 = vmatprep.subr.mxu0 0.0
    %1646 = vmatpush2.msra.mxu0 0.0
    %1647 = vmatprep.subr.mxu0 0.0
    %1648 = vmatpush2.msra.mxu0 0.0
    %1649 = vmatprep.subr.mxu0 0.0
    %1650 = vmatpush2.msra.mxu0 0.0
    %1651 = vmatprep.subr.mxu0 0.0
    %1652 = vmatpush2.msra.mxu0 0.0
    %1653 = vmatprep.subr.mxu0 0.0
    %1654 = vmatpush2.msra.mxu0 0.0
    %1655 = vmatprep.subr.mxu0 0.0
    %1656 = vmatpush2.msra.mxu0 0.0
    %1657 = vmatprep.subr.mxu0 0.0
    %1658 = vmatpush2.msra.mxu0 0.0
    %1659 = vmatprep.subr.mxu0 0.0
    %1660 = vmatpush2.msra.mxu0 0.0
    %1661 = vmatprep.subr.mxu0 0.0
    %1662 = vmatpush2.msra.mxu0 0.0
    %1663 = vmatprep.subr.mxu0 0.0
    %1664 = vmatpush2.msra.mxu0 0.0
    %1665 = vmatprep.subr.mxu0 0.0
    %1666 = vmatpush2.msra.mxu0 0.0
    %1667 = vmatprep.subr.mxu0 0.0
    %1668 = vmatpush2.msra.mxu0 0.0
    %1669 = vmatprep.subr.mxu0 0.0
    %1670 = vmatpush2.msra.mxu0 0.0
    %1671 = vmatprep.mubr.f32.mxu0 0.0
    %1672 = vmatmul.mubr.f32.gmra.mxu0 %v1603
    %v1673 = vpop.f32.mrf.mxu0
    %v1674 = vadd.f32 0.0, %v1673
    %v1675 = vpop.f32.mrf.mxu0
    %1676 = vmatprep.mubr.f32.mxu0 0.0
    %1677 = vmatmul.mubr.f32.gmra.mxu0 %v1605
    %v1678 = vpop.f32.mrf.mxu0
    %v1679 = vadd.f32 0.0, %v1678
    %v1680 = vpop.f32.mrf.mxu0
    %1681 = vdwg.mxu0
    %v1682 = vmul.f32 %v1674, 0.25
    %v1683 = vmul.f32 %v1679, 0.25
    %v1684 = vadd.f32 %v1682, %v1600
    %v1685 = vadd.f32 %v1683, %v1601
    %v1686 = vsel %vm1602, %v1684, -inf
    %1687 = vmax.xlane.f32.xlu0 %v1686
    %v1688 = vpop.xlane.xlu0 %1687
    %v1689 = vsel %vm1602, %v1685, -inf
    %1690 = vmax.xlane.f32.xlu0 %v1689
    %v1691 = vpop.xlane.xlu0 %1690
    %v1692 = vsub.f32 %v1684, %v1688
    %v1693 = vsub.f32 %v1685, %v1691
    %v1694 = vmul.f32 %v1692, 1.442695
    %v1695 = vpow.pop %v1694
    %v1696 = vmul.f32 %v1693, 1.442695
    %v1697 = vpow.pop %v1696
    %v1698 = vsel %vm1602, %v1695, 0.0
    %1699 = vadd.xlane.f32.xlu0 %v1698
    %v1700 = vpop.xlane.xlu0 %1699
    %v1701 = vsel %vm1602, %v1697, 0.0
    %1702 = vadd.xlane.f32.xlu0 %v1701
    %v1703 = vpop.xlane.xlu0 %1702
    %v1704 = vrcp.pop %v1700
    %v1705 = vmul.f32 %v1695, %v1704
    %v1706 = vrcp.pop %v1703
    %v1707 = vmul.f32 %v1697, %v1706
    %1708 = vrot.lane.b32.xlu0 %v1558, 32
    %v1709 = vpop.permute.xlu0 %1708
    %1710 = vrot.lane.b32.xlu0 %v1559, 32
    %v1711 = vpop.permute.xlu0 %1710
    %v1715 = vsel %vm1602, %v1705, 0
    %v1718 = vsel %vm1602, %v1707, 0
    %1720 = vmatprep.subr.mxu0 0.0
    %1721 = vmatpush1.msra.mxu0 0.0
    %1722 = vmatprep.subr.mxu0 0.0
    %1723 = vmatpush1.msra.mxu0 0.0
    %1724 = vmatprep.subr.mxu0 0.0
    %1725 = vmatpush1.msra.mxu0 0.0
    %1726 = vmatprep.subr.mxu0 0.0
    %1727 = vmatpush1.msra.mxu0 0.0
    %1728 = vmatprep.subr.mxu0 0.0
    %1729 = vmatpush1.msra.mxu0 0.0
    %1730 = vmatprep.subr.mxu0 0.0
    %1731 = vmatpush1.msra.mxu0 0.0
    %1732 = vmatprep.subr.mxu0 0.0
    %1733 = vmatpush1.msra.mxu0 0.0
    %1734 = vmatprep.subr.mxu0 0.0
    %1735 = vmatpush1.msra.mxu0 0.0
    %1736 = vmatprep.subr.mxu0 0.0
    %1737 = vmatpush1.msra.mxu0 0.0
    %1738 = vmatprep.subr.mxu0 0.0
    %1739 = vmatpush1.msra.mxu0 0.0
    %1740 = vmatprep.subr.mxu0 0.0
    %1741 = vmatpush1.msra.mxu0 0.0
    %1742 = vmatprep.subr.mxu0 0.0
    %1743 = vmatpush1.msra.mxu0 0.0
    %1744 = vmatprep.subr.mxu0 0.0
    %1745 = vmatpush1.msra.mxu0 0.0
    %1746 = vmatprep.subr.mxu0 0.0
    %1747 = vmatpush1.msra.mxu0 0.0
    %1748 = vmatprep.subr.mxu0 0.0
    %1749 = vmatpush1.msra.mxu0 %v1711
    %1750 = vmatprep.subr.mxu0 0.0
    %1751 = vmatpush1.msra.mxu0 %v1709
    %1752 = vmatprep.subr.mxu0 0.0
    %1753 = vmatpush2.msra.mxu0 0.0
    %1754 = vmatprep.subr.mxu0 0.0
    %1755 = vmatpush2.msra.mxu0 0.0
    %1756 = vmatprep.subr.mxu0 0.0
    %1757 = vmatpush2.msra.mxu0 0.0
    %1758 = vmatprep.subr.mxu0 0.0
    %1759 = vmatpush2.msra.mxu0 0.0
    %1760 = vmatprep.subr.mxu0 0.0
    %1761 = vmatpush2.msra.mxu0 0.0
    %1762 = vmatprep.subr.mxu0 0.0
    %1763 = vmatpush2.msra.mxu0 0.0
    %1764 = vmatprep.subr.mxu0 0.0
    %1765 = vmatpush2.msra.mxu0 0.0
    %1766 = vmatprep.subr.mxu0 0.0
    %1767 = vmatpush2.msra.mxu0 0.0
    %1768 = vmatprep.subr.mxu0 0.0
    %1769 = vmatpush2.msra.mxu0 0.0
    %1770 = vmatprep.subr.mxu0 0.0
    %1771 = vmatpush2.msra.mxu0 0.0
    %1772 = vmatprep.subr.mxu0 0.0
    %1773 = vmatpush2.msra.mxu0 0.0
    %1774 = vmatprep.subr.mxu0 0.0
    %1775 = vmatpush2.msra.mxu0 0.0
    %1776 = vmatprep.subr.mxu0 0.0
    %1777 = vmatpush2.msra.mxu0 0.0
    %1778 = vmatprep.subr.mxu0 0.0
    %1779 = vmatpush2.msra.mxu0 0.0
    %1780 = vmatprep.subr.mxu0 0.0
    %1781 = vmatpush2.msra.mxu0 0.0
    %1782 = vmatprep.subr.mxu0 0.0
    %1783 = vmatpush2.msra.mxu0 0.0
    %1784 = vmatprep.mubr.f32.mxu0 0.0
    %1785 = vmatmul.mubr.f32.gmra.mxu0 %v1715
    %v1786 = vpop.f32.mrf.mxu0
    %v1787 = vadd.f32 0.0, %v1786
    %v1788 = vpop.f32.mrf.mxu0
    %1789 = vmatprep.mubr.f32.mxu0 0.0
    %1790 = vmatmul.mubr.f32.gmra.mxu0 %v1718
    %v1791 = vpop.f32.mrf.mxu0
    %v1792 = vadd.f32 0.0, %v1791
    %v1793 = vpop.f32.mrf.mxu0
    %1794 = vdwg.mxu0
    %1795 = vst.msk [vmem:[#allocation2] sm:$0xff] %vm1602, %v1787
    %1796 = vst.msk [vmem:[#allocation2 + $0x8] sm:$0xff] %vm1602, %v1792
    %1797 = vrot.lane.b32.xlu0 %v1558, 112
    %v1798 = vpop.permute.xlu0 %1797
    %1799 = vrot.lane.b32.xlu0 %v1559, 112
    %v1800 = vpop.permute.xlu0 %1799
    %v1801 = vsel %vm1602, %v1798, 0
    %v1803 = vsel %vm1602, %v1800, 0
    %1805 = vmatprep.subr.mxu0 0.0
    %1806 = vmatpush1.msra.mxu0 0.0
    %1807 = vmatprep.subr.mxu0 0.0
    %1808 = vmatpush1.msra.mxu0 0.0
    %1809 = vmatprep.subr.mxu0 0.0
    %1810 = vmatpush1.msra.mxu0 0.0
    %1811 = vmatprep.subr.mxu0 0.0
    %1812 = vmatpush1.msra.mxu0 0.0
    %1813 = vmatprep.subr.mxu0 0.0
    %1814 = vmatpush1.msra.mxu0 0.0
    %1815 = vmatprep.subr.mxu0 0.0
    %1816 = vmatpush1.msra.mxu0 0.0
    %1817 = vmatprep.subr.mxu0 0.0
    %1818 = vmatpush1.msra.mxu0 0.0
    %1819 = vmatprep.subr.mxu0 0.0
    %1820 = vmatpush1.msra.mxu0 0.0
    %1821 = vmatprep.subr.mxu0 0.0
    %1822 = vmatpush1.msra.mxu0 0.0
    %1823 = vmatprep.subr.mxu0 0.0
    %1824 = vmatpush1.msra.mxu0 0.0
    %1825 = vmatprep.subr.mxu0 0.0
    %1826 = vmatpush1.msra.mxu0 0.0
    %1827 = vmatprep.subr.mxu0 0.0
    %1828 = vmatpush1.msra.mxu0 0.0
    %1829 = vmatprep.subr.mxu0 0.0
    %1830 = vmatpush1.msra.mxu0 0.0
    %1831 = vmatprep.subr.mxu0 0.0
    %1832 = vmatpush1.msra.mxu0 0.0
    %1833 = vmatprep.subr.mxu0 0.0
    %1834 = vmatpush1.msra.mxu0 %v1585
    %1835 = vmatprep.subr.mxu0 0.0
    %1836 = vmatpush1.msra.mxu0 %v1584
    %1837 = vmatprep.subr.mxu0 0.0
    %1838 = vmatpush2.msra.mxu0 0.0
    %1839 = vmatprep.subr.mxu0 0.0
    %1840 = vmatpush2.msra.mxu0 0.0
    %1841 = vmatprep.subr.mxu0 0.0
    %1842 = vmatpush2.msra.mxu0 0.0
    %1843 = vmatprep.subr.mxu0 0.0
    %1844 = vmatpush2.msra.mxu0 0.0
    %1845 = vmatprep.subr.mxu0 0.0
    %1846 = vmatpush2.msra.mxu0 0.0
    %1847 = vmatprep.subr.mxu0 0.0
    %1848 = vmatpush2.msra.mxu0 0.0
    %1849 = vmatprep.subr.mxu0 0.0
    %1850 = vmatpush2.msra.mxu0 0.0
    %1851 = vmatprep.subr.mxu0 0.0
    %1852 = vmatpush2.msra.mxu0 0.0
    %1853 = vmatprep.subr.mxu0 0.0
    %1854 = vmatpush2.msra.mxu0 0.0
    %1855 = vmatprep.subr.mxu0 0.0
    %1856 = vmatpush2.msra.mxu0 0.0
    %1857 = vmatprep.subr.mxu0 0.0
    %1858 = vmatpush2.msra.mxu0 0.0
    %1859 = vmatprep.subr.mxu0 0.0
    %1860 = vmatpush2.msra.mxu0 0.0
    %1861 = vmatprep.subr.mxu0 0.0
    %1862 = vmatpush2.msra.mxu0 0.0
    %1863 = vmatprep.subr.mxu0 0.0
    %1864 = vmatpush2.msra.mxu0 0.0
    %1865 = vmatprep.subr.mxu0 0.0
    %1866 = vmatpush2.msra.mxu0 0.0
    %1867 = vmatprep.subr.mxu0 0.0
    %1868 = vmatpush2.msra.mxu0 0.0
    %1869 = vmatprep.mubr.f32.mxu0 0.0
    %1870 = vmatmul.mubr.f32.gmra.mxu0 %v1801
    %v1871 = vpop.f32.mrf.mxu0
    %v1872 = vadd.f32 0.0, %v1871
    %v1873 = vpop.f32.mrf.mxu0
    %1874 = vmatprep.mubr.f32.mxu0 0.0
    %1875 = vmatmul.mubr.f32.gmra.mxu0 %v1803
    %v1876 = vpop.f32.mrf.mxu0
    %v1877 = vadd.f32 0.0, %v1876
    %v1878 = vpop.f32.mrf.mxu0
    %1879 = vdwg.mxu0
    %v1880 = vmul.f32 %v1872, 0.25
    %v1881 = vmul.f32 %v1877, 0.25
    %v1882 = vadd.f32 %v1880, %v1600
    %v1883 = vadd.f32 %v1881, %v1601
    %v1884 = vsel %vm1602, %v1882, -inf
    %1885 = vmax.xlane.f32.xlu0 %v1884
    %v1886 = vpop.xlane.xlu0 %1885
    %v1887 = vsel %vm1602, %v1883, -inf
    %1888 = vmax.xlane.f32.xlu0 %v1887
    %v1889 = vpop.xlane.xlu0 %1888
    %v1890 = vsub.f32 %v1882, %v1886
    %v1891 = vsub.f32 %v1883, %v1889
    %v1892 = vmul.f32 %v1890, 1.442695
    %v1893 = vpow.pop %v1892
    %v1894 = vmul.f32 %v1891, 1.442695
    %v1895 = vpow.pop %v1894
    %v1896 = vsel %vm1602, %v1893, 0.0
    %1897 = vadd.xlane.f32.xlu0 %v1896
    %v1898 = vpop.xlane.xlu0 %1897
    %v1899 = vsel %vm1602, %v1895, 0.0
    %1900 = vadd.xlane.f32.xlu0 %v1899
    %v1901 = vpop.xlane.xlu0 %1900
    %v1902 = vrcp.pop %v1898
    %v1903 = vmul.f32 %v1893, %v1902
    %v1904 = vrcp.pop %v1901
    %v1905 = vmul.f32 %v1895, %v1904
    %v1907 = vsel %vm1602, %v1903, 0
    %v1910 = vsel %vm1602, %v1905, 0
    %1912 = vmatprep.subr.mxu0 0.0
    %1913 = vmatpush1.msra.mxu0 0.0
    %1914 = vmatprep.subr.mxu0 0.0
    %1915 = vmatpush1.msra.mxu0 0.0
    %1916 = vmatprep.subr.mxu0 0.0
    %1917 = vmatpush1.msra.mxu0 0.0
    %1918 = vmatprep.subr.mxu0 0.0
    %1919 = vmatpush1.msra.mxu0 0.0
    %1920 = vmatprep.subr.mxu0 0.0
    %1921 = vmatpush1.msra.mxu0 0.0
    %1922 = vmatprep.subr.mxu0 0.0
    %1923 = vmatpush1.msra.mxu0 0.0
    %1924 = vmatprep.subr.mxu0 0.0
    %1925 = vmatpush1.msra.mxu0 0.0
    %1926 = vmatprep.subr.mxu0 0.0
    %1927 = vmatpush1.msra.mxu0 0.0
    %1928 = vmatprep.subr.mxu0 0.0
    %1929 = vmatpush1.msra.mxu0 0.0
    %1930 = vmatprep.subr.mxu0 0.0
    %1931 = vmatpush1.msra.mxu0 0.0
    %1932 = vmatprep.subr.mxu0 0.0
    %1933 = vmatpush1.msra.mxu0 0.0
    %1934 = vmatprep.subr.mxu0 0.0
    %1935 = vmatpush1.msra.mxu0 0.0
    %1936 = vmatprep.subr.mxu0 0.0
    %1937 = vmatpush1.msra.mxu0 0.0
    %1938 = vmatprep.subr.mxu0 0.0
    %1939 = vmatpush1.msra.mxu0 0.0
    %1940 = vmatprep.subr.mxu0 0.0
    %1941 = vmatpush1.msra.mxu0 %v1711
    %1942 = vmatprep.subr.mxu0 0.0
    %1943 = vmatpush1.msra.mxu0 %v1709
    %1944 = vmatprep.subr.mxu0 0.0
    %1945 = vmatpush2.msra.mxu0 0.0
    %1946 = vmatprep.subr.mxu0 0.0
    %1947 = vmatpush2.msra.mxu0 0.0
    %1948 = vmatprep.subr.mxu0 0.0
    %1949 = vmatpush2.msra.mxu0 0.0
    %1950 = vmatprep.subr.mxu0 0.0
    %1951 = vmatpush2.msra.mxu0 0.0
    %1952 = vmatprep.subr.mxu0 0.0
    %1953 = vmatpush2.msra.mxu0 0.0
    %1954 = vmatprep.subr.mxu0 0.0
    %1955 = vmatpush2.msra.mxu0 0.0
    %1956 = vmatprep.subr.mxu0 0.0
    %1957 = vmatpush2.msra.mxu0 0.0
    %1958 = vmatprep.subr.mxu0 0.0
    %1959 = vmatpush2.msra.mxu0 0.0
    %1960 = vmatprep.subr.mxu0 0.0
    %1961 = vmatpush2.msra.mxu0 0.0
    %1962 = vmatprep.subr.mxu0 0.0
    %1963 = vmatpush2.msra.mxu0 0.0
    %1964 = vmatprep.subr.mxu0 0.0
    %1965 = vmatpush2.msra.mxu0 0.0
    %1966 = vmatprep.subr.mxu0 0.0
    %1967 = vmatpush2.msra.mxu0 0.0
    %1968 = vmatprep.subr.mxu0 0.0
    %1969 = vmatpush2.msra.mxu0 0.0
    %1970 = vmatprep.subr.mxu0 0.0
    %1971 = vmatpush2.msra.mxu0 0.0
    %1972 = vmatprep.subr.mxu0 0.0
    %1973 = vmatpush2.msra.mxu0 0.0
    %1974 = vmatprep.subr.mxu0 0.0
    %1975 = vmatpush2.msra.mxu0 0.0
    %1976 = vmatprep.mubr.f32.mxu0 0.0
    %1977 = vmatmul.mubr.f32.gmra.mxu0 %v1907
    %v1978 = vpop.f32.mrf.mxu0
    %v1979 = vadd.f32 0.0, %v1978
    %v1980 = vpop.f32.mrf.mxu0
    %1981 = vmatprep.mubr.f32.mxu0 0.0
    %1982 = vmatmul.mubr.f32.gmra.mxu0 %v1910
    %v1983 = vpop.f32.mrf.mxu0
    %v1984 = vadd.f32 0.0, %v1983
    %v1985 = vpop.f32.mrf.mxu0
    %1986 = vdwg.mxu0
    %1989 = vrot.lane.b32.xlu0 %v1979, 16
    %v1990 = vpop.permute.xlu0 %1989
    %1991 = vrot.lane.b32.xlu0 %v1984, 16
    %v1992 = vpop.permute.xlu0 %1991
    %vm1995 = vcmask 261248
    %1996 = vst.msk [vmem:[#allocation2] sm:$0xff] %vm1995, %v1990
    %1997 = vst.msk [vmem:[#allocation2 + $0x8] sm:$0xff] %vm1995, %v1992
    %1998 = vrot.lane.b32.xlu0 %v1558, 96
    %v1999 = vpop.permute.xlu0 %1998
    %2000 = vrot.lane.b32.xlu0 %v1559, 96
    %v2001 = vpop.permute.xlu0 %2000
    %v2002 = vsel %vm1602, %v1999, 0
    %v2004 = vsel %vm1602, %v2001, 0
    %2006 = vmatprep.subr.mxu0 0.0
    %2007 = vmatpush1.msra.mxu0 0.0
    %2008 = vmatprep.subr.mxu0 0.0
    %2009 = vmatpush1.msra.mxu0 0.0
    %2010 = vmatprep.subr.mxu0 0.0
    %2011 = vmatpush1.msra.mxu0 0.0
    %2012 = vmatprep.subr.mxu0 0.0
    %2013 = vmatpush1.msra.mxu0 0.0
    %2014 = vmatprep.subr.mxu0 0.0
    %2015 = vmatpush1.msra.mxu0 0.0
    %2016 = vmatprep.subr.mxu0 0.0
    %2017 = vmatpush1.msra.mxu0 0.0
    %2018 = vmatprep.subr.mxu0 0.0
    %2019 = vmatpush1.msra.mxu0 0.0
    %2020 = vmatprep.subr.mxu0 0.0
    %2021 = vmatpush1.msra.mxu0 0.0
    %2022 = vmatprep.subr.mxu0 0.0
    %2023 = vmatpush1.msra.mxu0 0.0
    %2024 = vmatprep.subr.mxu0 0.0
    %2025 = vmatpush1.msra.mxu0 0.0
    %2026 = vmatprep.subr.mxu0 0.0
    %2027 = vmatpush1.msra.mxu0 0.0
    %2028 = vmatprep.subr.mxu0 0.0
    %2029 = vmatpush1.msra.mxu0 0.0
    %2030 = vmatprep.subr.mxu0 0.0
    %2031 = vmatpush1.msra.mxu0 0.0
    %2032 = vmatprep.subr.mxu0 0.0
    %2033 = vmatpush1.msra.mxu0 0.0
    %2034 = vmatprep.subr.mxu0 0.0
    %2035 = vmatpush1.msra.mxu0 %v1587
    %2036 = vmatprep.subr.mxu0 0.0
    %2037 = vmatpush1.msra.mxu0 %v1586
    %2038 = vmatprep.subr.mxu0 0.0
    %2039 = vmatpush2.msra.mxu0 0.0
    %2040 = vmatprep.subr.mxu0 0.0
    %2041 = vmatpush2.msra.mxu0 0.0
    %2042 = vmatprep.subr.mxu0 0.0
    %2043 = vmatpush2.msra.mxu0 0.0
    %2044 = vmatprep.subr.mxu0 0.0
    %2045 = vmatpush2.msra.mxu0 0.0
    %2046 = vmatprep.subr.mxu0 0.0
    %2047 = vmatpush2.msra.mxu0 0.0
    %2048 = vmatprep.subr.mxu0 0.0
    %2049 = vmatpush2.msra.mxu0 0.0
    %2050 = vmatprep.subr.mxu0 0.0
    %2051 = vmatpush2.msra.mxu0 0.0
    %2052 = vmatprep.subr.mxu0 0.0
    %2053 = vmatpush2.msra.mxu0 0.0
    %2054 = vmatprep.subr.mxu0 0.0
    %2055 = vmatpush2.msra.mxu0 0.0
    %2056 = vmatprep.subr.mxu0 0.0
    %2057 = vmatpush2.msra.mxu0 0.0
    %2058 = vmatprep.subr.mxu0 0.0
    %2059 = vmatpush2.msra.mxu0 0.0
    %2060 = vmatprep.subr.mxu0 0.0
    %2061 = vmatpush2.msra.mxu0 0.0
    %2062 = vmatprep.subr.mxu0 0.0
    %2063 = vmatpush2.msra.mxu0 0.0
    %2064 = vmatprep.subr.mxu0 0.0
    %2065 = vmatpush2.msra.mxu0 0.0
    %2066 = vmatprep.subr.mxu0 0.0
    %2067 = vmatpush2.msra.mxu0 0.0
    %2068 = vmatprep.subr.mxu0 0.0
    %2069 = vmatpush2.msra.mxu0 0.0
    %2070 = vmatprep.mubr.f32.mxu0 0.0
    %2071 = vmatmul.mubr.f32.gmra.mxu0 %v2002
    %v2072 = vpop.f32.mrf.mxu0
    %v2073 = vadd.f32 0.0, %v2072
    %v2074 = vpop.f32.mrf.mxu0
    %2075 = vmatprep.mubr.f32.mxu0 0.0
    %2076 = vmatmul.mubr.f32.gmra.mxu0 %v2004
    %v2077 = vpop.f32.mrf.mxu0
    %v2078 = vadd.f32 0.0, %v2077
    %v2079 = vpop.f32.mrf.mxu0
    %2080 = vdwg.mxu0
    %v2081 = vmul.f32 %v2073, 0.25
    %v2082 = vmul.f32 %v2078, 0.25
    %v2083 = vadd.f32 %v2081, %v1600
    %v2084 = vadd.f32 %v2082, %v1601
    %v2085 = vsel %vm1602, %v2083, -inf
    %2086 = vmax.xlane.f32.xlu0 %v2085
    %v2087 = vpop.xlane.xlu0 %2086
    %v2088 = vsel %vm1602, %v2084, -inf
    %2089 = vmax.xlane.f32.xlu0 %v2088
    %v2090 = vpop.xlane.xlu0 %2089
    %v2091 = vsub.f32 %v2083, %v2087
    %v2092 = vsub.f32 %v2084, %v2090
    %v2093 = vmul.f32 %v2091, 1.442695
    %v2094 = vpow.pop %v2093
    %v2095 = vmul.f32 %v2092, 1.442695
    %v2096 = vpow.pop %v2095
    %v2097 = vsel %vm1602, %v2094, 0.0
    %2098 = vadd.xlane.f32.xlu0 %v2097
    %v2099 = vpop.xlane.xlu0 %2098
    %v2100 = vsel %vm1602, %v2096, 0.0
    %2101 = vadd.xlane.f32.xlu0 %v2100
    %v2102 = vpop.xlane.xlu0 %2101
    %v2103 = vrcp.pop %v2099
    %v2104 = vmul.f32 %v2094, %v2103
    %v2105 = vrcp.pop %v2102
    %v2106 = vmul.f32 %v2096, %v2105
    %2107 = vrot.lane.b32.xlu0 %v1558, 16
    %v2108 = vpop.permute.xlu0 %2107
    %2109 = vrot.lane.b32.xlu0 %v1559, 16
    %v2110 = vpop.permute.xlu0 %2109
    %v2114 = vsel %vm1602, %v2104, 0
    %v2117 = vsel %vm1602, %v2106, 0
    %2119 = vmatprep.subr.mxu0 0.0
    %2120 = vmatpush1.msra.mxu0 0.0
    %2121 = vmatprep.subr.mxu0 0.0
    %2122 = vmatpush1.msra.mxu0 0.0
    %2123 = vmatprep.subr.mxu0 0.0
    %2124 = vmatpush1.msra.mxu0 0.0
    %2125 = vmatprep.subr.mxu0 0.0
    %2126 = vmatpush1.msra.mxu0 0.0
    %2127 = vmatprep.subr.mxu0 0.0
    %2128 = vmatpush1.msra.mxu0 0.0
    %2129 = vmatprep.subr.mxu0 0.0
    %2130 = vmatpush1.msra.mxu0 0.0
    %2131 = vmatprep.subr.mxu0 0.0
    %2132 = vmatpush1.msra.mxu0 0.0
    %2133 = vmatprep.subr.mxu0 0.0
    %2134 = vmatpush1.msra.mxu0 0.0
    %2135 = vmatprep.subr.mxu0 0.0
    %2136 = vmatpush1.msra.mxu0 0.0
    %2137 = vmatprep.subr.mxu0 0.0
    %2138 = vmatpush1.msra.mxu0 0.0
    %2139 = vmatprep.subr.mxu0 0.0
    %2140 = vmatpush1.msra.mxu0 0.0
    %2141 = vmatprep.subr.mxu0 0.0
    %2142 = vmatpush1.msra.mxu0 0.0
    %2143 = vmatprep.subr.mxu0 0.0
    %2144 = vmatpush1.msra.mxu0 0.0
    %2145 = vmatprep.subr.mxu0 0.0
    %2146 = vmatpush1.msra.mxu0 0.0
    %2147 = vmatprep.subr.mxu0 0.0
    %2148 = vmatpush1.msra.mxu0 %v2110
    %2149 = vmatprep.subr.mxu0 0.0
    %2150 = vmatpush1.msra.mxu0 %v2108
    %2151 = vmatprep.subr.mxu0 0.0
    %2152 = vmatpush2.msra.mxu0 0.0
    %2153 = vmatprep.subr.mxu0 0.0
    %2154 = vmatpush2.msra.mxu0 0.0
    %2155 = vmatprep.subr.mxu0 0.0
    %2156 = vmatpush2.msra.mxu0 0.0
    %2157 = vmatprep.subr.mxu0 0.0
    %2158 = vmatpush2.msra.mxu0 0.0
    %2159 = vmatprep.subr.mxu0 0.0
    %2160 = vmatpush2.msra.mxu0 0.0
    %2161 = vmatprep.subr.mxu0 0.0
    %2162 = vmatpush2.msra.mxu0 0.0
    %2163 = vmatprep.subr.mxu0 0.0
    %2164 = vmatpush2.msra.mxu0 0.0
    %2165 = vmatprep.subr.mxu0 0.0
    %2166 = vmatpush2.msra.mxu0 0.0
    %2167 = vmatprep.subr.mxu0 0.0
    %2168 = vmatpush2.msra.mxu0 0.0
    %2169 = vmatprep.subr.mxu0 0.0
    %2170 = vmatpush2.msra.mxu0 0.0
    %2171 = vmatprep.subr.mxu0 0.0
    %2172 = vmatpush2.msra.mxu0 0.0
    %2173 = vmatprep.subr.mxu0 0.0
    %2174 = vmatpush2.msra.mxu0 0.0
    %2175 = vmatprep.subr.mxu0 0.0
    %2176 = vmatpush2.msra.mxu0 0.0
    %2177 = vmatprep.subr.mxu0 0.0
    %2178 = vmatpush2.msra.mxu0 0.0
    %2179 = vmatprep.subr.mxu0 0.0
    %2180 = vmatpush2.msra.mxu0 0.0
    %2181 = vmatprep.subr.mxu0 0.0
    %2182 = vmatpush2.msra.mxu0 0.0
    %2183 = vmatprep.mubr.f32.mxu0 0.0
    %2184 = vmatmul.mubr.f32.gmra.mxu0 %v2114
    %v2185 = vpop.f32.mrf.mxu0
    %v2186 = vadd.f32 0.0, %v2185
    %v2187 = vpop.f32.mrf.mxu0
    %2188 = vmatprep.mubr.f32.mxu0 0.0
    %2189 = vmatmul.mubr.f32.gmra.mxu0 %v2117
    %v2190 = vpop.f32.mrf.mxu0
    %v2191 = vadd.f32 0.0, %v2190
    %v2192 = vpop.f32.mrf.mxu0
    %2193 = vdwg.mxu0
    %2196 = vrot.lane.b32.xlu0 %v2186, 32
    %v2197 = vpop.permute.xlu0 %2196
    %2198 = vrot.lane.b32.xlu0 %v2191, 32
    %v2199 = vpop.permute.xlu0 %2198
    %vm2202 = vcmask 392448
    %2203 = vst.msk [vmem:[#allocation2] sm:$0xff] %vm2202, %v2197
    %2204 = vst.msk [vmem:[#allocation2 + $0x8] sm:$0xff] %vm2202, %v2199
    %2205 = vrot.lane.b32.xlu0 %v1558, 80
    %v2206 = vpop.permute.xlu0 %2205
    %2207 = vrot.lane.b32.xlu0 %v1559, 80
    %v2208 = vpop.permute.xlu0 %2207
    %v2209 = vsel %vm1602, %v2206, 0
    %v2211 = vsel %vm1602, %v2208, 0
    %2213 = vmatprep.subr.mxu0 0.0
    %2214 = vmatpush1.msra.mxu0 0.0
    %2215 = vmatprep.subr.mxu0 0.0
    %2216 = vmatpush1.msra.mxu0 0.0
    %2217 = vmatprep.subr.mxu0 0.0
    %2218 = vmatpush1.msra.mxu0 0.0
    %2219 = vmatprep.subr.mxu0 0.0
    %2220 = vmatpush1.msra.mxu0 0.0
    %2221 = vmatprep.subr.mxu0 0.0
    %2222 = vmatpush1.msra.mxu0 0.0
    %2223 = vmatprep.subr.mxu0 0.0
    %2224 = vmatpush1.msra.mxu0 0.0
    %2225 = vmatprep.subr.mxu0 0.0
    %2226 = vmatpush1.msra.mxu0 0.0
    %2227 = vmatprep.subr.mxu0 0.0
    %2228 = vmatpush1.msra.mxu0 0.0
    %2229 = vmatprep.subr.mxu0 0.0
    %2230 = vmatpush1.msra.mxu0 0.0
    %2231 = vmatprep.subr.mxu0 0.0
    %2232 = vmatpush1.msra.mxu0 0.0
    %2233 = vmatprep.subr.mxu0 0.0
    %2234 = vmatpush1.msra.mxu0 0.0
    %2235 = vmatprep.subr.mxu0 0.0
    %2236 = vmatpush1.msra.mxu0 0.0
    %2237 = vmatprep.subr.mxu0 0.0
    %2238 = vmatpush1.msra.mxu0 0.0
    %2239 = vmatprep.subr.mxu0 0.0
    %2240 = vmatpush1.msra.mxu0 0.0
    %2241 = vmatprep.subr.mxu0 0.0
    %2242 = vmatpush1.msra.mxu0 %v1587
    %2243 = vmatprep.subr.mxu0 0.0
    %2244 = vmatpush1.msra.mxu0 %v1586
    %2245 = vmatprep.subr.mxu0 0.0
    %2246 = vmatpush2.msra.mxu0 0.0
    %2247 = vmatprep.subr.mxu0 0.0
    %2248 = vmatpush2.msra.mxu0 0.0
    %2249 = vmatprep.subr.mxu0 0.0
    %2250 = vmatpush2.msra.mxu0 0.0
    %2251 = vmatprep.subr.mxu0 0.0
    %2252 = vmatpush2.msra.mxu0 0.0
    %2253 = vmatprep.subr.mxu0 0.0
    %2254 = vmatpush2.msra.mxu0 0.0
    %2255 = vmatprep.subr.mxu0 0.0
    %2256 = vmatpush2.msra.mxu0 0.0
    %2257 = vmatprep.subr.mxu0 0.0
    %2258 = vmatpush2.msra.mxu0 0.0
    %2259 = vmatprep.subr.mxu0 0.0
    %2260 = vmatpush2.msra.mxu0 0.0
    %2261 = vmatprep.subr.mxu0 0.0
    %2262 = vmatpush2.msra.mxu0 0.0
    %2263 = vmatprep.subr.mxu0 0.0
    %2264 = vmatpush2.msra.mxu0 0.0
    %2265 = vmatprep.subr.mxu0 0.0
    %2266 = vmatpush2.msra.mxu0 0.0
    %2267 = vmatprep.subr.mxu0 0.0
    %2268 = vmatpush2.msra.mxu0 0.0
    %2269 = vmatprep.subr.mxu0 0.0
    %2270 = vmatpush2.msra.mxu0 0.0
    %2271 = vmatprep.subr.mxu0 0.0
    %2272 = vmatpush2.msra.mxu0 0.0
    %2273 = vmatprep.subr.mxu0 0.0
    %2274 = vmatpush2.msra.mxu0 0.0
    %2275 = vmatprep.subr.mxu0 0.0
    %2276 = vmatpush2.msra.mxu0 0.0
    %2277 = vmatprep.mubr.f32.mxu0 0.0
    %2278 = vmatmul.mubr.f32.gmra.mxu0 %v2209
    %v2279 = vpop.f32.mrf.mxu0
    %v2280 = vadd.f32 0.0, %v2279
    %v2281 = vpop.f32.mrf.mxu0
    %2282 = vmatprep.mubr.f32.mxu0 0.0
    %2283 = vmatmul.mubr.f32.gmra.mxu0 %v2211
    %v2284 = vpop.f32.mrf.mxu0
    %v2285 = vadd.f32 0.0, %v2284
    %v2286 = vpop.f32.mrf.mxu0
    %2287 = vdwg.mxu0
    %v2288 = vmul.f32 %v2280, 0.25
    %v2289 = vmul.f32 %v2285, 0.25
    %v2290 = vadd.f32 %v2288, %v1600
    %v2291 = vadd.f32 %v2289, %v1601
    %v2292 = vsel %vm1602, %v2290, -inf
    %2293 = vmax.xlane.f32.xlu0 %v2292
    %v2294 = vpop.xlane.xlu0 %2293
    %v2295 = vsel %vm1602, %v2291, -inf
    %2296 = vmax.xlane.f32.xlu0 %v2295
    %v2297 = vpop.xlane.xlu0 %2296
    %v2298 = vsub.f32 %v2290, %v2294
    %v2299 = vsub.f32 %v2291, %v2297
    %v2300 = vmul.f32 %v2298, 1.442695
    %v2301 = vpow.pop %v2300
    %v2302 = vmul.f32 %v2299, 1.442695
    %v2303 = vpow.pop %v2302
    %v2304 = vsel %vm1602, %v2301, 0.0
    %2305 = vadd.xlane.f32.xlu0 %v2304
    %v2306 = vpop.xlane.xlu0 %2305
    %v2307 = vsel %vm1602, %v2303, 0.0
    %2308 = vadd.xlane.f32.xlu0 %v2307
    %v2309 = vpop.xlane.xlu0 %2308
    %v2310 = vrcp.pop %v2306
    %v2311 = vmul.f32 %v2301, %v2310
    %v2312 = vrcp.pop %v2309
    %v2313 = vmul.f32 %v2303, %v2312
    %v2315 = vsel %vm1602, %v2311, 0
    %v2318 = vsel %vm1602, %v2313, 0
    %2320 = vmatprep.subr.mxu0 0.0
    %2321 = vmatpush1.msra.mxu0 0.0
    %2322 = vmatprep.subr.mxu0 0.0
    %2323 = vmatpush1.msra.mxu0 0.0
    %2324 = vmatprep.subr.mxu0 0.0
    %2325 = vmatpush1.msra.mxu0 0.0
    %2326 = vmatprep.subr.mxu0 0.0
    %2327 = vmatpush1.msra.mxu0 0.0
    %2328 = vmatprep.subr.mxu0 0.0
    %2329 = vmatpush1.msra.mxu0 0.0
    %2330 = vmatprep.subr.mxu0 0.0
    %2331 = vmatpush1.msra.mxu0 0.0
    %2332 = vmatprep.subr.mxu0 0.0
    %2333 = vmatpush1.msra.mxu0 0.0
    %2334 = vmatprep.subr.mxu0 0.0
    %2335 = vmatpush1.msra.mxu0 0.0
    %2336 = vmatprep.subr.mxu0 0.0
    %2337 = vmatpush1.msra.mxu0 0.0
    %2338 = vmatprep.subr.mxu0 0.0
    %2339 = vmatpush1.msra.mxu0 0.0
    %2340 = vmatprep.subr.mxu0 0.0
    %2341 = vmatpush1.msra.mxu0 0.0
    %2342 = vmatprep.subr.mxu0 0.0
    %2343 = vmatpush1.msra.mxu0 0.0
    %2344 = vmatprep.subr.mxu0 0.0
    %2345 = vmatpush1.msra.mxu0 0.0
    %2346 = vmatprep.subr.mxu0 0.0
    %2347 = vmatpush1.msra.mxu0 0.0
    %2348 = vmatprep.subr.mxu0 0.0
    %2349 = vmatpush1.msra.mxu0 %v2110
    %2350 = vmatprep.subr.mxu0 0.0
    %2351 = vmatpush1.msra.mxu0 %v2108
    %2352 = vmatprep.subr.mxu0 0.0
    %2353 = vmatpush2.msra.mxu0 0.0
    %2354 = vmatprep.subr.mxu0 0.0
    %2355 = vmatpush2.msra.mxu0 0.0
    %2356 = vmatprep.subr.mxu0 0.0
    %2357 = vmatpush2.msra.mxu0 0.0
    %2358 = vmatprep.subr.mxu0 0.0
    %2359 = vmatpush2.msra.mxu0 0.0
    %2360 = vmatprep.subr.mxu0 0.0
    %2361 = vmatpush2.msra.mxu0 0.0
    %2362 = vmatprep.subr.mxu0 0.0
    %2363 = vmatpush2.msra.mxu0 0.0
    %2364 = vmatprep.subr.mxu0 0.0
    %2365 = vmatpush2.msra.mxu0 0.0
    %2366 = vmatprep.subr.mxu0 0.0
    %2367 = vmatpush2.msra.mxu0 0.0
    %2368 = vmatprep.subr.mxu0 0.0
    %2369 = vmatpush2.msra.mxu0 0.0
    %2370 = vmatprep.subr.mxu0 0.0
    %2371 = vmatpush2.msra.mxu0 0.0
    %2372 = vmatprep.subr.mxu0 0.0
    %2373 = vmatpush2.msra.mxu0 0.0
    %2374 = vmatprep.subr.mxu0 0.0
    %2375 = vmatpush2.msra.mxu0 0.0
    %2376 = vmatprep.subr.mxu0 0.0
    %2377 = vmatpush2.msra.mxu0 0.0
    %2378 = vmatprep.subr.mxu0 0.0
    %2379 = vmatpush2.msra.mxu0 0.0
    %2380 = vmatprep.subr.mxu0 0.0
    %2381 = vmatpush2.msra.mxu0 0.0
    %2382 = vmatprep.subr.mxu0 0.0
    %2383 = vmatpush2.msra.mxu0 0.0
    %2384 = vmatprep.mubr.f32.mxu0 0.0
    %2385 = vmatmul.mubr.f32.gmra.mxu0 %v2315
    %v2386 = vpop.f32.mrf.mxu0
    %v2387 = vadd.f32 0.0, %v2386
    %v2388 = vpop.f32.mrf.mxu0
    %2389 = vmatprep.mubr.f32.mxu0 0.0
    %2390 = vmatmul.mubr.f32.gmra.mxu0 %v2318
    %v2391 = vpop.f32.mrf.mxu0
    %v2392 = vadd.f32 0.0, %v2391
    %v2393 = vpop.f32.mrf.mxu0
    %2394 = vdwg.mxu0
    %2397 = vrot.lane.b32.xlu0 %v2387, 48
    %v2398 = vpop.permute.xlu0 %2397
    %2399 = vrot.lane.b32.xlu0 %v2392, 48
    %v2400 = vpop.permute.xlu0 %2399
    %vm2403 = vcmask 523648
    %2404 = vst.msk [vmem:[#allocation2] sm:$0xff] %vm2403, %v2398
    %2405 = vst.msk [vmem:[#allocation2 + $0x8] sm:$0xff] %vm2403, %v2400
    %v2406 = vld [vmem:[#allocation2] sm:$0xff]
    %v2407 = vld [vmem:[#allocation2 + $0x8] sm:$0xff]
    %v2408 = vld [vmem:[#allocation10 + $0xf] sm:$0x1]
    %v2409 = vmul.f32 %v1534, %v1534
    %v2410 = vmul.f32 %v1535, %v1535
    %v2411 = vmul.f32 %v1536, %v1536
    %v2412 = vmul.f32 %v1537, %v1537
    %v2413 = vmul.f32 %v1538, %v1538
    %v2414 = vmul.f32 %v1539, %v1539
    %v2415 = vmul.f32 %v1540, %v1540
    %v2416 = vmul.f32 %v1541, %v1541
    %v2417 = vmul.f32 %v1542, %v1542
    %v2418 = vmul.f32 %v1543, %v1543
    %v2419 = vmul.f32 %v1544, %v1544
    %v2420 = vmul.f32 %v1545, %v1545
    %v2421 = vmul.f32 %v1546, %v1546
    %v2422 = vmul.f32 %v1547, %v1547
    %v2423 = vmul.f32 %v1548, %v1548
    %v2424 = vmul.f32 %v1549, %v1549
    %v2441 = vrot.slane %v2410, 7
    %vm2442 = vcmask 1041409
    %v2443 = vsel %vm2442, %v2441, %v2409
    %v2444 = vrot.slane %v2411, 6
    %vm2445 = vcmask 1042434
    %v2446 = vsel %vm2445, %v2444, %v2443
    %v2447 = vrot.slane %v2412, 5
    %vm2448 = vcmask 1043459
    %v2449 = vsel %vm2448, %v2447, %v2446
    %v2450 = vrot.slane %v2413, 4
    %vm2451 = vcmask 1044484
    %v2452 = vsel %vm2451, %v2450, %v2449
    %v2453 = vrot.slane %v2414, 3
    %vm2454 = vcmask 1045509
    %v2455 = vsel %vm2454, %v2453, %v2452
    %v2456 = vrot.slane %v2415, 2
    %vm2457 = vcmask 1046534
    %v2458 = vsel %vm2457, %v2456, %v2455
    %v2459 = vrot.slane %v2416, 1
    %vm2460 = vcmask 1047559
    %v2461 = vsel %vm2460, %v2459, %v2458
    %v2462 = vrot.slane %v2418, 7
    %v2463 = vsel %vm2442, %v2462, %v2417
    %v2464 = vrot.slane %v2419, 6
    %v2465 = vsel %vm2445, %v2464, %v2463
    %v2466 = vrot.slane %v2420, 5
    %v2467 = vsel %vm2448, %v2466, %v2465
    %v2468 = vrot.slane %v2421, 4
    %v2469 = vsel %vm2451, %v2468, %v2467
    %v2470 = vrot.slane %v2422, 3
    %v2471 = vsel %vm2454, %v2470, %v2469
    %v2472 = vrot.slane %v2423, 2
    %v2473 = vsel %vm2457, %v2472, %v2471
    %v2474 = vrot.slane %v2424, 1
    %v2475 = vsel %vm2460, %v2474, %v2473
    %v2478 = vsel %vm456, %v2461, 0.0
    %2479 = vadd.xlane.f32.xlu0 %v2478
    %v2480 = vpop.xlane.xlu0 %2479
    %v2481 = vsel %vm456, %v2475, 0.0
    %2482 = vadd.xlane.f32.xlu0 %v2481
    %v2483 = vpop.xlane.xlu0 %2482
    %v2484 = vrcp.pop 64.0
    %v2485 = vmul.f32 %v2480, %v2484
    %v2486 = vmul.f32 %v2483, %v2484
    %v2487 = vadd.f32 %v2485, 1e-06
    %v2488 = vadd.f32 %v2486, 1e-06
    %v2489 = vrsqrt.pop %v2487
    %v2490 = vrsqrt.pop %v2488
    %v2493 = vrot.slane %v2489, 1
    %v2494 = vrot.slane %v2489, 2
    %v2495 = vrot.slane %v2489, 3
    %v2496 = vrot.slane %v2489, 4
    %v2497 = vrot.slane %v2489, 5
    %v2498 = vrot.slane %v2489, 6
    %v2499 = vrot.slane %v2489, 7
    %v2500 = vrot.slane %v2490, 1
    %v2501 = vrot.slane %v2490, 2
    %v2502 = vrot.slane %v2490, 3
    %v2503 = vrot.slane %v2490, 4
    %v2504 = vrot.slane %v2490, 5
    %v2505 = vrot.slane %v2490, 6
    %v2506 = vrot.slane %v2490, 7
    %v2523 = vmul.f32 %v1534, %v2489
    %v2524 = vmul.f32 %v1535, %v2493
    %v2525 = vmul.f32 %v1536, %v2494
    %v2526 = vmul.f32 %v1537, %v2495
    %v2527 = vmul.f32 %v1538, %v2496
    %v2528 = vmul.f32 %v1539, %v2497
    %v2529 = vmul.f32 %v1540, %v2498
    %v2530 = vmul.f32 %v1541, %v2499
    %v2531 = vmul.f32 %v1542, %v2490
    %v2532 = vmul.f32 %v1543, %v2500
    %v2533 = vmul.f32 %v1544, %v2501
    %v2534 = vmul.f32 %v1545, %v2502
    %v2535 = vmul.f32 %v1546, %v2503
    %v2536 = vmul.f32 %v1547, %v2504
    %v2537 = vmul.f32 %v1548, %v2505
    %v2538 = vmul.f32 %v1549, %v2506
    %v2539 = vlaneseq
    %v2540 = vshrl.u32 %v2539, 7
    %v2541 = vsub.s32 0, %v2540
    %v2542 = vrot.slane %v2408, %v2541
    %v2543 = vmul.f32 %v2523, %v2542
    %v2544 = vmul.f32 %v2524, %v2542
    %v2545 = vmul.f32 %v2525, %v2542
    %v2546 = vmul.f32 %v2526, %v2542
    %v2547 = vmul.f32 %v2527, %v2542
    %v2548 = vmul.f32 %v2528, %v2542
    %v2549 = vmul.f32 %v2529, %v2542
    %v2550 = vmul.f32 %v2530, %v2542
    %v2551 = vmul.f32 %v2531, %v2542
    %v2552 = vmul.f32 %v2532, %v2542
    %v2553 = vmul.f32 %v2533, %v2542
    %v2554 = vmul.f32 %v2534, %v2542
    %v2555 = vmul.f32 %v2535, %v2542
    %v2556 = vmul.f32 %v2536, %v2542
    %v2557 = vmul.f32 %v2537, %v2542
    %v2558 = vmul.f32 %v2538, %v2542
    %v2559 = vld [vmem:[#allocation10 + $0x10] sm:$0x1]
    %v2560 = vmul.f32 %v2406, %v2406
    %v2561 = vmul.f32 %v2407, %v2407
    %v2562 = vsel %vm456, %v2560, 0.0
    %2563 = vadd.xlane.f32.xlu0 %v2562
    %v2564 = vpop.xlane.xlu0 %2563
    %v2565 = vsel %vm456, %v2561, 0.0
    %2566 = vadd.xlane.f32.xlu0 %v2565
    %v2567 = vpop.xlane.xlu0 %2566
    %v2568 = vmul.f32 %v2564, %v2484
    %v2569 = vmul.f32 %v2567, %v2484
    %v2570 = vadd.f32 %v2568, 1e-06
    %v2571 = vadd.f32 %v2569, 1e-06
    %v2572 = vrsqrt.pop %v2570
    %v2573 = vrsqrt.pop %v2571
    %v2574 = vmul.f32 %v2406, %v2572
    %v2575 = vmul.f32 %v2407, %v2573
    %v2576 = vlaneseq
    %v2577 = vshrl.u32 %v2576, 7
    %v2578 = vsub.s32 0, %v2577
    %v2579 = vrot.slane %v2559, %v2578
    %v2580 = vmul.f32 %v2574, %v2579
    %v2581 = vmul.f32 %v2575, %v2579
    %v2584 = vrot.slane %v2580, 1
    %v2585 = vrot.slane %v2580, 2
    %v2586 = vrot.slane %v2580, 3
    %v2587 = vrot.slane %v2580, 4
    %v2588 = vrot.slane %v2580, 5
    %v2589 = vrot.slane %v2580, 6
    %v2590 = vrot.slane %v2580, 7
    %v2591 = vrot.slane %v2581, 1
    %v2592 = vrot.slane %v2581, 2
    %v2593 = vrot.slane %v2581, 3
    %v2594 = vrot.slane %v2581, 4
    %v2595 = vrot.slane %v2581, 5
    %v2596 = vrot.slane %v2581, 6
    %v2597 = vrot.slane %v2581, 7
    %v2614 = vadd.f32 %v2543, %v2580
    %v2615 = vadd.f32 %v2544, %v2584
    %v2616 = vadd.f32 %v2545, %v2585
    %v2617 = vadd.f32 %v2546, %v2586
    %v2618 = vadd.f32 %v2547, %v2587
    %v2619 = vadd.f32 %v2548, %v2588
    %v2620 = vadd.f32 %v2549, %v2589
    %v2621 = vadd.f32 %v2550, %v2590
    %v2622 = vadd.f32 %v2551, %v2581
    %v2623 = vadd.f32 %v2552, %v2591
    %v2624 = vadd.f32 %v2553, %v2592
    %v2625 = vadd.f32 %v2554, %v2593
    %v2626 = vadd.f32 %v2555, %v2594
    %v2627 = vadd.f32 %v2556, %v2595
    %v2628 = vadd.f32 %v2557, %v2596
    %v2629 = vadd.f32 %v2558, %v2597
    %v2630 = vmul.f32 %v2614, 0.5
    %v2631 = vmul.f32 %v2615, 0.5
    %v2632 = vmul.f32 %v2616, 0.5
    %v2633 = vmul.f32 %v2617, 0.5
    %v2634 = vmul.f32 %v2618, 0.5
    %v2635 = vmul.f32 %v2619, 0.5
    %v2636 = vmul.f32 %v2620, 0.5
    %v2637 = vmul.f32 %v2621, 0.5
    %v2638 = vmul.f32 %v2622, 0.5
    %v2639 = vmul.f32 %v2623, 0.5
    %v2640 = vmul.f32 %v2624, 0.5
    %v2641 = vmul.f32 %v2625, 0.5
    %v2642 = vmul.f32 %v2626, 0.5
    %v2643 = vmul.f32 %v2627, 0.5
    %v2644 = vmul.f32 %v2628, 0.5
    %v2645 = vmul.f32 %v2629, 0.5
    %v2646 = vld [vmem:[#allocation15] sm:$0xff]
    %v2647 = vld [vmem:[#allocation15 + $0x8] sm:$0xff]
    %v2648 = vld [vmem:[#allocation15 + $0x10] sm:$0xff]
    %v2649 = vld [vmem:[#allocation15 + $0x18] sm:$0xff]
    %v2650 = vld [vmem:[#allocation15 + $0x20] sm:$0xff]
    %v2651 = vld [vmem:[#allocation15 + $0x28] sm:$0xff]
    %v2652 = vld [vmem:[#allocation15 + $0x30] sm:$0xff]
    %v2653 = vld [vmem:[#allocation15 + $0x38] sm:$0xff]
    %v2670 = vrot.slane %v2631, 7
    %v2671 = vsel %vm2442, %v2670, %v2630
    %v2672 = vrot.slane %v2632, 6
    %v2673 = vsel %vm2445, %v2672, %v2671
    %v2674 = vrot.slane %v2633, 5
    %v2675 = vsel %vm2448, %v2674, %v2673
    %v2676 = vrot.slane %v2634, 4
    %v2677 = vsel %vm2451, %v2676, %v2675
    %v2678 = vrot.slane %v2635, 3
    %v2679 = vsel %vm2454, %v2678, %v2677
    %v2680 = vrot.slane %v2636, 2
    %v2681 = vsel %vm2457, %v2680, %v2679
    %v2682 = vrot.slane %v2637, 1
    %v2683 = vsel %vm2460, %v2682, %v2681
    %v2684 = vrot.slane %v2639, 7
    %v2685 = vsel %vm2442, %v2684, %v2638
    %v2686 = vrot.slane %v2640, 6
    %v2687 = vsel %vm2445, %v2686, %v2685
    %v2688 = vrot.slane %v2641, 5
    %v2689 = vsel %vm2448, %v2688, %v2687
    %v2690 = vrot.slane %v2642, 4
    %v2691 = vsel %vm2451, %v2690, %v2689
    %v2692 = vrot.slane %v2643, 3
    %v2693 = vsel %vm2454, %v2692, %v2691
    %v2694 = vrot.slane %v2644, 2
    %v2695 = vsel %vm2457, %v2694, %v2693
    %v2696 = vrot.slane %v2645, 1
    %v2697 = vsel %vm2460, %v2696, %v2695
    %v2698 = vsel %vm456, %v2683, 0
    %v2700 = vsel %vm456, %v2697, 0
    %2702 = vmatprep.subr.mxu0 0.0
    %2703 = vmatpush1.msra.mxu0 0.0
    %2704 = vmatprep.subr.mxu0 0.0
    %2705 = vmatpush1.msra.mxu0 0.0
    %2706 = vmatprep.subr.mxu0 0.0
    %2707 = vmatpush1.msra.mxu0 0.0
    %2708 = vmatprep.subr.mxu0 0.0
    %2709 = vmatpush1.msra.mxu0 0.0
    %2710 = vmatprep.subr.mxu0 0.0
    %2711 = vmatpush1.msra.mxu0 0.0
    %2712 = vmatprep.subr.mxu0 0.0
    %2713 = vmatpush1.msra.mxu0 0.0
    %2714 = vmatprep.subr.mxu0 0.0
    %2715 = vmatpush1.msra.mxu0 0.0
    %2716 = vmatprep.subr.mxu0 0.0
    %2717 = vmatpush1.msra.mxu0 0.0
    %2718 = vmatprep.subr.mxu0 0.0
    %2719 = vmatpush1.msra.mxu0 %v2653
    %2720 = vmatprep.subr.mxu0 0.0
    %2721 = vmatpush1.msra.mxu0 %v2652
    %2722 = vmatprep.subr.mxu0 0.0
    %2723 = vmatpush1.msra.mxu0 %v2651
    %2724 = vmatprep.subr.mxu0 0.0
    %2725 = vmatpush1.msra.mxu0 %v2650
    %2726 = vmatprep.subr.mxu0 0.0
    %2727 = vmatpush1.msra.mxu0 %v2649
    %2728 = vmatprep.subr.mxu0 0.0
    %2729 = vmatpush1.msra.mxu0 %v2648
    %2730 = vmatprep.subr.mxu0 0.0
    %2731 = vmatpush1.msra.mxu0 %v2647
    %2732 = vmatprep.subr.mxu0 0.0
    %2733 = vmatpush1.msra.mxu0 %v2646
    %2734 = vmatprep.subr.mxu0 0.0
    %2735 = vmatpush2.msra.mxu0 0.0
    %2736 = vmatprep.subr.mxu0 0.0
    %2737 = vmatpush2.msra.mxu0 0.0
    %2738 = vmatprep.subr.mxu0 0.0
    %2739 = vmatpush2.msra.mxu0 0.0
    %2740 = vmatprep.subr.mxu0 0.0
    %2741 = vmatpush2.msra.mxu0 0.0
    %2742 = vmatprep.subr.mxu0 0.0
    %2743 = vmatpush2.msra.mxu0 0.0
    %2744 = vmatprep.subr.mxu0 0.0
    %2745 = vmatpush2.msra.mxu0 0.0
    %2746 = vmatprep.subr.mxu0 0.0
    %2747 = vmatpush2.msra.mxu0 0.0
    %2748 = vmatprep.subr.mxu0 0.0
    %2749 = vmatpush2.msra.mxu0 0.0
    %2750 = vmatprep.subr.mxu0 0.0
    %2751 = vmatpush2.msra.mxu0 0.0
    %2752 = vmatprep.subr.mxu0 0.0
    %2753 = vmatpush2.msra.mxu0 0.0
    %2754 = vmatprep.subr.mxu0 0.0
    %2755 = vmatpush2.msra.mxu0 0.0
    %2756 = vmatprep.subr.mxu0 0.0
    %2757 = vmatpush2.msra.mxu0 0.0
    %2758 = vmatprep.subr.mxu0 0.0
    %2759 = vmatpush2.msra.mxu0 0.0
    %2760 = vmatprep.subr.mxu0 0.0
    %2761 = vmatpush2.msra.mxu0 0.0
    %2762 = vmatprep.subr.mxu0 0.0
    %2763 = vmatpush2.msra.mxu0 0.0
    %2764 = vmatprep.subr.mxu0 0.0
    %2765 = vmatpush2.msra.mxu0 0.0
    %2766 = vmatprep.mubr.f32.mxu0 0.0
    %2767 = vmatmul.mubr.f32.gmra.mxu0 %v2698
    %v2768 = vpop.f32.mrf.mxu0
    %v2769 = vadd.f32 0.0, %v2768
    %v2770 = vpop.f32.mrf.mxu0
    %2771 = vmatprep.mubr.f32.mxu0 0.0
    %2772 = vmatmul.mubr.f32.gmra.mxu0 %v2700
    %v2773 = vpop.f32.mrf.mxu0
    %v2774 = vadd.f32 0.0, %v2773
    %v2775 = vpop.f32.mrf.mxu0
    %2776 = vdwg.mxu0
    %v2777 = vadd.f32 %v142, %v2769
    %v2778 = vadd.f32 %v143, %v2774
    %v2779 = vld [vmem:[%s1 + $0x1] sm:$0x1]
    %v2780 = vmul.f32 %v2777, %v2777
    %v2781 = vmul.f32 %v2778, %v2778
    %v2782 = vsel %vm147, %v2780, 0.0
    %2783 = vadd.xlane.f32.xlu0 %v2782
    %v2784 = vpop.xlane.xlu0 %2783
    %v2785 = vsel %vm147, %v2781, 0.0
    %2786 = vadd.xlane.f32.xlu0 %v2785
    %v2787 = vpop.xlane.xlu0 %2786
    %v2788 = vmul.f32 %v2784, %v154
    %v2789 = vmul.f32 %v2787, %v154
    %v2790 = vadd.f32 %v2788, 1e-06
    %v2791 = vadd.f32 %v2789, 1e-06
    %v2792 = vrsqrt.pop %v2790
    %v2793 = vrsqrt.pop %v2791
    %v2794 = vmul.f32 %v2777, %v2792
    %v2795 = vmul.f32 %v2778, %v2793
    %v2796 = vlaneseq
    %v2797 = vshrl.u32 %v2796, 7
    %v2798 = vsub.s32 0, %v2797
    %v2799 = vrot.slane %v2779, %v2798
    %v2800 = vmul.f32 %v2794, %v2799
    %v2801 = vmul.f32 %v2795, %v2799
    %v2802 = vld [vmem:[#allocation16] sm:$0xff]
    %v2803 = vld [vmem:[#allocation16 + $0x8] sm:$0xff]
    %v2804 = vld [vmem:[#allocation16 + $0x10] sm:$0xff]
    %v2805 = vld [vmem:[#allocation16 + $0x18] sm:$0xff]
    %v2807 = vsel %vm147, %v2800, 0
    %v2810 = vsel %vm147, %v2801, 0
    %2812 = vmatprep.subr.mxu0 0.0
    %2813 = vmatpush1.msra.mxu0 0.0
    %2814 = vmatprep.subr.mxu0 0.0
    %2815 = vmatpush1.msra.mxu0 0.0
    %2816 = vmatprep.subr.mxu0 0.0
    %2817 = vmatpush1.msra.mxu0 0.0
    %2818 = vmatprep.subr.mxu0 0.0
    %2819 = vmatpush1.msra.mxu0 0.0
    %2820 = vmatprep.subr.mxu0 0.0
    %2821 = vmatpush1.msra.mxu0 0.0
    %2822 = vmatprep.subr.mxu0 0.0
    %2823 = vmatpush1.msra.mxu0 0.0
    %2824 = vmatprep.subr.mxu0 0.0
    %2825 = vmatpush1.msra.mxu0 0.0
    %2826 = vmatprep.subr.mxu0 0.0
    %2827 = vmatpush1.msra.mxu0 0.0
    %2828 = vmatprep.subr.mxu0 0.0
    %2829 = vmatpush1.msra.mxu0 0.0
    %2830 = vmatprep.subr.mxu0 0.0
    %2831 = vmatpush1.msra.mxu0 0.0
    %2832 = vmatprep.subr.mxu0 0.0
    %2833 = vmatpush1.msra.mxu0 0.0
    %2834 = vmatprep.subr.mxu0 0.0
    %2835 = vmatpush1.msra.mxu0 0.0
    %2836 = vmatprep.subr.mxu0 0.0
    %2837 = vmatpush1.msra.mxu0 %v2805
    %2838 = vmatprep.subr.mxu0 0.0
    %2839 = vmatpush1.msra.mxu0 %v2804
    %2840 = vmatprep.subr.mxu0 0.0
    %2841 = vmatpush1.msra.mxu0 %v2803
    %2842 = vmatprep.subr.mxu0 0.0
    %2843 = vmatpush1.msra.mxu0 %v2802
    %2844 = vmatprep.subr.mxu0 0.0
    %2845 = vmatpush2.msra.mxu0 0.0
    %2846 = vmatprep.subr.mxu0 0.0
    %2847 = vmatpush2.msra.mxu0 0.0
    %2848 = vmatprep.subr.mxu0 0.0
    %2849 = vmatpush2.msra.mxu0 0.0
    %2850 = vmatprep.subr.mxu0 0.0
    %2851 = vmatpush2.msra.mxu0 0.0
    %2852 = vmatprep.subr.mxu0 0.0
    %2853 = vmatpush2.msra.mxu0 0.0
    %2854 = vmatprep.subr.mxu0 0.0
    %2855 = vmatpush2.msra.mxu0 0.0
    %2856 = vmatprep.subr.mxu0 0.0
    %2857 = vmatpush2.msra.mxu0 0.0
    %2858 = vmatprep.subr.mxu0 0.0
    %2859 = vmatpush2.msra.mxu0 0.0
    %2860 = vmatprep.subr.mxu0 0.0
    %2861 = vmatpush2.msra.mxu0 0.0
    %2862 = vmatprep.subr.mxu0 0.0
    %2863 = vmatpush2.msra.mxu0 0.0
    %2864 = vmatprep.subr.mxu0 0.0
    %2865 = vmatpush2.msra.mxu0 0.0
    %2866 = vmatprep.subr.mxu0 0.0
    %2867 = vmatpush2.msra.mxu0 0.0
    %2868 = vmatprep.subr.mxu0 0.0
    %2869 = vmatpush2.msra.mxu0 0.0
    %2870 = vmatprep.subr.mxu0 0.0
    %2871 = vmatpush2.msra.mxu0 0.0
    %2872 = vmatprep.subr.mxu0 0.0
    %2873 = vmatpush2.msra.mxu0 0.0
    %2874 = vmatprep.subr.mxu0 0.0
    %2875 = vmatpush2.msra.mxu0 0.0
    %2876 = vmatprep.mubr.f32.mxu0 0.0
    %2877 = vmatmul.mubr.f32.gmra.mxu0 %v2807
    %v2878 = vpop.f32.mrf.mxu0
    %v2879 = vadd.f32 0.0, %v2878
    %v2880 = vpop.f32.mrf.mxu0
    %2881 = vmatprep.mubr.f32.mxu0 0.0
    %2882 = vmatmul.mubr.f32.gmra.mxu0 %v2810
    %v2883 = vpop.f32.mrf.mxu0
    %v2884 = vadd.f32 0.0, %v2883
    %v2885 = vpop.f32.mrf.mxu0
    %2886 = vdwg.mxu0
    %v2887 = vxor.u32 %v2879, 2147483648
    %v2888 = vxor.u32 %v2884, 2147483648
    %v2889 = vmul.f32 %v2887, 1.442695
    %v2890 = vpow.pop %v2889
    %v2891 = vmul.f32 %v2888, 1.442695
    %v2892 = vpow.pop %v2891
    %v2893 = vadd.f32 %v2890, 1.0
    %v2894 = vadd.f32 %v2892, 1.0
    %v2895 = vrcp.pop %v2893
    %v2896 = vmul.f32 1.0, %v2895
    %v2897 = vrcp.pop %v2894
    %v2898 = vmul.f32 1.0, %v2897
    %v2899 = vmul.f32 %v2879, %v2896
    %v2900 = vmul.f32 %v2884, %v2898
    %2903 = vrot.lane.b32.xlu0 %v2879, 64
    %v2904 = vpop.permute.xlu0 %2903
    %2905 = vrot.lane.b32.xlu0 %v2884, 64
    %v2906 = vpop.permute.xlu0 %2905
    %v2909 = vmul.f32 %v2899, %v2904
    %v2910 = vmul.f32 %v2900, %v2906
    %2919 = vrot.lane.b32.xlu0 %v2646, 96
    %v2920 = vpop.permute.xlu0 %2919
    %2921 = vrot.lane.b32.xlu0 %v2647, 96
    %v2922 = vpop.permute.xlu0 %2921
    %2923 = vrot.lane.b32.xlu0 %v2648, 96
    %v2924 = vpop.permute.xlu0 %2923
    %2925 = vrot.lane.b32.xlu0 %v2649, 96
    %v2926 = vpop.permute.xlu0 %2925
    %2927 = vrot.lane.b32.xlu0 %v2650, 96
    %v2928 = vpop.permute.xlu0 %2927
    %2929 = vrot.lane.b32.xlu0 %v2651, 96
    %v2930 = vpop.permute.xlu0 %2929
    %2931 = vrot.lane.b32.xlu0 %v2652, 96
    %v2932 = vpop.permute.xlu0 %2931
    %2933 = vrot.lane.b32.xlu0 %v2653, 96
    %v2934 = vpop.permute.xlu0 %2933
    %v2944 = vsel %vm456, %v2909, 0
    %v2947 = vsel %vm456, %v2910, 0
    %2949 = vmatprep.subr.mxu0 0.0
    %2950 = vmatpush1.msra.mxu0 0.0
    %2951 = vmatprep.subr.mxu0 0.0
    %2952 = vmatpush1.msra.mxu0 0.0
    %2953 = vmatprep.subr.mxu0 0.0
    %2954 = vmatpush1.msra.mxu0 0.0
    %2955 = vmatprep.subr.mxu0 0.0
    %2956 = vmatpush1.msra.mxu0 0.0
    %2957 = vmatprep.subr.mxu0 0.0
    %2958 = vmatpush1.msra.mxu0 0.0
    %2959 = vmatprep.subr.mxu0 0.0
    %2960 = vmatpush1.msra.mxu0 0.0
    %2961 = vmatprep.subr.mxu0 0.0
    %2962 = vmatpush1.msra.mxu0 0.0
    %2963 = vmatprep.subr.mxu0 0.0
    %2964 = vmatpush1.msra.mxu0 0.0
    %2965 = vmatprep.subr.mxu0 0.0
    %2966 = vmatpush1.msra.mxu0 %v2934
    %2967 = vmatprep.subr.mxu0 0.0
    %2968 = vmatpush1.msra.mxu0 %v2932
    %2969 = vmatprep.subr.mxu0 0.0
    %2970 = vmatpush1.msra.mxu0 %v2930
    %2971 = vmatprep.subr.mxu0 0.0
    %2972 = vmatpush1.msra.mxu0 %v2928
    %2973 = vmatprep.subr.mxu0 0.0
    %2974 = vmatpush1.msra.mxu0 %v2926
    %2975 = vmatprep.subr.mxu0 0.0
    %2976 = vmatpush1.msra.mxu0 %v2924
    %2977 = vmatprep.subr.mxu0 0.0
    %2978 = vmatpush1.msra.mxu0 %v2922
    %2979 = vmatprep.subr.mxu0 0.0
    %2980 = vmatpush1.msra.mxu0 %v2920
    %2981 = vmatprep.subr.mxu0 0.0
    %2982 = vmatpush2.msra.mxu0 0.0
    %2983 = vmatprep.subr.mxu0 0.0
    %2984 = vmatpush2.msra.mxu0 0.0
    %2985 = vmatprep.subr.mxu0 0.0
    %2986 = vmatpush2.msra.mxu0 0.0
    %2987 = vmatprep.subr.mxu0 0.0
    %2988 = vmatpush2.msra.mxu0 0.0
    %2989 = vmatprep.subr.mxu0 0.0
    %2990 = vmatpush2.msra.mxu0 0.0
    %2991 = vmatprep.subr.mxu0 0.0
    %2992 = vmatpush2.msra.mxu0 0.0
    %2993 = vmatprep.subr.mxu0 0.0
    %2994 = vmatpush2.msra.mxu0 0.0
    %2995 = vmatprep.subr.mxu0 0.0
    %2996 = vmatpush2.msra.mxu0 0.0
    %2997 = vmatprep.subr.mxu0 0.0
    %2998 = vmatpush2.msra.mxu0 0.0
    %2999 = vmatprep.subr.mxu0 0.0
    %3000 = vmatpush2.msra.mxu0 0.0
    %3001 = vmatprep.subr.mxu0 0.0
    %3002 = vmatpush2.msra.mxu0 0.0
    %3003 = vmatprep.subr.mxu0 0.0
    %3004 = vmatpush2.msra.mxu0 0.0
    %3005 = vmatprep.subr.mxu0 0.0
    %3006 = vmatpush2.msra.mxu0 0.0
    %3007 = vmatprep.subr.mxu0 0.0
    %3008 = vmatpush2.msra.mxu0 0.0
    %3009 = vmatprep.subr.mxu0 0.0
    %3010 = vmatpush2.msra.mxu0 0.0
    %3011 = vmatprep.subr.mxu0 0.0
    %3012 = vmatpush2.msra.mxu0 0.0
    %3013 = vmatprep.mubr.f32.mxu0 0.0
    %3014 = vmatmul.mubr.f32.gmra.mxu0 %v2944
    %v3015 = vpop.f32.mrf.mxu0
    %v3016 = vadd.f32 0.0, %v3015
    %v3017 = vpop.f32.mrf.mxu0
    %3018 = vmatprep.mubr.f32.mxu0 0.0
    %3019 = vmatmul.mubr.f32.gmra.mxu0 %v2947
    %v3020 = vpop.f32.mrf.mxu0
    %v3021 = vadd.f32 0.0, %v3020
    %v3022 = vpop.f32.mrf.mxu0
    %3023 = vdwg.mxu0
    %v3024 = vadd.f32 %v2777, %v3016
    %v3025 = vadd.f32 %v2778, %v3021
    %3026 = vst.msk [vmem:[#allocation18] sm:$0xff] %vm147, %v3024
    %3027 = vst.msk [vmem:[#allocation18 + $0x8] sm:$0xff] %vm147, %v3025
    // Predicated region
    $region70: #{_lambda_.1} parent=1 // pred_check
      _
    $region71: #{_lambda_.1} parent=1 // pred_check_branch
      %3029 = sbr.rel (0) target = $region73
    $region72: #{_lambda_.1} parent=1 // pred_region
      %s3031 = ssub.s32 256, 256
      %3032 = vsyncadd [#allocation6], %s3031
      %s3033 = sshll.u32 [#allocation18], 4
      %s3034 = int_to_ptr.vmem [resolvable:$true] %s3033
      %3039 = dma.vmem_to_hbm [thread:$0]  %s3034, 256, %s9, [#allocation6], 128, 128, 8
    $region73: #{_lambda_.1} parent=1 // pred_fallthru
      _
    // Predicated region
    $region74: #{_lambda_.1} parent=1 // pred_check
      _
    $region75: #{_lambda_.1} parent=1 // pred_check_branch
      %3041 = sbr.rel (0) target = $region77
    $region76: #{_lambda_.1} parent=1 // pred_region
      %3042 = dma.done [#allocation6], 256
    $region77: #{_lambda_.1} parent=1 // pred_fallthru
      _
    %3043 = vsyncpa [#allocation5], 1
    %3044 = vsyncpa [#allocation8], 1
    %3045 = vsyncpa [#allocation11], 1
    %3046 = vsyncpa [#allocation14], 1
    %3047 = vsyncpa [#allocation17], 1
    %3048 = vsyncpa [#allocation6], 1

</llo_original>
